<compile_context>
chip_gen: v6e
topology: v6e:2x2x1
jax: 0.10.0
libtpu: 0.0.40
codegen_flags: <defaults>
</compile_context>

<pallas_src>
import jax
import jax.numpy as jnp
from jax.experimental import pallas as pl
from jax.experimental.pallas import tpu as pltpu

IN_FEATURES = 784
H1 = 512
H2 = 256


def _discriminator_kernel(x_ref, w1_ref, b1_ref, w2_ref, b2_ref,
                          w3_ref, b3_ref, o_ref):
    # Activations arrive as f32; cast to bf16 in-kernel (removes the separate
    # XLA pad/cast pass over HBM).
    x = x_ref[...].astype(jnp.bfloat16)

    # Layer 1: (tile, 784) bf16 @ (784, 512) bf16 -> f32 acc, bias, LeakyReLU.
    h = jnp.dot(x, w1_ref[...], preferred_element_type=jnp.float32) + b1_ref[...]
    h = jnp.maximum(h, 0.2 * h)

    # Layer 2: (tile, 512) bf16 @ (512, 256) bf16 -> f32 acc, bias, LeakyReLU.
    h = jnp.dot(h.astype(jnp.bfloat16), w2_ref[...],
                preferred_element_type=jnp.float32) + b2_ref[...]
    h = jnp.maximum(h, 0.2 * h)
    hb = h.astype(jnp.bfloat16)

    # Layer 3 as NT dot: (1, 256) bf16 x (tile, 256)^T bf16 -> lane-dense
    # (1, tile) f32 row. Bias is a scalar read from SMEM.
    logit = jax.lax.dot_general(
        w3_ref[...], hb,
        dimension_numbers=(((1,), (1,)), ((), ())),
        preferred_element_type=jnp.float32) + b3_ref[0]

    # Stable sigmoid: z = exp(-|x|) in [0,1], denominator in [1,2], so the
    # EUP approx reciprocal never sees inf.
    z = jnp.exp(-jnp.abs(logit))
    inv = pl.reciprocal(1.0 + z, approx=True)
    o_ref[...] = jnp.where(logit >= 0, inv, z * inv).astype(o_ref.dtype)


def _round_up(a, m):
    return ((a + m - 1) // m) * m


def discriminator_forward(img, params, *, max_tile_b=1024):
    """img: (B, 1, 28, 28) float32 (NCHW, as in PyTorch). Returns (B, 1) f32."""
    w1, b1, w2, b2, w3r, b3 = params
    B = img.shape[0]

    # Flatten like img.view(B, -1); stays f32, no feature padding (784 is the
    # full last dim, Mosaic handles lane padding internally).
    x = img.reshape(B, -1)

    # Tile selection: multiple of 128 lanes (lane-dense output block), capped
    # at max_tile_b, and always >= 2 grid steps so both v7x TensorCores get work.
    tile = min(max_tile_b, max(128, _round_up(pl.cdiv(B, 2), 128)))
    num_tiles = max(2, pl.cdiv(B, tile))
    b_pad = num_tiles * tile
    x = jnp.pad(x, ((0, b_pad - B), (0, 0)))

    resident = dict(pipeline_mode=pl.Buffered(1))  # constant index_map -> 1 buffer

    out = pl.pallas_call(
        _discriminator_kernel,
        out_shape=jax.ShapeDtypeStruct((1, b_pad), jnp.float32),
        grid=(num_tiles,),
        in_specs=[
            pl.BlockSpec((tile, IN_FEATURES), lambda i: (i, 0)),            # x (pipelined)
            pl.BlockSpec((IN_FEATURES, H1), lambda i: (0, 0), **resident),  # w1
            pl.BlockSpec((1, H1), lambda i: (0, 0), **resident),            # b1
            pl.BlockSpec((H1, H2), lambda i: (0, 0), **resident),           # w2
            pl.BlockSpec((1, H2), lambda i: (0, 0), **resident),            # b2
            pl.BlockSpec((1, H2), lambda i: (0, 0), **resident),            # w3 row
            pl.BlockSpec(memory_space=pltpu.SMEM),                          # b3 scalar
        ],
        out_specs=pl.BlockSpec((1, tile), lambda i: (0, i)),                # lane-dense
        compiler_params=pltpu.CompilerParams(
            dimension_semantics=("parallel",),
            vmem_limit_bytes=32 * 1024 * 1024),
    )(x, w1, b1, w2, b2, w3r, b3)

    return out[0, :B][:, None]  # (B, 1)


def init_params(key):
    """nn.Linear-style init (U(-1/sqrt(fan_in), 1/sqrt(fan_in))), packed for the
    kernel: transposed weights (in, out) in bf16, biases f32, layer-3 weight as
    a (1, 256) bf16 row, layer-3 bias as a (1,) f32 scalar (lives in SMEM)."""
    k1w, k1b, k2w, k2b, k3w, k3b = jax.random.split(key, 6)

    def u(k, shape, fan_in):
        bound = 1.0 / jnp.sqrt(fan_in)
        return jax.random.uniform(k, shape, jnp.float32, -bound, bound)

    w1 = u(k1w, (IN_FEATURES, H1), float(IN_FEATURES)).astype(jnp.bfloat16)
    b1 = u(k1b, (1, H1), float(IN_FEATURES))
    w2 = u(k2w, (H1, H2), float(H1)).astype(jnp.bfloat16)
    b2 = u(k2b, (1, H2), float(H1))
    w3r = u(k3w, (1, H2), float(H2)).astype(jnp.bfloat16)
    b3 = u(k3b, (1,), float(H2))

    return (w1, b1, w2, b2, w3r, b3)


def reference_forward(img, params):
    """Pure-JAX reference using the same packed (bf16) params / cast points."""
    w1, b1, w2, b2, w3r, b3 = params
    B = img.shape[0]
    x = img.reshape(B, -1).astype(jnp.bfloat16)
    h = jnp.dot(x, w1, preferred_element_type=jnp.float32) + b1
    h = jnp.maximum(h, 0.2 * h)
    h = jnp.dot(h.astype(jnp.bfloat16), w2, preferred_element_type=jnp.float32) + b2
    h = jnp.maximum(h, 0.2 * h)
    logit = jnp.dot(h.astype(jnp.bfloat16), w3r.T,
                    preferred_element_type=jnp.float32) + b3[0]
    return jax.nn.sigmoid(logit)


if __name__ == "__main__":
    key = jax.random.PRNGKey(0)
    k_img, k_params = jax.random.split(key)

    # Small MNIST-like batch: (B, C, H, W) = (2, 1, 28, 28) -> 784 features.
    img = jax.random.normal(k_img, (2, 1, 28, 28), dtype=jnp.float32)
    params = init_params(k_params)

    validity = discriminator_forward(img, params)
    jax.block_until_ready(validity)

    assert validity.shape == (2, 1)
    assert bool(jnp.all((validity >= 0.0) & (validity <= 1.0)))

    ref = reference_forward(img, params)
    max_err = float(jnp.max(jnp.abs(validity - ref)))
    assert max_err < 2e-2, f"mismatch vs reference: {max_err}"

    print("KERNEL_OK")
</pallas_src>

<mosaic_0001>
module attributes {stable_mosaic.version = 11 : i64} {
  func.func @_discriminator_kernel(%arg0: i32, %arg1: memref<128x784xf32, #tpu.memory_space<vmem>>, %arg2: memref<784x512xbf16, #tpu.memory_space<vmem>>, %arg3: memref<1x512xf32, #tpu.memory_space<vmem>>, %arg4: memref<512x256xbf16, #tpu.memory_space<vmem>>, %arg5: memref<1x256xf32, #tpu.memory_space<vmem>>, %arg6: memref<1x256xbf16, #tpu.memory_space<vmem>>, %arg7: memref<1xf32, #tpu.memory_space<smem>>, %arg8: memref<1x128xf32, #tpu.memory_space<vmem>>) attributes {dimension_semantics = [#tpu.dimension_semantics<parallel>], iteration_bounds = array<i64: 2>, scalar_prefetch = 0 : i64, scratch_operands = 0 : i64, tpu.core_type = #tpu.core_type<tc>, window_params = [{transform_indices = @transform_0, window_bounds = array<i64: 128, 784>}, {pipeline_mode = #tpu.pipeline_mode<synchronous>, transform_indices = @transform_1, window_bounds = array<i64: 784, 512>}, {pipeline_mode = #tpu.pipeline_mode<synchronous>, transform_indices = @transform_2, window_bounds = array<i64: 1, 512>}, {pipeline_mode = #tpu.pipeline_mode<synchronous>, transform_indices = @transform_3, window_bounds = array<i64: 512, 256>}, {pipeline_mode = #tpu.pipeline_mode<synchronous>, transform_indices = @transform_4, window_bounds = array<i64: 1, 256>}, {pipeline_mode = #tpu.pipeline_mode<synchronous>, transform_indices = @transform_5, window_bounds = array<i64: 1, 256>}, {transform_indices = @transform_6, window_bounds = array<i64: 1>}, {transform_indices = @transform_7, window_bounds = array<i64: 1, 128>}]} {
    %c0 = arith.constant 0 : index
    %c0_0 = arith.constant 0 : index
    %0 = vector.load %arg1[%c0, %c0_0] : memref<128x784xf32, #tpu.memory_space<vmem>>, vector<128x784xf32>
    %1 = arith.truncf %0 : vector<128x784xf32> to vector<128x784xbf16>
    %c0_1 = arith.constant 0 : index
    %c0_2 = arith.constant 0 : index
    %2 = vector.load %arg2[%c0_1, %c0_2] : memref<784x512xbf16, #tpu.memory_space<vmem>>, vector<784x512xbf16>
    %cst = arith.constant dense<0.000000e+00> : vector<128x512xf32>
    %3 = tpu.matmul %1, %2, %cst {dimension_numbers = #tpu.dot_dimension_numbers<[1], [0], [0], [1], [0, 0, 1, 1], [], []>} : vector<128x784xbf16>, vector<784x512xbf16>, vector<128x512xf32> -> vector<128x512xf32>
    %c0_3 = arith.constant 0 : index
    %c0_4 = arith.constant 0 : index
    %4 = vector.load %arg3[%c0_3, %c0_4] : memref<1x512xf32, #tpu.memory_space<vmem>>, vector<1x512xf32>
    %5 = vector.broadcast %4 : vector<1x512xf32> to vector<128x512xf32>
    %6 = arith.addf %3, %5 : vector<128x512xf32>
    %cst_5 = arith.constant 2.000000e-01 : f32
    %7 = vector.broadcast %cst_5 : f32 to vector<128x512xf32>
    %8 = arith.mulf %7, %6 : vector<128x512xf32>
    %9 = arith.maximumf %6, %8 : vector<128x512xf32>
    %10 = arith.truncf %9 : vector<128x512xf32> to vector<128x512xbf16>
    %c0_6 = arith.constant 0 : index
    %c0_7 = arith.constant 0 : index
    %11 = vector.load %arg4[%c0_6, %c0_7] : memref<512x256xbf16, #tpu.memory_space<vmem>>, vector<512x256xbf16>
    %cst_8 = arith.constant dense<0.000000e+00> : vector<128x256xf32>
    %12 = tpu.matmul %10, %11, %cst_8 {dimension_numbers = #tpu.dot_dimension_numbers<[1], [0], [0], [1], [0, 0, 1, 1], [], []>} : vector<128x512xbf16>, vector<512x256xbf16>, vector<128x256xf32> -> vector<128x256xf32>
    %c0_9 = arith.constant 0 : index
    %c0_10 = arith.constant 0 : index
    %13 = vector.load %arg5[%c0_9, %c0_10] : memref<1x256xf32, #tpu.memory_space<vmem>>, vector<1x256xf32>
    %14 = vector.broadcast %13 : vector<1x256xf32> to vector<128x256xf32>
    %15 = arith.addf %12, %14 : vector<128x256xf32>
    %cst_11 = arith.constant 2.000000e-01 : f32
    %16 = vector.broadcast %cst_11 : f32 to vector<128x256xf32>
    %17 = arith.mulf %16, %15 : vector<128x256xf32>
    %18 = arith.maximumf %15, %17 : vector<128x256xf32>
    %19 = arith.truncf %18 : vector<128x256xf32> to vector<128x256xbf16>
    %c0_12 = arith.constant 0 : index
    %c0_13 = arith.constant 0 : index
    %20 = vector.load %arg6[%c0_12, %c0_13] : memref<1x256xbf16, #tpu.memory_space<vmem>>, vector<1x256xbf16>
    %cst_14 = arith.constant dense<0.000000e+00> : vector<1x128xf32>
    %21 = tpu.matmul %20, %19, %cst_14 {dimension_numbers = #tpu.dot_dimension_numbers<[1], [1], [0], [0], [0, 0, 1, 0], [], []>} : vector<1x256xbf16>, vector<128x256xbf16>, vector<1x128xf32> -> vector<1x128xf32>
    %c0_15 = arith.constant 0 : index
    %22 = memref.load %arg7[%c0_15] : memref<1xf32, #tpu.memory_space<smem>>
    %23 = vector.broadcast %22 : f32 to vector<1x128xf32>
    %24 = arith.addf %21, %23 : vector<1x128xf32>
    %25 = math.absf %24 : vector<1x128xf32>
    %cst_16 = arith.constant 0.000000e+00 : f32
    %26 = vector.broadcast %cst_16 : f32 to vector<1x128xf32>
    %27 = arith.subf %26, %25 : vector<1x128xf32>
    %28 = math.exp %27 : vector<1x128xf32>
    %cst_17 = arith.constant 1.000000e+00 : f32
    %29 = vector.broadcast %cst_17 : f32 to vector<1x128xf32>
    %30 = arith.addf %29, %28 : vector<1x128xf32>
    %31 = tpu.reciprocal %30 {approx = true} : vector<1x128xf32> -> vector<1x128xf32>
    %cst_18 = arith.constant 0.000000e+00 : f32
    %32 = vector.broadcast %cst_18 : f32 to vector<1x128xf32>
    %33 = arith.cmpf oge, %24, %32 : vector<1x128xf32>
    %34 = arith.mulf %28, %31 : vector<1x128xf32>
    %35 = arith.select %33, %31, %34 : vector<1x128xi1>, vector<1x128xf32>
    %c0_19 = arith.constant 0 : index
    %c0_20 = arith.constant 0 : index
    %36 = vector.load %arg8[%c0_19, %c0_20] : memref<1x128xf32, #tpu.memory_space<vmem>>, vector<1x128xf32>
    tpu.vector_store %arg8[%c0_19, %c0_20], %35 {strides = array<i32>} : memref<1x128xf32, #tpu.memory_space<vmem>>, vector<1x128xf32>,
    return
  }
  func.func @transform_0(%arg0: i32) -> (i32, i32) {
    %c0_i32 = arith.constant 0 : i32
    %c0_i32_0 = arith.constant 0 : i32
    return %arg0, %c0_i32 : i32, i32
  }
  func.func @transform_1(%arg0: i32) -> (i32, i32) {
    %c0_i32 = arith.constant 0 : i32
    %c0_i32_0 = arith.constant 0 : i32
    %c0_i32_1 = arith.constant 0 : i32
    return %c0_i32, %c0_i32_0 : i32, i32
  }
  func.func @transform_2(%arg0: i32) -> (i32, i32) {
    %c0_i32 = arith.constant 0 : i32
    %c0_i32_0 = arith.constant 0 : i32
    %c0_i32_1 = arith.constant 0 : i32
    return %c0_i32, %c0_i32_0 : i32, i32
  }
  func.func @transform_3(%arg0: i32) -> (i32, i32) {
    %c0_i32 = arith.constant 0 : i32
    %c0_i32_0 = arith.constant 0 : i32
    %c0_i32_1 = arith.constant 0 : i32
    return %c0_i32, %c0_i32_0 : i32, i32
  }
  func.func @transform_4(%arg0: i32) -> (i32, i32) {
    %c0_i32 = arith.constant 0 : i32
    %c0_i32_0 = arith.constant 0 : i32
    %c0_i32_1 = arith.constant 0 : i32
    return %c0_i32, %c0_i32_0 : i32, i32
  }
  func.func @transform_5(%arg0: i32) -> (i32, i32) {
    %c0_i32 = arith.constant 0 : i32
    %c0_i32_0 = arith.constant 0 : i32
    %c0_i32_1 = arith.constant 0 : i32
    return %c0_i32, %c0_i32_0 : i32, i32
  }
  func.func @transform_6(%arg0: i32) -> i32 {
    %c0_i32 = arith.constant 0 : i32
    %c0_i32_0 = arith.constant 0 : i32
    return %c0_i32 : i32
  }
  func.func @transform_7(%arg0: i32) -> (i32, i32) {
    %c0_i32 = arith.constant 0 : i32
    %c0_i32_0 = arith.constant 0 : i32
    return %c0_i32, %arg0 : i32, i32
  }
}

</mosaic_0001>

<llo_original>
// kernel: tpu_custom_call.1
$region0: #{tpu_custom_call.1}
  #allocation0 [shape = 'u32[]', space=smem, size = 0x4, offset = 0x4, fixed_abs, tag = 'smem constant byte address 0x4 - core index']
  #allocation1 [shape = 'u32[144,128]{1,0:T(1,128)}', space=vmem, size = 0x12000, scoped, tag = 'internal scratch']
  #allocation2 [shape = 'f32[1]{0:T(128)S(6)}', space=smem, size = 0x200, scoped, tag = 'scoped memory for tpu_custom_call.1']
  %s0 = inlined_call_operand.vmem [shape: f32[256,784], index: 0, kind: input, shape index: {}]
  %s1 = inlined_call_operand.vmem [shape: bf16[784,512], index: 1, kind: input, shape index: {}]
  %s2 = inlined_call_operand.vmem [shape: f32[1,512], index: 2, kind: input, shape index: {}]
  %s3 = inlined_call_operand.vmem [shape: bf16[512,256], index: 3, kind: input, shape index: {}]
  %s4 = inlined_call_operand.vmem [shape: f32[1,256], index: 4, kind: input, shape index: {}]
  %s5 = inlined_call_operand.vmem [shape: bf16[1,256], index: 5, kind: input, shape index: {}]
  %s6 = inlined_call_operand.<no memory space> [shape: f32[1], index: 6, kind: input, shape index: {}]
  %s7 = inlined_call_operand.hbm [shape: f32[1,256], index: 7, kind: output, shape index: {}]
  %s8 = sld [smem:[#allocation0]]
  $region61: #{tpu_custom_call.1} parent=0
    _
  %s10 = ssub.s32 1, %s8
  %s11 = scalar_select 0, %s10, %s8
  %12 = sst [smem:[#allocation2]] %s6
  $region1: #{tpu_custom_call.1} parent=0
    #allocation3 [shape = 'u8[1024]{0}', space=vmem, size = 0x400, scoped, tag = 'output window, operand 0']
    #allocation4 [shape = 's32[2]{0}', space=sflag, size = 0x8, scoped, tag = 'scoped memory for tpu_custom_call.1']
    %13 = vsyncpa [#allocation4], 0
    %s14 = scalar_lea.sflag [#allocation4], 1
    %15 = vsyncpa %s14, 0
    loop: start=0, step=1, limit=4
    $region2: #{tpu_custom_call.1} parent=1 // loop_pre_header
      _
    $region3: #{tpu_custom_call.1} parent=1 // loop_header
      %s17 = sphi 0, %s21
      %p18 = scmp.ge.s32.totalorder %s17, 4
      %s27 = sphi 0, %s29
      %s30 = sphi 0, %s27
      %s31 = sphi 0, %s30
      %s47 = sphi 0, %s31
      %s51 = sphi 0, %s51
      %s53 = sphi 0, %s51
      %s54 = sphi 0, %s53
      %s68 = sphi 0, %s54
      %s72 = sphi 0, %s72
      %s74 = sphi 0, %s72
      %s75 = sphi 0, %s74
      %s89 = sphi 0, %s75
      %s93 = sphi 0, %s93
      %s95 = sphi 0, %s93
      %s96 = sphi 0, %s95
      %s110 = sphi 0, %s96
      %s114 = sphi 0, %s114
      %s116 = sphi 0, %s114
      %s117 = sphi 0, %s116
      %s131 = sphi 0, %s117
      %s135 = sphi 0, %s135
      %s137 = sphi 0, %s135
      %s138 = sphi 0, %s137
      %s152 = sphi 0, %s138
      %s156 = sphi 0, %s156
      %s158 = sphi 0, %s156
      %s159 = sphi 0, %s158
      %s173 = sphi 0, %s159
      %s179 = sphi 0, %s181
      %s182 = sphi 0, %s179
      %s183 = sphi 0, %s182
      %s199 = sphi 0, %s183
    $region4: #{tpu_custom_call.1} parent=1 // loop_header_branch
      %20 = sbr.rel (%p18) target = $region8
    $region5: #{tpu_custom_call.1} parent=1 // loop_body
      %s22 = ssub.s32 %s17, 1
      %s23 = ssub.s32 %s17, 2
      %s24 = sadd.s32 %s17, 1
      %s25 = ssub.s32 %s17, %s24
      %p26 = scmp.eq.s32.totalorder %s25, 0
      %s28 = sadd.s32 %s27, 1
      %s29 = scalar_select %p26, %s27, %s28
      %p32 = pneg %p26
      %p33 = scmp.eq.s32.totalorder %s17, 1
      %p34 = por %p32, %p33
      %p35 = scmp.ne.s32.totalorder %s27, %s30
      %p36 = scmp.eq.s32.totalorder %s17, 0
      %p37 = por %p35, %p36
      %p38 = scmp.ne.s32.totalorder %s27, %s30
      %p39 = scmp.eq.s32.totalorder %s22, 1
      %p40 = por %p38, %p39
      %p41 = scmp.ne.s32.totalorder %s30, %s31
      %p42 = scmp.eq.s32.totalorder %s22, 0
      %p43 = por %p41, %p42
      %p44 = scmp.ne.s32.totalorder %s30, %s31
      %p45 = scmp.eq.s32.totalorder %s23, 1
      %p46 = por %p44, %p45
      %p48 = scmp.ne.s32.totalorder %s31, %s47
      %p49 = scmp.eq.s32.totalorder %s23, 0
      %p50 = por %p48, %p49
      %s52 = sadd.s32 %s51, 1
      %p55 = scmp.eq.s32.totalorder %s17, 1
      %p56 = scmp.ne.s32.totalorder %s51, %s53
      %p57 = scmp.eq.s32.totalorder %s17, 0
      %p58 = por %p56, %p57
      %p59 = scmp.ne.s32.totalorder %s51, %s53
      %p60 = scmp.eq.s32.totalorder %s22, 1
      %p61 = por %p59, %p60
      %p62 = scmp.ne.s32.totalorder %s53, %s54
      %p63 = scmp.eq.s32.totalorder %s22, 0
      %p64 = por %p62, %p63
      %p65 = scmp.ne.s32.totalorder %s53, %s54
      %p66 = scmp.eq.s32.totalorder %s23, 1
      %p67 = por %p65, %p66
      %p69 = scmp.ne.s32.totalorder %s54, %s68
      %p70 = scmp.eq.s32.totalorder %s23, 0
      %p71 = por %p69, %p70
      %s73 = sadd.s32 %s72, 1
      %p76 = scmp.eq.s32.totalorder %s17, 1
      %p77 = scmp.ne.s32.totalorder %s72, %s74
      %p78 = scmp.eq.s32.totalorder %s17, 0
      %p79 = por %p77, %p78
      %p80 = scmp.ne.s32.totalorder %s72, %s74
      %p81 = scmp.eq.s32.totalorder %s22, 1
      %p82 = por %p80, %p81
      %p83 = scmp.ne.s32.totalorder %s74, %s75
      %p84 = scmp.eq.s32.totalorder %s22, 0
      %p85 = por %p83, %p84
      %p86 = scmp.ne.s32.totalorder %s74, %s75
      %p87 = scmp.eq.s32.totalorder %s23, 1
      %p88 = por %p86, %p87
      %p90 = scmp.ne.s32.totalorder %s75, %s89
      %p91 = scmp.eq.s32.totalorder %s23, 0
      %p92 = por %p90, %p91
      %s94 = sadd.s32 %s93, 1
      %p97 = scmp.eq.s32.totalorder %s17, 1
      %p98 = scmp.ne.s32.totalorder %s93, %s95
      %p99 = scmp.eq.s32.totalorder %s17, 0
      %p100 = por %p98, %p99
      %p101 = scmp.ne.s32.totalorder %s93, %s95
      %p102 = scmp.eq.s32.totalorder %s22, 1
      %p103 = por %p101, %p102
      %p104 = scmp.ne.s32.totalorder %s95, %s96
      %p105 = scmp.eq.s32.totalorder %s22, 0
      %p106 = por %p104, %p105
      %p107 = scmp.ne.s32.totalorder %s95, %s96
      %p108 = scmp.eq.s32.totalorder %s23, 1
      %p109 = por %p107, %p108
      %p111 = scmp.ne.s32.totalorder %s96, %s110
      %p112 = scmp.eq.s32.totalorder %s23, 0
      %p113 = por %p111, %p112
      %s115 = sadd.s32 %s114, 1
      %p118 = scmp.eq.s32.totalorder %s17, 1
      %p119 = scmp.ne.s32.totalorder %s114, %s116
      %p120 = scmp.eq.s32.totalorder %s17, 0
      %p121 = por %p119, %p120
      %p122 = scmp.ne.s32.totalorder %s114, %s116
      %p123 = scmp.eq.s32.totalorder %s22, 1
      %p124 = por %p122, %p123
      %p125 = scmp.ne.s32.totalorder %s116, %s117
      %p126 = scmp.eq.s32.totalorder %s22, 0
      %p127 = por %p125, %p126
      %p128 = scmp.ne.s32.totalorder %s116, %s117
      %p129 = scmp.eq.s32.totalorder %s23, 1
      %p130 = por %p128, %p129
      %p132 = scmp.ne.s32.totalorder %s117, %s131
      %p133 = scmp.eq.s32.totalorder %s23, 0
      %p134 = por %p132, %p133
      %s136 = sadd.s32 %s135, 1
      %p139 = scmp.eq.s32.totalorder %s17, 1
      %p140 = scmp.ne.s32.totalorder %s135, %s137
      %p141 = scmp.eq.s32.totalorder %s17, 0
      %p142 = por %p140, %p141
      %p143 = scmp.ne.s32.totalorder %s135, %s137
      %p144 = scmp.eq.s32.totalorder %s22, 1
      %p145 = por %p143, %p144
      %p146 = scmp.ne.s32.totalorder %s137, %s138
      %p147 = scmp.eq.s32.totalorder %s22, 0
      %p148 = por %p146, %p147
      %p149 = scmp.ne.s32.totalorder %s137, %s138
      %p150 = scmp.eq.s32.totalorder %s23, 1
      %p151 = por %p149, %p150
      %p153 = scmp.ne.s32.totalorder %s138, %s152
      %p154 = scmp.eq.s32.totalorder %s23, 0
      %p155 = por %p153, %p154
      %s157 = sadd.s32 %s156, 1
      %p160 = scmp.eq.s32.totalorder %s17, 1
      %p161 = scmp.ne.s32.totalorder %s156, %s158
      %p162 = scmp.eq.s32.totalorder %s17, 0
      %p163 = por %p161, %p162
      %p164 = scmp.ne.s32.totalorder %s156, %s158
      %p165 = scmp.eq.s32.totalorder %s22, 1
      %p166 = por %p164, %p165
      %p167 = scmp.ne.s32.totalorder %s158, %s159
      %p168 = scmp.eq.s32.totalorder %s22, 0
      %p169 = por %p167, %p168
      %p170 = scmp.ne.s32.totalorder %s158, %s159
      %p171 = scmp.eq.s32.totalorder %s23, 1
      %p172 = por %p170, %p171
      %p174 = scmp.ne.s32.totalorder %s159, %s173
      %p175 = scmp.eq.s32.totalorder %s23, 0
      %p176 = por %p174, %p175
      %s177 = ssub.s32 %s17, %s24
      %p178 = scmp.eq.s32.totalorder %s177, 0
      %s180 = sadd.s32 %s179, 1
      %s181 = scalar_select %p178, %s179, %s180
      %p184 = pneg %p178
      %p185 = scmp.eq.s32.totalorder %s17, 1
      %p186 = por %p184, %p185
      %p187 = scmp.ne.s32.totalorder %s179, %s182
      %p188 = scmp.eq.s32.totalorder %s17, 0
      %p189 = por %p187, %p188
      %p190 = scmp.ne.s32.totalorder %s179, %s182
      %p191 = scmp.eq.s32.totalorder %s22, 1
      %p192 = por %p190, %p191
      %p193 = scmp.ne.s32.totalorder %s182, %s183
      %p194 = scmp.eq.s32.totalorder %s22, 0
      %p195 = por %p193, %p194
      %p196 = scmp.ne.s32.totalorder %s182, %s183
      %p197 = scmp.eq.s32.totalorder %s23, 1
      %p198 = por %p196, %p197
      %p200 = scmp.ne.s32.totalorder %s183, %s199
      %p201 = scmp.eq.s32.totalorder %s23, 0
      %p202 = por %p200, %p201
      %p203 = scmp.le.s32.totalorder 1, %s17
      %p204 = scmp.lt.s32.totalorder %s17, 3
      %p205 = pnand %p203, %p204
      %p206 = pneg %p205
      // Predicated region
      $region9: #{tpu_custom_call.1} parent=5 // pred_check
        _
      $region10: #{tpu_custom_call.1} parent=5 // pred_check_branch
        %208 = sbr.rel (%p205) target = $region12
      $region11: #{tpu_custom_call.1} parent=5 // pred_region
        %s209 = ssub.s32 %s17, 1
        // Predicated region
        $region13: #{tpu_custom_call.1} parent=11 // pred_check
          %p210 = pneg %p64
        $region14: #{tpu_custom_call.1} parent=11 // pred_check_branch
          %212 = sbr.rel (%p210) target = $region16
        $region15: #{tpu_custom_call.1} parent=11 // pred_region
          _
        $region16: #{tpu_custom_call.1} parent=11 // pred_fallthru
          _
        // Predicated region
        $region17: #{tpu_custom_call.1} parent=11 // pred_check
          %p213 = pneg %p85
        $region18: #{tpu_custom_call.1} parent=11 // pred_check_branch
          %215 = sbr.rel (%p213) target = $region20
        $region19: #{tpu_custom_call.1} parent=11 // pred_region
          _
        $region20: #{tpu_custom_call.1} parent=11 // pred_fallthru
          _
        // Predicated region
        $region21: #{tpu_custom_call.1} parent=11 // pred_check
          %p216 = pneg %p106
        $region22: #{tpu_custom_call.1} parent=11 // pred_check_branch
          %218 = sbr.rel (%p216) target = $region24
        $region23: #{tpu_custom_call.1} parent=11 // pred_region
          _
        $region24: #{tpu_custom_call.1} parent=11 // pred_fallthru
          _
        // Predicated region
        $region25: #{tpu_custom_call.1} parent=11 // pred_check
          %p219 = pneg %p127
        $region26: #{tpu_custom_call.1} parent=11 // pred_check_branch
          %221 = sbr.rel (%p219) target = $region28
        $region27: #{tpu_custom_call.1} parent=11 // pred_region
          _
        $region28: #{tpu_custom_call.1} parent=11 // pred_fallthru
          _
        // Predicated region
        $region29: #{tpu_custom_call.1} parent=11 // pred_check
          %p222 = pneg %p148
        $region30: #{tpu_custom_call.1} parent=11 // pred_check_branch
          %224 = sbr.rel (%p222) target = $region32
        $region31: #{tpu_custom_call.1} parent=11 // pred_region
          _
        $region32: #{tpu_custom_call.1} parent=11 // pred_fallthru
          _
        // Predicated region
        $region33: #{tpu_custom_call.1} parent=11 // pred_check
          %p225 = pneg %p169
        $region34: #{tpu_custom_call.1} parent=11 // pred_check_branch
          %227 = sbr.rel (%p225) target = $region36
        $region35: #{tpu_custom_call.1} parent=11 // pred_region
          _
        $region36: #{tpu_custom_call.1} parent=11 // pred_fallthru
          _
      $region12: #{tpu_custom_call.1} parent=5 // pred_fallthru
        _
      %p228 = scmp.lt.s32.totalorder %s17, 2
      // Predicated region
      $region37: #{tpu_custom_call.1} parent=5 // pred_check
        %p229 = pneg %p228
      $region38: #{tpu_custom_call.1} parent=5 // pred_check_branch
        %231 = sbr.rel (%p229) target = $region40
      $region39: #{tpu_custom_call.1} parent=5 // pred_region
        // Predicated region
        $region41: #{tpu_custom_call.1} parent=39 // pred_check
          %p232 = pneg %p37
        $region42: #{tpu_custom_call.1} parent=39 // pred_check_branch
          %234 = sbr.rel (%p232) target = $region44
        $region43: #{tpu_custom_call.1} parent=39 // pred_region
          %s235 = smul.u32 16, %s17
          %p236 = scmp.lt.s32.totalorder %s235, 31
          %s237 = scalar_select %p236, %s235, 31
          %s238 = smul.addr %s237, 7
          %s239 = smul.addr %s238, 8
          %s240 = scalar_lea.vmem %s0, %s239
          %s241 = smul.u32 16, %s17
        $region44: #{tpu_custom_call.1} parent=39 // pred_fallthru
          _
      $region40: #{tpu_custom_call.1} parent=5 // pred_fallthru
        _
      %p242 = scmp.le.s32.totalorder 1, %s17
      %p243 = scmp.lt.s32.totalorder %s17, 3
      %p244 = pnand %p242, %p243
      %p245 = pneg %p244
      // Predicated region
      $region45: #{tpu_custom_call.1} parent=5 // pred_check
        _
      $region46: #{tpu_custom_call.1} parent=5 // pred_check_branch
        %247 = sbr.rel (%p244) target = $region48
      $region47: #{tpu_custom_call.1} parent=5 // pred_region
        %s248 = ssub.s32 %s17, 1
        %s249 = smul.u32 16, %s22
        %p250 = scmp.lt.s32.totalorder %s249, 31
        %s251 = scalar_select %p250, %s249, 31
        %s252 = smul.addr %s251, 7
        %s253 = smul.addr %s252, 8
        %s254 = scalar_lea.vmem %s0, %s253
        %p255 = pneg %p43
        %p256 = pneg %p40
        %p257 = pneg %p64
        %p258 = pneg %p61
        %p259 = pneg %p85
        %p260 = pneg %p82
        %p261 = pneg %p106
        %p262 = pneg %p103
        %p263 = pneg %p127
        %p264 = pneg %p124
        %p265 = pneg %p148
        %p266 = pneg %p145
        %p267 = pneg %p169
        %p268 = pneg %p166
        %p269 = pneg %p195
        %p270 = pneg %p192
        %s271 = sand.u32 %s182, 1
        %s272 = scalar_lea.sflag [#allocation4], %s271
        %s273 = sand.u32 %s182, 1
        %s274 = scalar_lea.vmem [#allocation3], %s273
        %s275 = smul.u32 16, %s22
        %p276 = scmp.lt.s32.totalorder %s275, 31
        %s277 = scalar_select %p276, %s275, 31
        %s278 = smul.addr %s277, 7
        %s279 = smul.addr %s278, 8
        %s280 = scalar_lea.vmem %s0, %s279
        %s281 = smul.u32 16, %s22
        %v283 = vld [vmem:[%s280] sm:$0xff]
        %v284 = vld [vmem:[%s280 + $0x8] sm:$0xff]
        %v285 = vld [vmem:[%s280 + $0x10] sm:$0xff]
        %v286 = vld [vmem:[%s280 + $0x18] sm:$0xff]
        %v287 = vld [vmem:[%s280 + $0x20] sm:$0xff]
        %v288 = vld [vmem:[%s280 + $0x28] sm:$0xff]
        %v289 = vld [vmem:[%s280 + $0x30] sm:$0xff]
        %v290 = vld [vmem:[%s280 + $0x38] sm:$0xff]
        %v291 = vld [vmem:[%s280 + $0x40] sm:$0xff]
        %v292 = vld [vmem:[%s280 + $0x48] sm:$0xff]
        %v293 = vld [vmem:[%s280 + $0x50] sm:$0xff]
        %v294 = vld [vmem:[%s280 + $0x58] sm:$0xff]
        %v295 = vld [vmem:[%s280 + $0x60] sm:$0xff]
        %v296 = vld [vmem:[%s280 + $0x68] sm:$0xff]
        %v297 = vld [vmem:[%s280 + $0x70] sm:$0xff]
        %v298 = vld [vmem:[%s280 + $0x78] sm:$0xff]
        %v299 = vld [vmem:[%s280 + $0x80] sm:$0xff]
        %v300 = vld [vmem:[%s280 + $0x88] sm:$0xff]
        %v301 = vld [vmem:[%s280 + $0x90] sm:$0xff]
        %v302 = vld [vmem:[%s280 + $0x98] sm:$0xff]
        %v303 = vld [vmem:[%s280 + $0xa0] sm:$0xff]
        %v304 = vld [vmem:[%s280 + $0xa8] sm:$0xff]
        %v305 = vld [vmem:[%s280 + $0xb0] sm:$0xff]
        %v306 = vld [vmem:[%s280 + $0xb8] sm:$0xff]
        %v307 = vld [vmem:[%s280 + $0xc0] sm:$0xff]
        %v308 = vld [vmem:[%s280 + $0xc8] sm:$0xff]
        %v309 = vld [vmem:[%s280 + $0xd0] sm:$0xff]
        %v310 = vld [vmem:[%s280 + $0xd8] sm:$0xff]
        %v311 = vld [vmem:[%s280 + $0xe0] sm:$0xff]
        %v312 = vld [vmem:[%s280 + $0xe8] sm:$0xff]
        %v313 = vld [vmem:[%s280 + $0xf0] sm:$0xff]
        %v314 = vld [vmem:[%s280 + $0xf8] sm:$0xff]
        %v315 = vld [vmem:[%s280 + $0x100] sm:$0xff]
        %v316 = vld [vmem:[%s280 + $0x108] sm:$0xff]
        %v317 = vld [vmem:[%s280 + $0x110] sm:$0xff]
        %v318 = vld [vmem:[%s280 + $0x118] sm:$0xff]
        %v319 = vld [vmem:[%s280 + $0x120] sm:$0xff]
        %v320 = vld [vmem:[%s280 + $0x128] sm:$0xff]
        %v321 = vld [vmem:[%s280 + $0x130] sm:$0xff]
        %v322 = vld [vmem:[%s280 + $0x138] sm:$0xff]
        %v323 = vld [vmem:[%s280 + $0x140] sm:$0xff]
        %v324 = vld [vmem:[%s280 + $0x148] sm:$0xff]
        %v325 = vld [vmem:[%s280 + $0x150] sm:$0xff]
        %v326 = vld [vmem:[%s280 + $0x158] sm:$0xff]
        %v327 = vld [vmem:[%s280 + $0x160] sm:$0xff]
        %v328 = vld [vmem:[%s280 + $0x168] sm:$0xff]
        %v329 = vld [vmem:[%s280 + $0x170] sm:$0xff]
        %v330 = vld [vmem:[%s280 + $0x178] sm:$0xff]
        %v331 = vld [vmem:[%s280 + $0x180] sm:$0xff]
        %v332 = vld [vmem:[%s280 + $0x188] sm:$0xff]
        %v333 = vld [vmem:[%s280 + $0x190] sm:$0xff]
        %v334 = vld [vmem:[%s280 + $0x198] sm:$0xff]
        %v335 = vld [vmem:[%s280 + $0x1a0] sm:$0xff]
        %v336 = vld [vmem:[%s280 + $0x1a8] sm:$0xff]
        %v337 = vld [vmem:[%s280 + $0x1b0] sm:$0xff]
        %v338 = vld [vmem:[%s280 + $0x1b8] sm:$0xff]
        %v339 = vld [vmem:[%s280 + $0x1c0] sm:$0xff]
        %v340 = vld [vmem:[%s280 + $0x1c8] sm:$0xff]
        %v341 = vld [vmem:[%s280 + $0x1d0] sm:$0xff]
        %v342 = vld [vmem:[%s280 + $0x1d8] sm:$0xff]
        %v343 = vld [vmem:[%s280 + $0x1e0] sm:$0xff]
        %v344 = vld [vmem:[%s280 + $0x1e8] sm:$0xff]
        %v345 = vld [vmem:[%s280 + $0x1f0] sm:$0xff]
        %v346 = vld [vmem:[%s280 + $0x1f8] sm:$0xff]
        %v347 = vld [vmem:[%s280 + $0x200] sm:$0xff]
        %v348 = vld [vmem:[%s280 + $0x208] sm:$0xff]
        %v349 = vld [vmem:[%s280 + $0x210] sm:$0xff]
        %v350 = vld [vmem:[%s280 + $0x218] sm:$0xff]
        %v351 = vld [vmem:[%s280 + $0x220] sm:$0xff]
        %v352 = vld [vmem:[%s280 + $0x228] sm:$0xff]
        %v353 = vld [vmem:[%s280 + $0x230] sm:$0xff]
        %v354 = vld [vmem:[%s280 + $0x238] sm:$0xff]
        %v355 = vld [vmem:[%s280 + $0x240] sm:$0xff]
        %v356 = vld [vmem:[%s280 + $0x248] sm:$0xff]
        %v357 = vld [vmem:[%s280 + $0x250] sm:$0xff]
        %v358 = vld [vmem:[%s280 + $0x258] sm:$0xff]
        %v359 = vld [vmem:[%s280 + $0x260] sm:$0xff]
        %v360 = vld [vmem:[%s280 + $0x268] sm:$0xff]
        %v361 = vld [vmem:[%s280 + $0x270] sm:$0xff]
        %v362 = vld [vmem:[%s280 + $0x278] sm:$0xff]
        %v363 = vld [vmem:[%s280 + $0x280] sm:$0xff]
        %v364 = vld [vmem:[%s280 + $0x288] sm:$0xff]
        %v365 = vld [vmem:[%s280 + $0x290] sm:$0xff]
        %v366 = vld [vmem:[%s280 + $0x298] sm:$0xff]
        %v367 = vld [vmem:[%s280 + $0x2a0] sm:$0xff]
        %v368 = vld [vmem:[%s280 + $0x2a8] sm:$0xff]
        %v369 = vld [vmem:[%s280 + $0x2b0] sm:$0xff]
        %v370 = vld [vmem:[%s280 + $0x2b8] sm:$0xff]
        %v371 = vld [vmem:[%s280 + $0x2c0] sm:$0xff]
        %v372 = vld [vmem:[%s280 + $0x2c8] sm:$0xff]
        %v373 = vld [vmem:[%s280 + $0x2d0] sm:$0xff]
        %v374 = vld [vmem:[%s280 + $0x2d8] sm:$0xff]
        %v375 = vld [vmem:[%s280 + $0x2e0] sm:$0xff]
        %v376 = vld [vmem:[%s280 + $0x2e8] sm:$0xff]
        %v377 = vld [vmem:[%s280 + $0x2f0] sm:$0xff]
        %v378 = vld [vmem:[%s280 + $0x2f8] sm:$0xff]
        %v379 = vld [vmem:[%s280 + $0x300] sm:$0xff]
        %v380 = vld [vmem:[%s280 + $0x308] sm:$0xff]
        %v381 = vld [vmem:[%s280 + $0x310] sm:$0xff]
        %v382 = vld [vmem:[%s280 + $0x318] sm:$0xff]
        %v383 = vld [vmem:[%s280 + $0x320] sm:$0xff]
        %v384 = vld [vmem:[%s280 + $0x328] sm:$0xff]
        %v385 = vld [vmem:[%s280 + $0x330] sm:$0xff]
        %v386 = vld [vmem:[%s280 + $0x338] sm:$0xff]
        %v387 = vld [vmem:[%s280 + $0x340] sm:$0xff]
        %v388 = vld [vmem:[%s280 + $0x348] sm:$0xff]
        %v389 = vld [vmem:[%s280 + $0x350] sm:$0xff]
        %v390 = vld [vmem:[%s280 + $0x358] sm:$0xff]
        %v391 = vld [vmem:[%s280 + $0x360] sm:$0xff]
        %v392 = vld [vmem:[%s280 + $0x368] sm:$0xff]
        %v393 = vld [vmem:[%s280 + $0x370] sm:$0xff]
        %v394 = vld [vmem:[%s280 + $0x378] sm:$0xff]
        %v395 = vpack.c.bf16 %v290, %v283
        %v396 = vpack.c.bf16 %v291, %v284
        %v397 = vpack.c.bf16 %v292, %v285
        %v398 = vpack.c.bf16 %v293, %v286
        %v399 = vpack.c.bf16 %v294, %v287
        %v400 = vpack.c.bf16 %v295, %v288
        %v401 = vpack.c.bf16 %v296, %v289
        %v402 = vpack.c.bf16 %v304, %v297
        %v403 = vpack.c.bf16 %v305, %v298
        %v404 = vpack.c.bf16 %v306, %v299
        %v405 = vpack.c.bf16 %v307, %v300
        %v406 = vpack.c.bf16 %v308, %v301
        %v407 = vpack.c.bf16 %v309, %v302
        %v408 = vpack.c.bf16 %v310, %v303
        %v409 = vpack.c.bf16 %v318, %v311
        %v410 = vpack.c.bf16 %v319, %v312
        %v411 = vpack.c.bf16 %v320, %v313
        %v412 = vpack.c.bf16 %v321, %v314
        %v413 = vpack.c.bf16 %v322, %v315
        %v414 = vpack.c.bf16 %v323, %v316
        %v415 = vpack.c.bf16 %v324, %v317
        %v416 = vpack.c.bf16 %v332, %v325
        %v417 = vpack.c.bf16 %v333, %v326
        %v418 = vpack.c.bf16 %v334, %v327
        %v419 = vpack.c.bf16 %v335, %v328
        %v420 = vpack.c.bf16 %v336, %v329
        %v421 = vpack.c.bf16 %v337, %v330
        %v422 = vpack.c.bf16 %v338, %v331
        %v423 = vpack.c.bf16 %v346, %v339
        %v424 = vpack.c.bf16 %v347, %v340
        %v425 = vpack.c.bf16 %v348, %v341
        %v426 = vpack.c.bf16 %v349, %v342
        %v427 = vpack.c.bf16 %v350, %v343
        %v428 = vpack.c.bf16 %v351, %v344
        %v429 = vpack.c.bf16 %v352, %v345
        %v430 = vpack.c.bf16 %v360, %v353
        %v431 = vpack.c.bf16 %v361, %v354
        %v432 = vpack.c.bf16 %v362, %v355
        %v433 = vpack.c.bf16 %v363, %v356
        %v434 = vpack.c.bf16 %v364, %v357
        %v435 = vpack.c.bf16 %v365, %v358
        %v436 = vpack.c.bf16 %v366, %v359
        %v437 = vpack.c.bf16 %v374, %v367
        %v438 = vpack.c.bf16 %v375, %v368
        %v439 = vpack.c.bf16 %v376, %v369
        %v440 = vpack.c.bf16 %v377, %v370
        %v441 = vpack.c.bf16 %v378, %v371
        %v442 = vpack.c.bf16 %v379, %v372
        %v443 = vpack.c.bf16 %v380, %v373
        %v444 = vpack.c.bf16 %v388, %v381
        %v445 = vpack.c.bf16 %v389, %v382
        %v446 = vpack.c.bf16 %v390, %v383
        %v447 = vpack.c.bf16 %v391, %v384
        %v448 = vpack.c.bf16 %v392, %v385
        %v449 = vpack.c.bf16 %v393, %v386
        %v450 = vpack.c.bf16 %v394, %v387
        %v451 = vld [vmem:[%s1] sm:$0xff]
        %v452 = vld [vmem:[%s1 + $0x8] sm:$0xff]
        %v453 = vld [vmem:[%s1 + $0x10] sm:$0xff]
        %v454 = vld [vmem:[%s1 + $0x18] sm:$0xff]
        %v455 = vld [vmem:[%s1 + $0x20] sm:$0xff]
        %v456 = vld [vmem:[%s1 + $0x28] sm:$0xff]
        %v457 = vld [vmem:[%s1 + $0x30] sm:$0xff]
        %v458 = vld [vmem:[%s1 + $0x38] sm:$0xff]
        %v459 = vld [vmem:[%s1 + $0x40] sm:$0xff]
        %v460 = vld [vmem:[%s1 + $0x48] sm:$0xff]
        %v461 = vld [vmem:[%s1 + $0x50] sm:$0xff]
        %v462 = vld [vmem:[%s1 + $0x58] sm:$0xff]
        %v463 = vld [vmem:[%s1 + $0x60] sm:$0xff]
        %v464 = vld [vmem:[%s1 + $0x68] sm:$0xff]
        %v465 = vld [vmem:[%s1 + $0x70] sm:$0xff]
        %v466 = vld [vmem:[%s1 + $0x78] sm:$0xff]
        %v467 = vld [vmem:[%s1 + $0x80] sm:$0xff]
        %v468 = vld [vmem:[%s1 + $0x88] sm:$0xff]
        %v469 = vld [vmem:[%s1 + $0x90] sm:$0xff]
        %v470 = vld [vmem:[%s1 + $0x98] sm:$0xff]
        %v471 = vld [vmem:[%s1 + $0xa0] sm:$0xff]
        %v472 = vld [vmem:[%s1 + $0xa8] sm:$0xff]
        %v473 = vld [vmem:[%s1 + $0xb0] sm:$0xff]
        %v474 = vld [vmem:[%s1 + $0xb8] sm:$0xff]
        %v475 = vld [vmem:[%s1 + $0xc0] sm:$0xff]
        %v476 = vld [vmem:[%s1 + $0xc8] sm:$0xff]
        %v477 = vld [vmem:[%s1 + $0xd0] sm:$0xff]
        %v478 = vld [vmem:[%s1 + $0xd8] sm:$0xff]
        %v479 = vld [vmem:[%s1 + $0xe0] sm:$0xff]
        %v480 = vld [vmem:[%s1 + $0xe8] sm:$0xff]
        %v481 = vld [vmem:[%s1 + $0xf0] sm:$0xff]
        %v482 = vld [vmem:[%s1 + $0xf8] sm:$0xff]
        %v483 = vld [vmem:[%s1 + $0x100] sm:$0xff]
        %v484 = vld [vmem:[%s1 + $0x108] sm:$0xff]
        %v485 = vld [vmem:[%s1 + $0x110] sm:$0xff]
        %v486 = vld [vmem:[%s1 + $0x118] sm:$0xff]
        %v487 = vld [vmem:[%s1 + $0x120] sm:$0xff]
        %v488 = vld [vmem:[%s1 + $0x128] sm:$0xff]
        %v489 = vld [vmem:[%s1 + $0x130] sm:$0xff]
        %v490 = vld [vmem:[%s1 + $0x138] sm:$0xff]
        %v491 = vld [vmem:[%s1 + $0x140] sm:$0xff]
        %v492 = vld [vmem:[%s1 + $0x148] sm:$0xff]
        %v493 = vld [vmem:[%s1 + $0x150] sm:$0xff]
        %v494 = vld [vmem:[%s1 + $0x158] sm:$0xff]
        %v495 = vld [vmem:[%s1 + $0x160] sm:$0xff]
        %v496 = vld [vmem:[%s1 + $0x168] sm:$0xff]
        %v497 = vld [vmem:[%s1 + $0x170] sm:$0xff]
        %v498 = vld [vmem:[%s1 + $0x178] sm:$0xff]
        %v499 = vld [vmem:[%s1 + $0x180] sm:$0xff]
        %v500 = vld [vmem:[%s1 + $0x188] sm:$0xff]
        %v501 = vld [vmem:[%s1 + $0x190] sm:$0xff]
        %v502 = vld [vmem:[%s1 + $0x198] sm:$0xff]
        %v503 = vld [vmem:[%s1 + $0x1a0] sm:$0xff]
        %v504 = vld [vmem:[%s1 + $0x1a8] sm:$0xff]
        %v505 = vld [vmem:[%s1 + $0x1b0] sm:$0xff]
        %v506 = vld [vmem:[%s1 + $0x1b8] sm:$0xff]
        %v507 = vld [vmem:[%s1 + $0x1c0] sm:$0xff]
        %v508 = vld [vmem:[%s1 + $0x1c8] sm:$0xff]
        %v509 = vld [vmem:[%s1 + $0x1d0] sm:$0xff]
        %v510 = vld [vmem:[%s1 + $0x1d8] sm:$0xff]
        %v511 = vld [vmem:[%s1 + $0x1e0] sm:$0xff]
        %v512 = vld [vmem:[%s1 + $0x1e8] sm:$0xff]
        %v513 = vld [vmem:[%s1 + $0x1f0] sm:$0xff]
        %v514 = vld [vmem:[%s1 + $0x1f8] sm:$0xff]
        %v515 = vld [vmem:[%s1 + $0x200] sm:$0xff]
        %v516 = vld [vmem:[%s1 + $0x208] sm:$0xff]
        %v517 = vld [vmem:[%s1 + $0x210] sm:$0xff]
        %v518 = vld [vmem:[%s1 + $0x218] sm:$0xff]
        %v519 = vld [vmem:[%s1 + $0x220] sm:$0xff]
        %v520 = vld [vmem:[%s1 + $0x228] sm:$0xff]
        %v521 = vld [vmem:[%s1 + $0x230] sm:$0xff]
        %v522 = vld [vmem:[%s1 + $0x238] sm:$0xff]
        %v523 = vld [vmem:[%s1 + $0x240] sm:$0xff]
        %v524 = vld [vmem:[%s1 + $0x248] sm:$0xff]
        %v525 = vld [vmem:[%s1 + $0x250] sm:$0xff]
        %v526 = vld [vmem:[%s1 + $0x258] sm:$0xff]
        %v527 = vld [vmem:[%s1 + $0x260] sm:$0xff]
        %v528 = vld [vmem:[%s1 + $0x268] sm:$0xff]
        %v529 = vld [vmem:[%s1 + $0x270] sm:$0xff]
        %v530 = vld [vmem:[%s1 + $0x278] sm:$0xff]
        %v531 = vld [vmem:[%s1 + $0x280] sm:$0xff]
        %v532 = vld [vmem:[%s1 + $0x288] sm:$0xff]
        %v533 = vld [vmem:[%s1 + $0x290] sm:$0xff]
        %v534 = vld [vmem:[%s1 + $0x298] sm:$0xff]
        %v535 = vld [vmem:[%s1 + $0x2a0] sm:$0xff]
        %v536 = vld [vmem:[%s1 + $0x2a8] sm:$0xff]
        %v537 = vld [vmem:[%s1 + $0x2b0] sm:$0xff]
        %v538 = vld [vmem:[%s1 + $0x2b8] sm:$0xff]
        %v539 = vld [vmem:[%s1 + $0x2c0] sm:$0xff]
        %v540 = vld [vmem:[%s1 + $0x2c8] sm:$0xff]
        %v541 = vld [vmem:[%s1 + $0x2d0] sm:$0xff]
        %v542 = vld [vmem:[%s1 + $0x2d8] sm:$0xff]
        %v543 = vld [vmem:[%s1 + $0x2e0] sm:$0xff]
        %v544 = vld [vmem:[%s1 + $0x2e8] sm:$0xff]
        %v545 = vld [vmem:[%s1 + $0x2f0] sm:$0xff]
        %v546 = vld [vmem:[%s1 + $0x2f8] sm:$0xff]
        %v547 = vld [vmem:[%s1 + $0x300] sm:$0xff]
        %v548 = vld [vmem:[%s1 + $0x308] sm:$0xff]
        %v549 = vld [vmem:[%s1 + $0x310] sm:$0xff]
        %v550 = vld [vmem:[%s1 + $0x318] sm:$0xff]
        %v551 = vld [vmem:[%s1 + $0x320] sm:$0xff]
        %v552 = vld [vmem:[%s1 + $0x328] sm:$0xff]
        %v553 = vld [vmem:[%s1 + $0x330] sm:$0xff]
        %v554 = vld [vmem:[%s1 + $0x338] sm:$0xff]
        %v555 = vld [vmem:[%s1 + $0x340] sm:$0xff]
        %v556 = vld [vmem:[%s1 + $0x348] sm:$0xff]
        %v557 = vld [vmem:[%s1 + $0x350] sm:$0xff]
        %v558 = vld [vmem:[%s1 + $0x358] sm:$0xff]
        %v559 = vld [vmem:[%s1 + $0x360] sm:$0xff]
        %v560 = vld [vmem:[%s1 + $0x368] sm:$0xff]
        %v561 = vld [vmem:[%s1 + $0x370] sm:$0xff]
        %v562 = vld [vmem:[%s1 + $0x378] sm:$0xff]
        %v563 = vld [vmem:[%s1 + $0x380] sm:$0xff]
        %v564 = vld [vmem:[%s1 + $0x388] sm:$0xff]
        %v565 = vld [vmem:[%s1 + $0x390] sm:$0xff]
        %v566 = vld [vmem:[%s1 + $0x398] sm:$0xff]
        %v567 = vld [vmem:[%s1 + $0x3a0] sm:$0xff]
        %v568 = vld [vmem:[%s1 + $0x3a8] sm:$0xff]
        %v569 = vld [vmem:[%s1 + $0x3b0] sm:$0xff]
        %v570 = vld [vmem:[%s1 + $0x3b8] sm:$0xff]
        %v571 = vld [vmem:[%s1 + $0x3c0] sm:$0xff]
        %v572 = vld [vmem:[%s1 + $0x3c8] sm:$0xff]
        %v573 = vld [vmem:[%s1 + $0x3d0] sm:$0xff]
        %v574 = vld [vmem:[%s1 + $0x3d8] sm:$0xff]
        %v575 = vld [vmem:[%s1 + $0x3e0] sm:$0xff]
        %v576 = vld [vmem:[%s1 + $0x3e8] sm:$0xff]
        %v577 = vld [vmem:[%s1 + $0x3f0] sm:$0xff]
        %v578 = vld [vmem:[%s1 + $0x3f8] sm:$0xff]
        %v579 = vld [vmem:[%s1 + $0x400] sm:$0xff]
        %v580 = vld [vmem:[%s1 + $0x408] sm:$0xff]
        %v581 = vld [vmem:[%s1 + $0x410] sm:$0xff]
        %v582 = vld [vmem:[%s1 + $0x418] sm:$0xff]
        %v583 = vld [vmem:[%s1 + $0x420] sm:$0xff]
        %v584 = vld [vmem:[%s1 + $0x428] sm:$0xff]
        %v585 = vld [vmem:[%s1 + $0x430] sm:$0xff]
        %v586 = vld [vmem:[%s1 + $0x438] sm:$0xff]
        %v587 = vld [vmem:[%s1 + $0x440] sm:$0xff]
        %v588 = vld [vmem:[%s1 + $0x448] sm:$0xff]
        %v589 = vld [vmem:[%s1 + $0x450] sm:$0xff]
        %v590 = vld [vmem:[%s1 + $0x458] sm:$0xff]
        %v591 = vld [vmem:[%s1 + $0x460] sm:$0xff]
        %v592 = vld [vmem:[%s1 + $0x468] sm:$0xff]
        %v593 = vld [vmem:[%s1 + $0x470] sm:$0xff]
        %v594 = vld [vmem:[%s1 + $0x478] sm:$0xff]
        %v595 = vld [vmem:[%s1 + $0x480] sm:$0xff]
        %v596 = vld [vmem:[%s1 + $0x488] sm:$0xff]
        %v597 = vld [vmem:[%s1 + $0x490] sm:$0xff]
        %v598 = vld [vmem:[%s1 + $0x498] sm:$0xff]
        %v599 = vld [vmem:[%s1 + $0x4a0] sm:$0xff]
        %v600 = vld [vmem:[%s1 + $0x4a8] sm:$0xff]
        %v601 = vld [vmem:[%s1 + $0x4b0] sm:$0xff]
        %v602 = vld [vmem:[%s1 + $0x4b8] sm:$0xff]
        %v603 = vld [vmem:[%s1 + $0x4c0] sm:$0xff]
        %v604 = vld [vmem:[%s1 + $0x4c8] sm:$0xff]
        %v605 = vld [vmem:[%s1 + $0x4d0] sm:$0xff]
        %v606 = vld [vmem:[%s1 + $0x4d8] sm:$0xff]
        %v607 = vld [vmem:[%s1 + $0x4e0] sm:$0xff]
        %v608 = vld [vmem:[%s1 + $0x4e8] sm:$0xff]
        %v609 = vld [vmem:[%s1 + $0x4f0] sm:$0xff]
        %v610 = vld [vmem:[%s1 + $0x4f8] sm:$0xff]
        %v611 = vld [vmem:[%s1 + $0x500] sm:$0xff]
        %v612 = vld [vmem:[%s1 + $0x508] sm:$0xff]
        %v613 = vld [vmem:[%s1 + $0x510] sm:$0xff]
        %v614 = vld [vmem:[%s1 + $0x518] sm:$0xff]
        %v615 = vld [vmem:[%s1 + $0x520] sm:$0xff]
        %v616 = vld [vmem:[%s1 + $0x528] sm:$0xff]
        %v617 = vld [vmem:[%s1 + $0x530] sm:$0xff]
        %v618 = vld [vmem:[%s1 + $0x538] sm:$0xff]
        %v619 = vld [vmem:[%s1 + $0x540] sm:$0xff]
        %v620 = vld [vmem:[%s1 + $0x548] sm:$0xff]
        %v621 = vld [vmem:[%s1 + $0x550] sm:$0xff]
        %v622 = vld [vmem:[%s1 + $0x558] sm:$0xff]
        %v623 = vld [vmem:[%s1 + $0x560] sm:$0xff]
        %v624 = vld [vmem:[%s1 + $0x568] sm:$0xff]
        %v625 = vld [vmem:[%s1 + $0x570] sm:$0xff]
        %v626 = vld [vmem:[%s1 + $0x578] sm:$0xff]
        %v627 = vld [vmem:[%s1 + $0x580] sm:$0xff]
        %v628 = vld [vmem:[%s1 + $0x588] sm:$0xff]
        %v629 = vld [vmem:[%s1 + $0x590] sm:$0xff]
        %v630 = vld [vmem:[%s1 + $0x598] sm:$0xff]
        %v631 = vld [vmem:[%s1 + $0x5a0] sm:$0xff]
        %v632 = vld [vmem:[%s1 + $0x5a8] sm:$0xff]
        %v633 = vld [vmem:[%s1 + $0x5b0] sm:$0xff]
        %v634 = vld [vmem:[%s1 + $0x5b8] sm:$0xff]
        %v635 = vld [vmem:[%s1 + $0x5c0] sm:$0xff]
        %v636 = vld [vmem:[%s1 + $0x5c8] sm:$0xff]
        %v637 = vld [vmem:[%s1 + $0x5d0] sm:$0xff]
        %v638 = vld [vmem:[%s1 + $0x5d8] sm:$0xff]
        %v639 = vld [vmem:[%s1 + $0x5e0] sm:$0xff]
        %v640 = vld [vmem:[%s1 + $0x5e8] sm:$0xff]
        %v641 = vld [vmem:[%s1 + $0x5f0] sm:$0xff]
        %v642 = vld [vmem:[%s1 + $0x5f8] sm:$0xff]
        %v643 = vld [vmem:[%s1 + $0x600] sm:$0xff]
        %v644 = vld [vmem:[%s1 + $0x608] sm:$0xff]
        %v645 = vld [vmem:[%s1 + $0x610] sm:$0xff]
        %v646 = vld [vmem:[%s1 + $0x618] sm:$0xff]
        %v647 = vld [vmem:[%s2] sm:$0xf]
        %v649 = vlaneseq
        %v650 = vshrl.u32 %v649, 7
        %v651 = vsub.s32 0, %v650
        %v652 = vrot.slane %v647, %v651
        %v653 = vlaneseq
        %v654 = vshrl.u32 %v653, 7
        %v655 = vsub.s32 1, %v654
        %v656 = vrot.slane %v647, %v655
        %v657 = vlaneseq
        %v658 = vshrl.u32 %v657, 7
        %v659 = vsub.s32 2, %v658
        %v660 = vrot.slane %v647, %v659
        %v661 = vlaneseq
        %v662 = vshrl.u32 %v661, 7
        %v663 = vsub.s32 3, %v662
        %v664 = vrot.slane %v647, %v663
        %v865 = vunpack.c.l.b16 %v451
        %v866 = vunpack.c.h.b16 %v451
        %v867 = vunpack.c.l.b16 %v452
        %v868 = vunpack.c.h.b16 %v452
        %v869 = vunpack.c.l.b16 %v453
        %v870 = vunpack.c.h.b16 %v453
        %v871 = vunpack.c.l.b16 %v454
        %v872 = vunpack.c.h.b16 %v454
        %v873 = vunpack.c.l.b16 %v455
        %v874 = vunpack.c.h.b16 %v455
        %v875 = vunpack.c.l.b16 %v456
        %v876 = vunpack.c.h.b16 %v456
        %v877 = vunpack.c.l.b16 %v457
        %v878 = vunpack.c.h.b16 %v457
        %v879 = vunpack.c.l.b16 %v458
        %v880 = vunpack.c.h.b16 %v458
        %v881 = vunpack.c.l.b16 %v459
        %v882 = vunpack.c.h.b16 %v459
        %v883 = vunpack.c.l.b16 %v460
        %v884 = vunpack.c.h.b16 %v460
        %v885 = vunpack.c.l.b16 %v461
        %v886 = vunpack.c.h.b16 %v461
        %v887 = vunpack.c.l.b16 %v462
        %v888 = vunpack.c.h.b16 %v462
        %v889 = vunpack.c.l.b16 %v463
        %v890 = vunpack.c.h.b16 %v463
        %v891 = vunpack.c.l.b16 %v464
        %v892 = vunpack.c.h.b16 %v464
        %v893 = vunpack.c.l.b16 %v465
        %v894 = vunpack.c.h.b16 %v465
        %v895 = vunpack.c.l.b16 %v466
        %v896 = vunpack.c.h.b16 %v466
        %v897 = vunpack.c.l.b16 %v467
        %v898 = vunpack.c.h.b16 %v467
        %v899 = vunpack.c.l.b16 %v468
        %v900 = vunpack.c.h.b16 %v468
        %v901 = vunpack.c.l.b16 %v469
        %v902 = vunpack.c.h.b16 %v469
        %v903 = vunpack.c.l.b16 %v470
        %v904 = vunpack.c.h.b16 %v470
        %v905 = vunpack.c.l.b16 %v471
        %v906 = vunpack.c.h.b16 %v471
        %v907 = vunpack.c.l.b16 %v472
        %v908 = vunpack.c.h.b16 %v472
        %v909 = vunpack.c.l.b16 %v473
        %v910 = vunpack.c.h.b16 %v473
        %v911 = vunpack.c.l.b16 %v474
        %v912 = vunpack.c.h.b16 %v474
        %v913 = vunpack.c.l.b16 %v475
        %v914 = vunpack.c.h.b16 %v475
        %v915 = vunpack.c.l.b16 %v476
        %v916 = vunpack.c.h.b16 %v476
        %v917 = vunpack.c.l.b16 %v477
        %v918 = vunpack.c.h.b16 %v477
        %v919 = vunpack.c.l.b16 %v478
        %v920 = vunpack.c.h.b16 %v478
        %v921 = vunpack.c.l.b16 %v479
        %v922 = vunpack.c.h.b16 %v479
        %v923 = vunpack.c.l.b16 %v480
        %v924 = vunpack.c.h.b16 %v480
        %v925 = vunpack.c.l.b16 %v481
        %v926 = vunpack.c.h.b16 %v481
        %v927 = vunpack.c.l.b16 %v482
        %v928 = vunpack.c.h.b16 %v482
        %v929 = vunpack.c.l.b16 %v483
        %v930 = vunpack.c.h.b16 %v483
        %v931 = vunpack.c.l.b16 %v484
        %v932 = vunpack.c.h.b16 %v484
        %v933 = vunpack.c.l.b16 %v485
        %v934 = vunpack.c.h.b16 %v485
        %v935 = vunpack.c.l.b16 %v486
        %v936 = vunpack.c.h.b16 %v486
        %v937 = vunpack.c.l.b16 %v487
        %v938 = vunpack.c.h.b16 %v487
        %v939 = vunpack.c.l.b16 %v488
        %v940 = vunpack.c.h.b16 %v488
        %v941 = vunpack.c.l.b16 %v489
        %v942 = vunpack.c.h.b16 %v489
        %v943 = vunpack.c.l.b16 %v490
        %v944 = vunpack.c.h.b16 %v490
        %v945 = vunpack.c.l.b16 %v491
        %v946 = vunpack.c.h.b16 %v491
        %v947 = vunpack.c.l.b16 %v492
        %v948 = vunpack.c.h.b16 %v492
        %v949 = vunpack.c.l.b16 %v493
        %v950 = vunpack.c.h.b16 %v493
        %v951 = vunpack.c.l.b16 %v494
        %v952 = vunpack.c.h.b16 %v494
        %v953 = vunpack.c.l.b16 %v495
        %v954 = vunpack.c.h.b16 %v495
        %v955 = vunpack.c.l.b16 %v496
        %v956 = vunpack.c.h.b16 %v496
        %v957 = vunpack.c.l.b16 %v497
        %v958 = vunpack.c.h.b16 %v497
        %v959 = vunpack.c.l.b16 %v498
        %v960 = vunpack.c.h.b16 %v498
        %v961 = vunpack.c.l.b16 %v499
        %v962 = vunpack.c.h.b16 %v499
        %v963 = vunpack.c.l.b16 %v500
        %v964 = vunpack.c.h.b16 %v500
        %v965 = vunpack.c.l.b16 %v501
        %v966 = vunpack.c.h.b16 %v501
        %v967 = vunpack.c.l.b16 %v502
        %v968 = vunpack.c.h.b16 %v502
        %v969 = vunpack.c.l.b16 %v503
        %v970 = vunpack.c.h.b16 %v503
        %v971 = vunpack.c.l.b16 %v504
        %v972 = vunpack.c.h.b16 %v504
        %v973 = vunpack.c.l.b16 %v505
        %v974 = vunpack.c.h.b16 %v505
        %v975 = vunpack.c.l.b16 %v506
        %v976 = vunpack.c.h.b16 %v506
        %v977 = vunpack.c.l.b16 %v507
        %v978 = vunpack.c.h.b16 %v507
        %v979 = vunpack.c.l.b16 %v508
        %v980 = vunpack.c.h.b16 %v508
        %v981 = vunpack.c.l.b16 %v509
        %v982 = vunpack.c.h.b16 %v509
        %v983 = vunpack.c.l.b16 %v510
        %v984 = vunpack.c.h.b16 %v510
        %v985 = vunpack.c.l.b16 %v511
        %v986 = vunpack.c.h.b16 %v511
        %v987 = vunpack.c.l.b16 %v512
        %v988 = vunpack.c.h.b16 %v512
        %v989 = vunpack.c.l.b16 %v513
        %v990 = vunpack.c.h.b16 %v513
        %v991 = vunpack.c.l.b16 %v514
        %v992 = vunpack.c.h.b16 %v514
        %v993 = vunpack.c.l.b16 %v515
        %v994 = vunpack.c.h.b16 %v515
        %v995 = vunpack.c.l.b16 %v516
        %v996 = vunpack.c.h.b16 %v516
        %v997 = vunpack.c.l.b16 %v517
        %v998 = vunpack.c.h.b16 %v517
        %v999 = vunpack.c.l.b16 %v518
        %v1000 = vunpack.c.h.b16 %v518
        %v1001 = vunpack.c.l.b16 %v519
        %v1002 = vunpack.c.h.b16 %v519
        %v1003 = vunpack.c.l.b16 %v520
        %v1004 = vunpack.c.h.b16 %v520
        %v1005 = vunpack.c.l.b16 %v521
        %v1006 = vunpack.c.h.b16 %v521
        %v1007 = vunpack.c.l.b16 %v522
        %v1008 = vunpack.c.h.b16 %v522
        %v1009 = vunpack.c.l.b16 %v523
        %v1010 = vunpack.c.h.b16 %v523
        %v1011 = vunpack.c.l.b16 %v524
        %v1012 = vunpack.c.h.b16 %v524
        %v1013 = vunpack.c.l.b16 %v525
        %v1014 = vunpack.c.h.b16 %v525
        %v1015 = vunpack.c.l.b16 %v526
        %v1016 = vunpack.c.h.b16 %v526
        %v1017 = vunpack.c.l.b16 %v527
        %v1018 = vunpack.c.h.b16 %v527
        %v1019 = vunpack.c.l.b16 %v528
        %v1020 = vunpack.c.h.b16 %v528
        %v1021 = vunpack.c.l.b16 %v529
        %v1022 = vunpack.c.h.b16 %v529
        %v1023 = vunpack.c.l.b16 %v530
        %v1024 = vunpack.c.h.b16 %v530
        %v1025 = vunpack.c.l.b16 %v531
        %v1026 = vunpack.c.h.b16 %v531
        %v1027 = vunpack.c.l.b16 %v532
        %v1028 = vunpack.c.h.b16 %v532
        %v1029 = vunpack.c.l.b16 %v533
        %v1030 = vunpack.c.h.b16 %v533
        %v1031 = vunpack.c.l.b16 %v534
        %v1032 = vunpack.c.h.b16 %v534
        %v1033 = vunpack.c.l.b16 %v535
        %v1034 = vunpack.c.h.b16 %v535
        %v1035 = vunpack.c.l.b16 %v536
        %v1036 = vunpack.c.h.b16 %v536
        %v1037 = vunpack.c.l.b16 %v537
        %v1038 = vunpack.c.h.b16 %v537
        %v1039 = vunpack.c.l.b16 %v538
        %v1040 = vunpack.c.h.b16 %v538
        %v1041 = vunpack.c.l.b16 %v539
        %v1042 = vunpack.c.h.b16 %v539
        %v1043 = vunpack.c.l.b16 %v540
        %v1044 = vunpack.c.h.b16 %v540
        %v1045 = vunpack.c.l.b16 %v541
        %v1046 = vunpack.c.h.b16 %v541
        %v1047 = vunpack.c.l.b16 %v542
        %v1048 = vunpack.c.h.b16 %v542
        %v1049 = vunpack.c.l.b16 %v543
        %v1050 = vunpack.c.h.b16 %v543
        %v1051 = vunpack.c.l.b16 %v544
        %v1052 = vunpack.c.h.b16 %v544
        %v1053 = vunpack.c.l.b16 %v545
        %v1054 = vunpack.c.h.b16 %v545
        %v1055 = vunpack.c.l.b16 %v546
        %v1056 = vunpack.c.h.b16 %v546
        %v1057 = vunpack.c.l.b16 %v547
        %v1058 = vunpack.c.h.b16 %v547
        %v1059 = vunpack.c.l.b16 %v548
        %v1060 = vunpack.c.h.b16 %v548
        %v1061 = vunpack.c.l.b16 %v549
        %v1062 = vunpack.c.h.b16 %v549
        %v1063 = vunpack.c.l.b16 %v550
        %v1064 = vunpack.c.h.b16 %v550
        %v1065 = vunpack.c.l.b16 %v551
        %v1066 = vunpack.c.h.b16 %v551
        %v1067 = vunpack.c.l.b16 %v552
        %v1068 = vunpack.c.h.b16 %v552
        %v1069 = vunpack.c.l.b16 %v553
        %v1070 = vunpack.c.h.b16 %v553
        %v1071 = vunpack.c.l.b16 %v554
        %v1072 = vunpack.c.h.b16 %v554
        %v1073 = vunpack.c.l.b16 %v555
        %v1074 = vunpack.c.h.b16 %v555
        %v1075 = vunpack.c.l.b16 %v556
        %v1076 = vunpack.c.h.b16 %v556
        %v1077 = vunpack.c.l.b16 %v557
        %v1078 = vunpack.c.h.b16 %v557
        %v1079 = vunpack.c.l.b16 %v558
        %v1080 = vunpack.c.h.b16 %v558
        %v1081 = vunpack.c.l.b16 %v559
        %v1082 = vunpack.c.h.b16 %v559
        %v1083 = vunpack.c.l.b16 %v560
        %v1084 = vunpack.c.h.b16 %v560
        %v1085 = vunpack.c.l.b16 %v561
        %v1086 = vunpack.c.h.b16 %v561
        %v1087 = vunpack.c.l.b16 %v562
        %v1088 = vunpack.c.h.b16 %v562
        %v1089 = vunpack.c.l.b16 %v563
        %v1090 = vunpack.c.h.b16 %v563
        %v1091 = vunpack.c.l.b16 %v564
        %v1092 = vunpack.c.h.b16 %v564
        %v1093 = vunpack.c.l.b16 %v565
        %v1094 = vunpack.c.h.b16 %v565
        %v1095 = vunpack.c.l.b16 %v566
        %v1096 = vunpack.c.h.b16 %v566
        %v1097 = vunpack.c.l.b16 %v567
        %v1098 = vunpack.c.h.b16 %v567
        %v1099 = vunpack.c.l.b16 %v568
        %v1100 = vunpack.c.h.b16 %v568
        %v1101 = vunpack.c.l.b16 %v569
        %v1102 = vunpack.c.h.b16 %v569
        %v1103 = vunpack.c.l.b16 %v570
        %v1104 = vunpack.c.h.b16 %v570
        %v1105 = vunpack.c.l.b16 %v571
        %v1106 = vunpack.c.h.b16 %v571
        %v1107 = vunpack.c.l.b16 %v572
        %v1108 = vunpack.c.h.b16 %v572
        %v1109 = vunpack.c.l.b16 %v573
        %v1110 = vunpack.c.h.b16 %v573
        %v1111 = vunpack.c.l.b16 %v574
        %v1112 = vunpack.c.h.b16 %v574
        %v1113 = vunpack.c.l.b16 %v575
        %v1114 = vunpack.c.h.b16 %v575
        %v1115 = vunpack.c.l.b16 %v576
        %v1116 = vunpack.c.h.b16 %v576
        %v1117 = vunpack.c.l.b16 %v577
        %v1118 = vunpack.c.h.b16 %v577
        %v1119 = vunpack.c.l.b16 %v578
        %v1120 = vunpack.c.h.b16 %v578
        %v1121 = vunpack.c.l.b16 %v579
        %v1122 = vunpack.c.h.b16 %v579
        %v1123 = vunpack.c.l.b16 %v580
        %v1124 = vunpack.c.h.b16 %v580
        %v1125 = vunpack.c.l.b16 %v581
        %v1126 = vunpack.c.h.b16 %v581
        %v1127 = vunpack.c.l.b16 %v582
        %v1128 = vunpack.c.h.b16 %v582
        %v1129 = vunpack.c.l.b16 %v583
        %v1130 = vunpack.c.h.b16 %v583
        %v1131 = vunpack.c.l.b16 %v584
        %v1132 = vunpack.c.h.b16 %v584
        %v1133 = vunpack.c.l.b16 %v585
        %v1134 = vunpack.c.h.b16 %v585
        %v1135 = vunpack.c.l.b16 %v586
        %v1136 = vunpack.c.h.b16 %v586
        %v1137 = vunpack.c.l.b16 %v587
        %v1138 = vunpack.c.h.b16 %v587
        %v1139 = vunpack.c.l.b16 %v588
        %v1140 = vunpack.c.h.b16 %v588
        %v1141 = vunpack.c.l.b16 %v589
        %v1142 = vunpack.c.h.b16 %v589
        %v1143 = vunpack.c.l.b16 %v590
        %v1144 = vunpack.c.h.b16 %v590
        %v1145 = vunpack.c.l.b16 %v591
        %v1146 = vunpack.c.h.b16 %v591
        %v1147 = vunpack.c.l.b16 %v592
        %v1148 = vunpack.c.h.b16 %v592
        %v1149 = vunpack.c.l.b16 %v593
        %v1150 = vunpack.c.h.b16 %v593
        %v1151 = vunpack.c.l.b16 %v594
        %v1152 = vunpack.c.h.b16 %v594
        %v1153 = vunpack.c.l.b16 %v595
        %v1154 = vunpack.c.h.b16 %v595
        %v1155 = vunpack.c.l.b16 %v596
        %v1156 = vunpack.c.h.b16 %v596
        %v1157 = vunpack.c.l.b16 %v597
        %v1158 = vunpack.c.h.b16 %v597
        %v1159 = vunpack.c.l.b16 %v598
        %v1160 = vunpack.c.h.b16 %v598
        %v1161 = vunpack.c.l.b16 %v599
        %v1162 = vunpack.c.h.b16 %v599
        %v1163 = vunpack.c.l.b16 %v600
        %v1164 = vunpack.c.h.b16 %v600
        %v1165 = vunpack.c.l.b16 %v601
        %v1166 = vunpack.c.h.b16 %v601
        %v1167 = vunpack.c.l.b16 %v602
        %v1168 = vunpack.c.h.b16 %v602
        %v1169 = vunpack.c.l.b16 %v603
        %v1170 = vunpack.c.h.b16 %v603
        %v1171 = vunpack.c.l.b16 %v604
        %v1172 = vunpack.c.h.b16 %v604
        %v1173 = vunpack.c.l.b16 %v605
        %v1174 = vunpack.c.h.b16 %v605
        %v1175 = vunpack.c.l.b16 %v606
        %v1176 = vunpack.c.h.b16 %v606
        %v1177 = vunpack.c.l.b16 %v607
        %v1178 = vunpack.c.h.b16 %v607
        %v1179 = vunpack.c.l.b16 %v608
        %v1180 = vunpack.c.h.b16 %v608
        %v1181 = vunpack.c.l.b16 %v609
        %v1182 = vunpack.c.h.b16 %v609
        %v1183 = vunpack.c.l.b16 %v610
        %v1184 = vunpack.c.h.b16 %v610
        %v1185 = vunpack.c.l.b16 %v611
        %v1186 = vunpack.c.h.b16 %v611
        %v1187 = vunpack.c.l.b16 %v612
        %v1188 = vunpack.c.h.b16 %v612
        %v1189 = vunpack.c.l.b16 %v613
        %v1190 = vunpack.c.h.b16 %v613
        %v1191 = vunpack.c.l.b16 %v614
        %v1192 = vunpack.c.h.b16 %v614
        %v1193 = vunpack.c.l.b16 %v615
        %v1194 = vunpack.c.h.b16 %v615
        %v1195 = vunpack.c.l.b16 %v616
        %v1196 = vunpack.c.h.b16 %v616
        %v1197 = vunpack.c.l.b16 %v617
        %v1198 = vunpack.c.h.b16 %v617
        %v1199 = vunpack.c.l.b16 %v618
        %v1200 = vunpack.c.h.b16 %v618
        %v1201 = vunpack.c.l.b16 %v619
        %v1202 = vunpack.c.h.b16 %v619
        %v1203 = vunpack.c.l.b16 %v620
        %v1204 = vunpack.c.h.b16 %v620
        %v1205 = vunpack.c.l.b16 %v621
        %v1206 = vunpack.c.h.b16 %v621
        %v1207 = vunpack.c.l.b16 %v622
        %v1208 = vunpack.c.h.b16 %v622
        %v1209 = vunpack.c.l.b16 %v623
        %v1210 = vunpack.c.h.b16 %v623
        %v1211 = vunpack.c.l.b16 %v624
        %v1212 = vunpack.c.h.b16 %v624
        %v1213 = vunpack.c.l.b16 %v625
        %v1214 = vunpack.c.h.b16 %v625
        %v1215 = vunpack.c.l.b16 %v626
        %v1216 = vunpack.c.h.b16 %v626
        %v1217 = vunpack.c.l.b16 %v627
        %v1218 = vunpack.c.h.b16 %v627
        %v1219 = vunpack.c.l.b16 %v628
        %v1220 = vunpack.c.h.b16 %v628
        %v1221 = vunpack.c.l.b16 %v629
        %v1222 = vunpack.c.h.b16 %v629
        %v1223 = vunpack.c.l.b16 %v630
        %v1224 = vunpack.c.h.b16 %v630
        %v1225 = vunpack.c.l.b16 %v631
        %v1226 = vunpack.c.h.b16 %v631
        %v1227 = vunpack.c.l.b16 %v632
        %v1228 = vunpack.c.h.b16 %v632
        %v1229 = vunpack.c.l.b16 %v633
        %v1230 = vunpack.c.h.b16 %v633
        %v1231 = vunpack.c.l.b16 %v634
        %v1232 = vunpack.c.h.b16 %v634
        %v1233 = vunpack.c.l.b16 %v635
        %v1234 = vunpack.c.h.b16 %v635
        %v1235 = vunpack.c.l.b16 %v636
        %v1236 = vunpack.c.h.b16 %v636
        %v1237 = vunpack.c.l.b16 %v637
        %v1238 = vunpack.c.h.b16 %v637
        %v1239 = vunpack.c.l.b16 %v638
        %v1240 = vunpack.c.h.b16 %v638
        %v1241 = vunpack.c.l.b16 %v639
        %v1242 = vunpack.c.h.b16 %v639
        %v1243 = vunpack.c.l.b16 %v640
        %v1244 = vunpack.c.h.b16 %v640
        %v1245 = vunpack.c.l.b16 %v641
        %v1246 = vunpack.c.h.b16 %v641
        %v1247 = vunpack.c.l.b16 %v642
        %v1248 = vunpack.c.h.b16 %v642
        %v1249 = vunpack.c.l.b16 %v643
        %v1250 = vunpack.c.h.b16 %v643
        %v1251 = vunpack.c.l.b16 %v644
        %v1252 = vunpack.c.h.b16 %v644
        %v1253 = vunpack.c.l.b16 %v645
        %v1254 = vunpack.c.h.b16 %v645
        %v1255 = vunpack.c.l.b16 %v646
        %v1256 = vunpack.c.h.b16 %v646
        %v1257 = vpack.c.b16 %v869, %v865
        %v1258 = vpack.c.b16 %v870, %v866
        %v1259 = vpack.c.b16 %v871, %v867
        %v1260 = vpack.c.b16 %v872, %v868
        %v1261 = vpack.c.b16 %v877, %v873
        %v1262 = vpack.c.b16 %v878, %v874
        %v1263 = vpack.c.b16 %v879, %v875
        %v1264 = vpack.c.b16 %v880, %v876
        %v1265 = vpack.c.b16 %v885, %v881
        %v1266 = vpack.c.b16 %v886, %v882
        %v1267 = vpack.c.b16 %v887, %v883
        %v1268 = vpack.c.b16 %v888, %v884
        %v1269 = vpack.c.b16 %v893, %v889
        %v1270 = vpack.c.b16 %v894, %v890
        %v1271 = vpack.c.b16 %v895, %v891
        %v1272 = vpack.c.b16 %v896, %v892
        %v1273 = vpack.c.b16 %v901, %v897
        %v1274 = vpack.c.b16 %v902, %v898
        %v1275 = vpack.c.b16 %v903, %v899
        %v1276 = vpack.c.b16 %v904, %v900
        %v1277 = vpack.c.b16 %v909, %v905
        %v1278 = vpack.c.b16 %v910, %v906
        %v1279 = vpack.c.b16 %v911, %v907
        %v1280 = vpack.c.b16 %v912, %v908
        %v1281 = vpack.c.b16 %v917, %v913
        %v1282 = vpack.c.b16 %v918, %v914
        %v1283 = vpack.c.b16 %v919, %v915
        %v1284 = vpack.c.b16 %v920, %v916
        %v1285 = vpack.c.b16 %v925, %v921
        %v1286 = vpack.c.b16 %v926, %v922
        %v1287 = vpack.c.b16 %v927, %v923
        %v1288 = vpack.c.b16 %v928, %v924
        %v1289 = vpack.c.b16 %v933, %v929
        %v1290 = vpack.c.b16 %v934, %v930
        %v1291 = vpack.c.b16 %v935, %v931
        %v1292 = vpack.c.b16 %v936, %v932
        %v1293 = vpack.c.b16 %v941, %v937
        %v1294 = vpack.c.b16 %v942, %v938
        %v1295 = vpack.c.b16 %v943, %v939
        %v1296 = vpack.c.b16 %v944, %v940
        %v1297 = vpack.c.b16 %v949, %v945
        %v1298 = vpack.c.b16 %v950, %v946
        %v1299 = vpack.c.b16 %v951, %v947
        %v1300 = vpack.c.b16 %v952, %v948
        %v1301 = vpack.c.b16 %v957, %v953
        %v1302 = vpack.c.b16 %v958, %v954
        %v1303 = vpack.c.b16 %v959, %v955
        %v1304 = vpack.c.b16 %v960, %v956
        %v1305 = vpack.c.b16 %v965, %v961
        %v1306 = vpack.c.b16 %v966, %v962
        %v1307 = vpack.c.b16 %v967, %v963
        %v1308 = vpack.c.b16 %v968, %v964
        %v1309 = vpack.c.b16 %v973, %v969
        %v1310 = vpack.c.b16 %v974, %v970
        %v1311 = vpack.c.b16 %v975, %v971
        %v1312 = vpack.c.b16 %v976, %v972
        %v1313 = vpack.c.b16 %v981, %v977
        %v1314 = vpack.c.b16 %v982, %v978
        %v1315 = vpack.c.b16 %v983, %v979
        %v1316 = vpack.c.b16 %v984, %v980
        %v1317 = vpack.c.b16 %v989, %v985
        %v1318 = vpack.c.b16 %v990, %v986
        %v1319 = vpack.c.b16 %v991, %v987
        %v1320 = vpack.c.b16 %v992, %v988
        %v1321 = vpack.c.b16 %v997, %v993
        %v1322 = vpack.c.b16 %v998, %v994
        %v1323 = vpack.c.b16 %v999, %v995
        %v1324 = vpack.c.b16 %v1000, %v996
        %v1325 = vpack.c.b16 %v1005, %v1001
        %v1326 = vpack.c.b16 %v1006, %v1002
        %v1327 = vpack.c.b16 %v1007, %v1003
        %v1328 = vpack.c.b16 %v1008, %v1004
        %v1329 = vpack.c.b16 %v1013, %v1009
        %v1330 = vpack.c.b16 %v1014, %v1010
        %v1331 = vpack.c.b16 %v1015, %v1011
        %v1332 = vpack.c.b16 %v1016, %v1012
        %v1333 = vpack.c.b16 %v1021, %v1017
        %v1334 = vpack.c.b16 %v1022, %v1018
        %v1335 = vpack.c.b16 %v1023, %v1019
        %v1336 = vpack.c.b16 %v1024, %v1020
        %v1337 = vpack.c.b16 %v1029, %v1025
        %v1338 = vpack.c.b16 %v1030, %v1026
        %v1339 = vpack.c.b16 %v1031, %v1027
        %v1340 = vpack.c.b16 %v1032, %v1028
        %v1341 = vpack.c.b16 %v1037, %v1033
        %v1342 = vpack.c.b16 %v1038, %v1034
        %v1343 = vpack.c.b16 %v1039, %v1035
        %v1344 = vpack.c.b16 %v1040, %v1036
        %v1345 = vpack.c.b16 %v1045, %v1041
        %v1346 = vpack.c.b16 %v1046, %v1042
        %v1347 = vpack.c.b16 %v1047, %v1043
        %v1348 = vpack.c.b16 %v1048, %v1044
        %v1349 = vpack.c.b16 %v1053, %v1049
        %v1350 = vpack.c.b16 %v1054, %v1050
        %v1351 = vpack.c.b16 %v1055, %v1051
        %v1352 = vpack.c.b16 %v1056, %v1052
        %v1353 = vpack.c.b16 %v1061, %v1057
        %v1354 = vpack.c.b16 %v1062, %v1058
        %v1355 = vpack.c.b16 %v1063, %v1059
        %v1356 = vpack.c.b16 %v1064, %v1060
        %v1357 = vpack.c.b16 %v1069, %v1065
        %v1358 = vpack.c.b16 %v1070, %v1066
        %v1359 = vpack.c.b16 %v1071, %v1067
        %v1360 = vpack.c.b16 %v1072, %v1068
        %v1361 = vpack.c.b16 %v1077, %v1073
        %v1362 = vpack.c.b16 %v1078, %v1074
        %v1363 = vpack.c.b16 %v1079, %v1075
        %v1364 = vpack.c.b16 %v1080, %v1076
        %v1365 = vpack.c.b16 %v1085, %v1081
        %v1366 = vpack.c.b16 %v1086, %v1082
        %v1367 = vpack.c.b16 %v1087, %v1083
        %v1368 = vpack.c.b16 %v1088, %v1084
        %v1369 = vpack.c.b16 %v1093, %v1089
        %v1370 = vpack.c.b16 %v1094, %v1090
        %v1371 = vpack.c.b16 %v1095, %v1091
        %v1372 = vpack.c.b16 %v1096, %v1092
        %v1373 = vpack.c.b16 %v1101, %v1097
        %v1374 = vpack.c.b16 %v1102, %v1098
        %v1375 = vpack.c.b16 %v1103, %v1099
        %v1376 = vpack.c.b16 %v1104, %v1100
        %v1377 = vpack.c.b16 %v1109, %v1105
        %v1378 = vpack.c.b16 %v1110, %v1106
        %v1379 = vpack.c.b16 %v1111, %v1107
        %v1380 = vpack.c.b16 %v1112, %v1108
        %v1381 = vpack.c.b16 %v1117, %v1113
        %v1382 = vpack.c.b16 %v1118, %v1114
        %v1383 = vpack.c.b16 %v1119, %v1115
        %v1384 = vpack.c.b16 %v1120, %v1116
        %v1385 = vpack.c.b16 %v1125, %v1121
        %v1386 = vpack.c.b16 %v1126, %v1122
        %v1387 = vpack.c.b16 %v1127, %v1123
        %v1388 = vpack.c.b16 %v1128, %v1124
        %v1389 = vpack.c.b16 %v1133, %v1129
        %v1390 = vpack.c.b16 %v1134, %v1130
        %v1391 = vpack.c.b16 %v1135, %v1131
        %v1392 = vpack.c.b16 %v1136, %v1132
        %v1393 = vpack.c.b16 %v1141, %v1137
        %v1394 = vpack.c.b16 %v1142, %v1138
        %v1395 = vpack.c.b16 %v1143, %v1139
        %v1396 = vpack.c.b16 %v1144, %v1140
        %v1397 = vpack.c.b16 %v1149, %v1145
        %v1398 = vpack.c.b16 %v1150, %v1146
        %v1399 = vpack.c.b16 %v1151, %v1147
        %v1400 = vpack.c.b16 %v1152, %v1148
        %v1401 = vpack.c.b16 %v1157, %v1153
        %v1402 = vpack.c.b16 %v1158, %v1154
        %v1403 = vpack.c.b16 %v1159, %v1155
        %v1404 = vpack.c.b16 %v1160, %v1156
        %v1405 = vpack.c.b16 %v1165, %v1161
        %v1406 = vpack.c.b16 %v1166, %v1162
        %v1407 = vpack.c.b16 %v1167, %v1163
        %v1408 = vpack.c.b16 %v1168, %v1164
        %v1409 = vpack.c.b16 %v1173, %v1169
        %v1410 = vpack.c.b16 %v1174, %v1170
        %v1411 = vpack.c.b16 %v1175, %v1171
        %v1412 = vpack.c.b16 %v1176, %v1172
        %v1413 = vpack.c.b16 %v1181, %v1177
        %v1414 = vpack.c.b16 %v1182, %v1178
        %v1415 = vpack.c.b16 %v1183, %v1179
        %v1416 = vpack.c.b16 %v1184, %v1180
        %v1417 = vpack.c.b16 %v1189, %v1185
        %v1418 = vpack.c.b16 %v1190, %v1186
        %v1419 = vpack.c.b16 %v1191, %v1187
        %v1420 = vpack.c.b16 %v1192, %v1188
        %v1421 = vpack.c.b16 %v1197, %v1193
        %v1422 = vpack.c.b16 %v1198, %v1194
        %v1423 = vpack.c.b16 %v1199, %v1195
        %v1424 = vpack.c.b16 %v1200, %v1196
        %v1425 = vpack.c.b16 %v1205, %v1201
        %v1426 = vpack.c.b16 %v1206, %v1202
        %v1427 = vpack.c.b16 %v1207, %v1203
        %v1428 = vpack.c.b16 %v1208, %v1204
        %v1429 = vpack.c.b16 %v1213, %v1209
        %v1430 = vpack.c.b16 %v1214, %v1210
        %v1431 = vpack.c.b16 %v1215, %v1211
        %v1432 = vpack.c.b16 %v1216, %v1212
        %v1433 = vpack.c.b16 %v1221, %v1217
        %v1434 = vpack.c.b16 %v1222, %v1218
        %v1435 = vpack.c.b16 %v1223, %v1219
        %v1436 = vpack.c.b16 %v1224, %v1220
        %v1437 = vpack.c.b16 %v1229, %v1225
        %v1438 = vpack.c.b16 %v1230, %v1226
        %v1439 = vpack.c.b16 %v1231, %v1227
        %v1440 = vpack.c.b16 %v1232, %v1228
        %v1441 = vpack.c.b16 %v1237, %v1233
        %v1442 = vpack.c.b16 %v1238, %v1234
        %v1443 = vpack.c.b16 %v1239, %v1235
        %v1444 = vpack.c.b16 %v1240, %v1236
        %v1445 = vpack.c.b16 %v1245, %v1241
        %v1446 = vpack.c.b16 %v1246, %v1242
        %v1447 = vpack.c.b16 %v1247, %v1243
        %v1448 = vpack.c.b16 %v1248, %v1244
        %v1449 = vpack.c.b16 %v1253, %v1249
        %v1450 = vpack.c.b16 %v1254, %v1250
        %v1451 = vpack.c.b16 %v1255, %v1251
        %v1452 = vpack.c.b16 %v1256, %v1252
        %vm1649 = vcmask 130048
        %v1651 = vsel %vm1649, %v401, 0
        %v1654 = vsel %vm1649, %v408, 0
        %v1657 = vsel %vm1649, %v415, 0
        %v1660 = vsel %vm1649, %v422, 0
        %v1663 = vsel %vm1649, %v429, 0
        %v1666 = vsel %vm1649, %v436, 0
        %v1669 = vsel %vm1649, %v443, 0
        %v1672 = vsel %vm1649, %v450, 0
        %1674 = vmatprep.subr.bf16.mxu0 %v1286
        %1675 = vmatpush1.bf16.msra.mxu0 %v1285
        %1676 = vmatprep.subr.bf16.mxu0 %v1282
        %1677 = vmatpush1.bf16.msra.mxu0 %v1281
        %1678 = vmatprep.subr.bf16.mxu0 %v1278
        %1679 = vmatpush1.bf16.msra.mxu0 %v1277
        %1680 = vmatprep.subr.bf16.mxu0 %v1274
        %1681 = vmatpush1.bf16.msra.mxu0 %v1273
        %1682 = vmatprep.subr.bf16.mxu0 %v1270
        %1683 = vmatpush1.bf16.msra.mxu0 %v1269
        %1684 = vmatprep.subr.bf16.mxu0 %v1266
        %1685 = vmatpush1.bf16.msra.mxu0 %v1265
        %1686 = vmatprep.subr.bf16.mxu0 %v1262
        %1687 = vmatpush1.bf16.msra.mxu0 %v1261
        %1688 = vmatprep.subr.bf16.mxu0 %v1258
        %1689 = vmatpush1.bf16.msra.mxu0 %v1257
        %1690 = vmatprep.subr.bf16.mxu0 %v1318
        %1691 = vmatpush2.bf16.msra.mxu0 %v1317
        %1692 = vmatprep.subr.bf16.mxu0 %v1314
        %1693 = vmatpush2.bf16.msra.mxu0 %v1313
        %1694 = vmatprep.subr.bf16.mxu0 %v1310
        %1695 = vmatpush2.bf16.msra.mxu0 %v1309
        %1696 = vmatprep.subr.bf16.mxu0 %v1306
        %1697 = vmatpush2.bf16.msra.mxu0 %v1305
        %1698 = vmatprep.subr.bf16.mxu0 %v1302
        %1699 = vmatpush2.bf16.msra.mxu0 %v1301
        %1700 = vmatprep.subr.bf16.mxu0 %v1298
        %1701 = vmatpush2.bf16.msra.mxu0 %v1297
        %1702 = vmatprep.subr.bf16.mxu0 %v1294
        %1703 = vmatpush2.bf16.msra.mxu0 %v1293
        %1704 = vmatprep.subr.bf16.mxu0 %v1290
        %1705 = vmatpush2.bf16.msra.mxu0 %v1289
        %1706 = vmatprep.mubr.bf16.mxu0 %v396
        %1707 = vmatmul.mubr.bf16.gmra.mxu0 %v395
        %v1708 = vpop.f32.mrf.mxu0
        %v1709 = vadd.f32 %v652, %v1708
        %v1710 = vpop.f32.mrf.mxu0
        %v1711 = vadd.f32 %v656, %v1710
        %v1712 = vpop.f32.mrf.mxu0
        %v1713 = vadd.f32 %v652, %v1712
        %v1714 = vpop.f32.mrf.mxu0
        %v1715 = vadd.f32 %v656, %v1714
        %1716 = vmatprep.mubr.bf16.mxu0 %v403
        %1717 = vmatmul.mubr.bf16.gmra.mxu0 %v402
        %v1718 = vpop.f32.mrf.mxu0
        %v1719 = vadd.f32 %v652, %v1718
        %v1720 = vpop.f32.mrf.mxu0
        %v1721 = vadd.f32 %v656, %v1720
        %v1722 = vpop.f32.mrf.mxu0
        %v1723 = vadd.f32 %v652, %v1722
        %v1724 = vpop.f32.mrf.mxu0
        %v1725 = vadd.f32 %v656, %v1724
        %1726 = vmatprep.mubr.bf16.mxu0 %v410
        %1727 = vmatmul.mubr.bf16.gmra.mxu0 %v409
        %v1728 = vpop.f32.mrf.mxu0
        %v1729 = vadd.f32 %v652, %v1728
        %v1730 = vpop.f32.mrf.mxu0
        %v1731 = vadd.f32 %v656, %v1730
        %v1732 = vpop.f32.mrf.mxu0
        %v1733 = vadd.f32 %v652, %v1732
        %v1734 = vpop.f32.mrf.mxu0
        %v1735 = vadd.f32 %v656, %v1734
        %1736 = vmatprep.mubr.bf16.mxu0 %v417
        %1737 = vmatmul.mubr.bf16.gmra.mxu0 %v416
        %v1738 = vpop.f32.mrf.mxu0
        %v1739 = vadd.f32 %v652, %v1738
        %v1740 = vpop.f32.mrf.mxu0
        %v1741 = vadd.f32 %v656, %v1740
        %v1742 = vpop.f32.mrf.mxu0
        %v1743 = vadd.f32 %v652, %v1742
        %v1744 = vpop.f32.mrf.mxu0
        %v1745 = vadd.f32 %v656, %v1744
        %1746 = vmatprep.mubr.bf16.mxu0 %v424
        %1747 = vmatmul.mubr.bf16.gmra.mxu0 %v423
        %v1748 = vpop.f32.mrf.mxu0
        %v1749 = vadd.f32 %v652, %v1748
        %v1750 = vpop.f32.mrf.mxu0
        %v1751 = vadd.f32 %v656, %v1750
        %v1752 = vpop.f32.mrf.mxu0
        %v1753 = vadd.f32 %v652, %v1752
        %v1754 = vpop.f32.mrf.mxu0
        %v1755 = vadd.f32 %v656, %v1754
        %1756 = vmatprep.mubr.bf16.mxu0 %v431
        %1757 = vmatmul.mubr.bf16.gmra.mxu0 %v430
        %v1758 = vpop.f32.mrf.mxu0
        %v1759 = vadd.f32 %v652, %v1758
        %v1760 = vpop.f32.mrf.mxu0
        %v1761 = vadd.f32 %v656, %v1760
        %v1762 = vpop.f32.mrf.mxu0
        %v1763 = vadd.f32 %v652, %v1762
        %v1764 = vpop.f32.mrf.mxu0
        %v1765 = vadd.f32 %v656, %v1764
        %1766 = vmatprep.mubr.bf16.mxu0 %v438
        %1767 = vmatmul.mubr.bf16.gmra.mxu0 %v437
        %v1768 = vpop.f32.mrf.mxu0
        %v1769 = vadd.f32 %v652, %v1768
        %v1770 = vpop.f32.mrf.mxu0
        %v1771 = vadd.f32 %v656, %v1770
        %v1772 = vpop.f32.mrf.mxu0
        %v1773 = vadd.f32 %v652, %v1772
        %v1774 = vpop.f32.mrf.mxu0
        %v1775 = vadd.f32 %v656, %v1774
        %1776 = vmatprep.mubr.bf16.mxu0 %v445
        %1777 = vmatmul.mubr.bf16.gmra.mxu0 %v444
        %v1778 = vpop.f32.mrf.mxu0
        %v1779 = vadd.f32 %v652, %v1778
        %v1780 = vpop.f32.mrf.mxu0
        %v1781 = vadd.f32 %v656, %v1780
        %v1782 = vpop.f32.mrf.mxu0
        %v1783 = vadd.f32 %v652, %v1782
        %v1784 = vpop.f32.mrf.mxu0
        %v1785 = vadd.f32 %v656, %v1784
        %1786 = vdwg.mxu0
        %1787 = vmatprep.subr.bf16.mxu0 %v1350
        %1788 = vmatpush1.bf16.msra.mxu0 %v1349
        %1789 = vmatprep.subr.bf16.mxu0 %v1346
        %1790 = vmatpush1.bf16.msra.mxu0 %v1345
        %1791 = vmatprep.subr.bf16.mxu0 %v1342
        %1792 = vmatpush1.bf16.msra.mxu0 %v1341
        %1793 = vmatprep.subr.bf16.mxu0 %v1338
        %1794 = vmatpush1.bf16.msra.mxu0 %v1337
        %1795 = vmatprep.subr.bf16.mxu0 %v1334
        %1796 = vmatpush1.bf16.msra.mxu0 %v1333
        %1797 = vmatprep.subr.bf16.mxu0 %v1330
        %1798 = vmatpush1.bf16.msra.mxu0 %v1329
        %1799 = vmatprep.subr.bf16.mxu0 %v1326
        %1800 = vmatpush1.bf16.msra.mxu0 %v1325
        %1801 = vmatprep.subr.bf16.mxu0 %v1322
        %1802 = vmatpush1.bf16.msra.mxu0 %v1321
        %1803 = vmatprep.subr.bf16.mxu0 %v1382
        %1804 = vmatpush2.bf16.msra.mxu0 %v1381
        %1805 = vmatprep.subr.bf16.mxu0 %v1378
        %1806 = vmatpush2.bf16.msra.mxu0 %v1377
        %1807 = vmatprep.subr.bf16.mxu0 %v1374
        %1808 = vmatpush2.bf16.msra.mxu0 %v1373
        %1809 = vmatprep.subr.bf16.mxu0 %v1370
        %1810 = vmatpush2.bf16.msra.mxu0 %v1369
        %1811 = vmatprep.subr.bf16.mxu0 %v1366
        %1812 = vmatpush2.bf16.msra.mxu0 %v1365
        %1813 = vmatprep.subr.bf16.mxu0 %v1362
        %1814 = vmatpush2.bf16.msra.mxu0 %v1361
        %1815 = vmatprep.subr.bf16.mxu0 %v1358
        %1816 = vmatpush2.bf16.msra.mxu0 %v1357
        %1817 = vmatprep.subr.bf16.mxu0 %v1354
        %1818 = vmatpush2.bf16.msra.mxu0 %v1353
        %1819 = vmatprep.mubr.bf16.mxu0 %v398
        %1820 = vmatmul.mubr.bf16.gmra.mxu0 %v397
        %v1821 = vpop.f32.mrf.mxu0
        %v1822 = vadd.f32 %v1709, %v1821
        %v1823 = vpop.f32.mrf.mxu0
        %v1824 = vadd.f32 %v1711, %v1823
        %v1825 = vpop.f32.mrf.mxu0
        %v1826 = vadd.f32 %v1713, %v1825
        %v1827 = vpop.f32.mrf.mxu0
        %v1828 = vadd.f32 %v1715, %v1827
        %1829 = vmatprep.mubr.bf16.mxu0 %v405
        %1830 = vmatmul.mubr.bf16.gmra.mxu0 %v404
        %v1831 = vpop.f32.mrf.mxu0
        %v1832 = vadd.f32 %v1719, %v1831
        %v1833 = vpop.f32.mrf.mxu0
        %v1834 = vadd.f32 %v1721, %v1833
        %v1835 = vpop.f32.mrf.mxu0
        %v1836 = vadd.f32 %v1723, %v1835
        %v1837 = vpop.f32.mrf.mxu0
        %v1838 = vadd.f32 %v1725, %v1837
        %1839 = vmatprep.mubr.bf16.mxu0 %v412
        %1840 = vmatmul.mubr.bf16.gmra.mxu0 %v411
        %v1841 = vpop.f32.mrf.mxu0
        %v1842 = vadd.f32 %v1729, %v1841
        %v1843 = vpop.f32.mrf.mxu0
        %v1844 = vadd.f32 %v1731, %v1843
        %v1845 = vpop.f32.mrf.mxu0
        %v1846 = vadd.f32 %v1733, %v1845
        %v1847 = vpop.f32.mrf.mxu0
        %v1848 = vadd.f32 %v1735, %v1847
        %1849 = vmatprep.mubr.bf16.mxu0 %v419
        %1850 = vmatmul.mubr.bf16.gmra.mxu0 %v418
        %v1851 = vpop.f32.mrf.mxu0
        %v1852 = vadd.f32 %v1739, %v1851
        %v1853 = vpop.f32.mrf.mxu0
        %v1854 = vadd.f32 %v1741, %v1853
        %v1855 = vpop.f32.mrf.mxu0
        %v1856 = vadd.f32 %v1743, %v1855
        %v1857 = vpop.f32.mrf.mxu0
        %v1858 = vadd.f32 %v1745, %v1857
        %1859 = vmatprep.mubr.bf16.mxu0 %v426
        %1860 = vmatmul.mubr.bf16.gmra.mxu0 %v425
        %v1861 = vpop.f32.mrf.mxu0
        %v1862 = vadd.f32 %v1749, %v1861
        %v1863 = vpop.f32.mrf.mxu0
        %v1864 = vadd.f32 %v1751, %v1863
        %v1865 = vpop.f32.mrf.mxu0
        %v1866 = vadd.f32 %v1753, %v1865
        %v1867 = vpop.f32.mrf.mxu0
        %v1868 = vadd.f32 %v1755, %v1867
        %1869 = vmatprep.mubr.bf16.mxu0 %v433
        %1870 = vmatmul.mubr.bf16.gmra.mxu0 %v432
        %v1871 = vpop.f32.mrf.mxu0
        %v1872 = vadd.f32 %v1759, %v1871
        %v1873 = vpop.f32.mrf.mxu0
        %v1874 = vadd.f32 %v1761, %v1873
        %v1875 = vpop.f32.mrf.mxu0
        %v1876 = vadd.f32 %v1763, %v1875
        %v1877 = vpop.f32.mrf.mxu0
        %v1878 = vadd.f32 %v1765, %v1877
        %1879 = vmatprep.mubr.bf16.mxu0 %v440
        %1880 = vmatmul.mubr.bf16.gmra.mxu0 %v439
        %v1881 = vpop.f32.mrf.mxu0
        %v1882 = vadd.f32 %v1769, %v1881
        %v1883 = vpop.f32.mrf.mxu0
        %v1884 = vadd.f32 %v1771, %v1883
        %v1885 = vpop.f32.mrf.mxu0
        %v1886 = vadd.f32 %v1773, %v1885
        %v1887 = vpop.f32.mrf.mxu0
        %v1888 = vadd.f32 %v1775, %v1887
        %1889 = vmatprep.mubr.bf16.mxu0 %v447
        %1890 = vmatmul.mubr.bf16.gmra.mxu0 %v446
        %v1891 = vpop.f32.mrf.mxu0
        %v1892 = vadd.f32 %v1779, %v1891
        %v1893 = vpop.f32.mrf.mxu0
        %v1894 = vadd.f32 %v1781, %v1893
        %v1895 = vpop.f32.mrf.mxu0
        %v1896 = vadd.f32 %v1783, %v1895
        %v1897 = vpop.f32.mrf.mxu0
        %v1898 = vadd.f32 %v1785, %v1897
        %1899 = vdwg.mxu0
        %1900 = vmatprep.subr.bf16.mxu0 %v1414
        %1901 = vmatpush1.bf16.msra.mxu0 %v1413
        %1902 = vmatprep.subr.bf16.mxu0 %v1410
        %1903 = vmatpush1.bf16.msra.mxu0 %v1409
        %1904 = vmatprep.subr.bf16.mxu0 %v1406
        %1905 = vmatpush1.bf16.msra.mxu0 %v1405
        %1906 = vmatprep.subr.bf16.mxu0 %v1402
        %1907 = vmatpush1.bf16.msra.mxu0 %v1401
        %1908 = vmatprep.subr.bf16.mxu0 %v1398
        %1909 = vmatpush1.bf16.msra.mxu0 %v1397
        %1910 = vmatprep.subr.bf16.mxu0 %v1394
        %1911 = vmatpush1.bf16.msra.mxu0 %v1393
        %1912 = vmatprep.subr.bf16.mxu0 %v1390
        %1913 = vmatpush1.bf16.msra.mxu0 %v1389
        %1914 = vmatprep.subr.bf16.mxu0 %v1386
        %1915 = vmatpush1.bf16.msra.mxu0 %v1385
        %1916 = vmatprep.subr.bf16.mxu0 %v1446
        %1917 = vmatpush2.bf16.msra.mxu0 %v1445
        %1918 = vmatprep.subr.bf16.mxu0 %v1442
        %1919 = vmatpush2.bf16.msra.mxu0 %v1441
        %1920 = vmatprep.subr.bf16.mxu0 %v1438
        %1921 = vmatpush2.bf16.msra.mxu0 %v1437
        %1922 = vmatprep.subr.bf16.mxu0 %v1434
        %1923 = vmatpush2.bf16.msra.mxu0 %v1433
        %1924 = vmatprep.subr.bf16.mxu0 %v1430
        %1925 = vmatpush2.bf16.msra.mxu0 %v1429
        %1926 = vmatprep.subr.bf16.mxu0 %v1426
        %1927 = vmatpush2.bf16.msra.mxu0 %v1425
        %1928 = vmatprep.subr.bf16.mxu0 %v1422
        %1929 = vmatpush2.bf16.msra.mxu0 %v1421
        %1930 = vmatprep.subr.bf16.mxu0 %v1418
        %1931 = vmatpush2.bf16.msra.mxu0 %v1417
        %1932 = vmatprep.mubr.bf16.mxu0 %v400
        %1933 = vmatmul.mubr.bf16.gmra.mxu0 %v399
        %v1934 = vpop.f32.mrf.mxu0
        %v1935 = vadd.f32 %v1822, %v1934
        %v1936 = vpop.f32.mrf.mxu0
        %v1937 = vadd.f32 %v1824, %v1936
        %v1938 = vpop.f32.mrf.mxu0
        %v1939 = vadd.f32 %v1826, %v1938
        %v1940 = vpop.f32.mrf.mxu0
        %v1941 = vadd.f32 %v1828, %v1940
        %1942 = vmatprep.mubr.bf16.mxu0 %v407
        %1943 = vmatmul.mubr.bf16.gmra.mxu0 %v406
        %v1944 = vpop.f32.mrf.mxu0
        %v1945 = vadd.f32 %v1832, %v1944
        %v1946 = vpop.f32.mrf.mxu0
        %v1947 = vadd.f32 %v1834, %v1946
        %v1948 = vpop.f32.mrf.mxu0
        %v1949 = vadd.f32 %v1836, %v1948
        %v1950 = vpop.f32.mrf.mxu0
        %v1951 = vadd.f32 %v1838, %v1950
        %1952 = vmatprep.mubr.bf16.mxu0 %v414
        %1953 = vmatmul.mubr.bf16.gmra.mxu0 %v413
        %v1954 = vpop.f32.mrf.mxu0
        %v1955 = vadd.f32 %v1842, %v1954
        %v1956 = vpop.f32.mrf.mxu0
        %v1957 = vadd.f32 %v1844, %v1956
        %v1958 = vpop.f32.mrf.mxu0
        %v1959 = vadd.f32 %v1846, %v1958
        %v1960 = vpop.f32.mrf.mxu0
        %v1961 = vadd.f32 %v1848, %v1960
        %1962 = vmatprep.mubr.bf16.mxu0 %v421
        %1963 = vmatmul.mubr.bf16.gmra.mxu0 %v420
        %v1964 = vpop.f32.mrf.mxu0
        %v1965 = vadd.f32 %v1852, %v1964
        %v1966 = vpop.f32.mrf.mxu0
        %v1967 = vadd.f32 %v1854, %v1966
        %v1968 = vpop.f32.mrf.mxu0
        %v1969 = vadd.f32 %v1856, %v1968
        %v1970 = vpop.f32.mrf.mxu0
        %v1971 = vadd.f32 %v1858, %v1970
        %1972 = vmatprep.mubr.bf16.mxu0 %v428
        %1973 = vmatmul.mubr.bf16.gmra.mxu0 %v427
        %v1974 = vpop.f32.mrf.mxu0
        %v1975 = vadd.f32 %v1862, %v1974
        %v1976 = vpop.f32.mrf.mxu0
        %v1977 = vadd.f32 %v1864, %v1976
        %v1978 = vpop.f32.mrf.mxu0
        %v1979 = vadd.f32 %v1866, %v1978
        %v1980 = vpop.f32.mrf.mxu0
        %v1981 = vadd.f32 %v1868, %v1980
        %1982 = vmatprep.mubr.bf16.mxu0 %v435
        %1983 = vmatmul.mubr.bf16.gmra.mxu0 %v434
        %v1984 = vpop.f32.mrf.mxu0
        %v1985 = vadd.f32 %v1872, %v1984
        %v1986 = vpop.f32.mrf.mxu0
        %v1987 = vadd.f32 %v1874, %v1986
        %v1988 = vpop.f32.mrf.mxu0
        %v1989 = vadd.f32 %v1876, %v1988
        %v1990 = vpop.f32.mrf.mxu0
        %v1991 = vadd.f32 %v1878, %v1990
        %1992 = vmatprep.mubr.bf16.mxu0 %v442
        %1993 = vmatmul.mubr.bf16.gmra.mxu0 %v441
        %v1994 = vpop.f32.mrf.mxu0
        %v1995 = vadd.f32 %v1882, %v1994
        %v1996 = vpop.f32.mrf.mxu0
        %v1997 = vadd.f32 %v1884, %v1996
        %v1998 = vpop.f32.mrf.mxu0
        %v1999 = vadd.f32 %v1886, %v1998
        %v2000 = vpop.f32.mrf.mxu0
        %v2001 = vadd.f32 %v1888, %v2000
        %2002 = vmatprep.mubr.bf16.mxu0 %v449
        %2003 = vmatmul.mubr.bf16.gmra.mxu0 %v448
        %v2004 = vpop.f32.mrf.mxu0
        %v2005 = vadd.f32 %v1892, %v2004
        %v2006 = vpop.f32.mrf.mxu0
        %v2007 = vadd.f32 %v1894, %v2006
        %v2008 = vpop.f32.mrf.mxu0
        %v2009 = vadd.f32 %v1896, %v2008
        %v2010 = vpop.f32.mrf.mxu0
        %v2011 = vadd.f32 %v1898, %v2010
        %2012 = vdwg.mxu0
        %2013 = vmatprep.subr.bf16.mxu0 0
        %2014 = vmatpush1.bf16.msra.mxu0 0
        %2015 = vmatprep.subr.bf16.mxu0 0
        %2016 = vmatpush1.bf16.msra.mxu0 0
        %2017 = vmatprep.subr.bf16.mxu0 0
        %2018 = vmatpush1.bf16.msra.mxu0 0
        %2019 = vmatprep.subr.bf16.mxu0 0
        %2020 = vmatpush1.bf16.msra.mxu0 0
        %2021 = vmatprep.subr.bf16.mxu0 0
        %2022 = vmatpush1.bf16.msra.mxu0 0
        %2023 = vmatprep.subr.bf16.mxu0 0
        %2024 = vmatpush1.bf16.msra.mxu0 0
        %2025 = vmatprep.subr.bf16.mxu0 0
        %2026 = vmatpush1.bf16.msra.mxu0 0
        %2027 = vmatprep.subr.bf16.mxu0 %v1450
        %2028 = vmatpush1.bf16.msra.mxu0 %v1449
        %2029 = vmatprep.subr.bf16.mxu0 0
        %2030 = vmatpush2.bf16.msra.mxu0 0
        %2031 = vmatprep.subr.bf16.mxu0 0
        %2032 = vmatpush2.bf16.msra.mxu0 0
        %2033 = vmatprep.subr.bf16.mxu0 0
        %2034 = vmatpush2.bf16.msra.mxu0 0
        %2035 = vmatprep.subr.bf16.mxu0 0
        %2036 = vmatpush2.bf16.msra.mxu0 0
        %2037 = vmatprep.subr.bf16.mxu0 0
        %2038 = vmatpush2.bf16.msra.mxu0 0
        %2039 = vmatprep.subr.bf16.mxu0 0
        %2040 = vmatpush2.bf16.msra.mxu0 0
        %2041 = vmatprep.subr.bf16.mxu0 0
        %2042 = vmatpush2.bf16.msra.mxu0 0
        %2043 = vmatprep.subr.bf16.mxu0 0
        %2044 = vmatpush2.bf16.msra.mxu0 0
        %2045 = vmatprep.mubr.bf16.mxu0 0
        %2046 = vmatmul.mubr.bf16.gmra.mxu0 %v1651
        %v2047 = vpop.f32.mrf.mxu0
        %v2048 = vadd.f32 %v1935, %v2047
        %v2049 = vpop.f32.mrf.mxu0
        %v2050 = vadd.f32 %v1937, %v2049
        %v2051 = vpop.f32.mrf.mxu0
        %v2052 = vadd.f32 %v1939, %v2051
        %v2053 = vpop.f32.mrf.mxu0
        %v2054 = vadd.f32 %v1941, %v2053
        %2055 = vmatprep.mubr.bf16.mxu0 0
        %2056 = vmatmul.mubr.bf16.gmra.mxu0 %v1654
        %v2057 = vpop.f32.mrf.mxu0
        %v2058 = vadd.f32 %v1945, %v2057
        %v2059 = vpop.f32.mrf.mxu0
        %v2060 = vadd.f32 %v1947, %v2059
        %v2061 = vpop.f32.mrf.mxu0
        %v2062 = vadd.f32 %v1949, %v2061
        %v2063 = vpop.f32.mrf.mxu0
        %v2064 = vadd.f32 %v1951, %v2063
        %2065 = vmatprep.mubr.bf16.mxu0 0
        %2066 = vmatmul.mubr.bf16.gmra.mxu0 %v1657
        %v2067 = vpop.f32.mrf.mxu0
        %v2068 = vadd.f32 %v1955, %v2067
        %v2069 = vpop.f32.mrf.mxu0
        %v2070 = vadd.f32 %v1957, %v2069
        %v2071 = vpop.f32.mrf.mxu0
        %v2072 = vadd.f32 %v1959, %v2071
        %v2073 = vpop.f32.mrf.mxu0
        %v2074 = vadd.f32 %v1961, %v2073
        %2075 = vmatprep.mubr.bf16.mxu0 0
        %2076 = vmatmul.mubr.bf16.gmra.mxu0 %v1660
        %v2077 = vpop.f32.mrf.mxu0
        %v2078 = vadd.f32 %v1965, %v2077
        %v2079 = vpop.f32.mrf.mxu0
        %v2080 = vadd.f32 %v1967, %v2079
        %v2081 = vpop.f32.mrf.mxu0
        %v2082 = vadd.f32 %v1969, %v2081
        %v2083 = vpop.f32.mrf.mxu0
        %v2084 = vadd.f32 %v1971, %v2083
        %2085 = vmatprep.mubr.bf16.mxu0 0
        %2086 = vmatmul.mubr.bf16.gmra.mxu0 %v1663
        %v2087 = vpop.f32.mrf.mxu0
        %v2088 = vadd.f32 %v1975, %v2087
        %v2089 = vpop.f32.mrf.mxu0
        %v2090 = vadd.f32 %v1977, %v2089
        %v2091 = vpop.f32.mrf.mxu0
        %v2092 = vadd.f32 %v1979, %v2091
        %v2093 = vpop.f32.mrf.mxu0
        %v2094 = vadd.f32 %v1981, %v2093
        %2095 = vmatprep.mubr.bf16.mxu0 0
        %2096 = vmatmul.mubr.bf16.gmra.mxu0 %v1666
        %v2097 = vpop.f32.mrf.mxu0
        %v2098 = vadd.f32 %v1985, %v2097
        %v2099 = vpop.f32.mrf.mxu0
        %v2100 = vadd.f32 %v1987, %v2099
        %v2101 = vpop.f32.mrf.mxu0
        %v2102 = vadd.f32 %v1989, %v2101
        %v2103 = vpop.f32.mrf.mxu0
        %v2104 = vadd.f32 %v1991, %v2103
        %2105 = vmatprep.mubr.bf16.mxu0 0
        %2106 = vmatmul.mubr.bf16.gmra.mxu0 %v1669
        %v2107 = vpop.f32.mrf.mxu0
        %v2108 = vadd.f32 %v1995, %v2107
        %v2109 = vpop.f32.mrf.mxu0
        %v2110 = vadd.f32 %v1997, %v2109
        %v2111 = vpop.f32.mrf.mxu0
        %v2112 = vadd.f32 %v1999, %v2111
        %v2113 = vpop.f32.mrf.mxu0
        %v2114 = vadd.f32 %v2001, %v2113
        %2115 = vmatprep.mubr.bf16.mxu0 0
        %2116 = vmatmul.mubr.bf16.gmra.mxu0 %v1672
        %v2117 = vpop.f32.mrf.mxu0
        %v2118 = vadd.f32 %v2005, %v2117
        %v2119 = vpop.f32.mrf.mxu0
        %v2120 = vadd.f32 %v2007, %v2119
        %v2121 = vpop.f32.mrf.mxu0
        %v2122 = vadd.f32 %v2009, %v2121
        %v2123 = vpop.f32.mrf.mxu0
        %v2124 = vadd.f32 %v2011, %v2123
        %2125 = vdwg.mxu0
        %2126 = vmatprep.subr.bf16.mxu0 %v1288
        %2127 = vmatpush1.bf16.msra.mxu0 %v1287
        %2128 = vmatprep.subr.bf16.mxu0 %v1284
        %2129 = vmatpush1.bf16.msra.mxu0 %v1283
        %2130 = vmatprep.subr.bf16.mxu0 %v1280
        %2131 = vmatpush1.bf16.msra.mxu0 %v1279
        %2132 = vmatprep.subr.bf16.mxu0 %v1276
        %2133 = vmatpush1.bf16.msra.mxu0 %v1275
        %2134 = vmatprep.subr.bf16.mxu0 %v1272
        %2135 = vmatpush1.bf16.msra.mxu0 %v1271
        %2136 = vmatprep.subr.bf16.mxu0 %v1268
        %2137 = vmatpush1.bf16.msra.mxu0 %v1267
        %2138 = vmatprep.subr.bf16.mxu0 %v1264
        %2139 = vmatpush1.bf16.msra.mxu0 %v1263
        %2140 = vmatprep.subr.bf16.mxu0 %v1260
        %2141 = vmatpush1.bf16.msra.mxu0 %v1259
        %2142 = vmatprep.subr.bf16.mxu0 %v1320
        %2143 = vmatpush2.bf16.msra.mxu0 %v1319
        %2144 = vmatprep.subr.bf16.mxu0 %v1316
        %2145 = vmatpush2.bf16.msra.mxu0 %v1315
        %2146 = vmatprep.subr.bf16.mxu0 %v1312
        %2147 = vmatpush2.bf16.msra.mxu0 %v1311
        %2148 = vmatprep.subr.bf16.mxu0 %v1308
        %2149 = vmatpush2.bf16.msra.mxu0 %v1307
        %2150 = vmatprep.subr.bf16.mxu0 %v1304
        %2151 = vmatpush2.bf16.msra.mxu0 %v1303
        %2152 = vmatprep.subr.bf16.mxu0 %v1300
        %2153 = vmatpush2.bf16.msra.mxu0 %v1299
        %2154 = vmatprep.subr.bf16.mxu0 %v1296
        %2155 = vmatpush2.bf16.msra.mxu0 %v1295
        %2156 = vmatprep.subr.bf16.mxu0 %v1292
        %2157 = vmatpush2.bf16.msra.mxu0 %v1291
        %2158 = vmatprep.mubr.bf16.mxu0 %v396
        %2159 = vmatmul.mubr.bf16.gmra.mxu0 %v395
        %v2160 = vpop.f32.mrf.mxu0
        %v2161 = vadd.f32 %v660, %v2160
        %v2162 = vpop.f32.mrf.mxu0
        %v2163 = vadd.f32 %v664, %v2162
        %v2164 = vpop.f32.mrf.mxu0
        %v2165 = vadd.f32 %v660, %v2164
        %v2166 = vpop.f32.mrf.mxu0
        %v2167 = vadd.f32 %v664, %v2166
        %2168 = vmatprep.mubr.bf16.mxu0 %v403
        %2169 = vmatmul.mubr.bf16.gmra.mxu0 %v402
        %v2170 = vpop.f32.mrf.mxu0
        %v2171 = vadd.f32 %v660, %v2170
        %v2172 = vpop.f32.mrf.mxu0
        %v2173 = vadd.f32 %v664, %v2172
        %v2174 = vpop.f32.mrf.mxu0
        %v2175 = vadd.f32 %v660, %v2174
        %v2176 = vpop.f32.mrf.mxu0
        %v2177 = vadd.f32 %v664, %v2176
        %2178 = vmatprep.mubr.bf16.mxu0 %v410
        %2179 = vmatmul.mubr.bf16.gmra.mxu0 %v409
        %v2180 = vpop.f32.mrf.mxu0
        %v2181 = vadd.f32 %v660, %v2180
        %v2182 = vpop.f32.mrf.mxu0
        %v2183 = vadd.f32 %v664, %v2182
        %v2184 = vpop.f32.mrf.mxu0
        %v2185 = vadd.f32 %v660, %v2184
        %v2186 = vpop.f32.mrf.mxu0
        %v2187 = vadd.f32 %v664, %v2186
        %2188 = vmatprep.mubr.bf16.mxu0 %v417
        %2189 = vmatmul.mubr.bf16.gmra.mxu0 %v416
        %v2190 = vpop.f32.mrf.mxu0
        %v2191 = vadd.f32 %v660, %v2190
        %v2192 = vpop.f32.mrf.mxu0
        %v2193 = vadd.f32 %v664, %v2192
        %v2194 = vpop.f32.mrf.mxu0
        %v2195 = vadd.f32 %v660, %v2194
        %v2196 = vpop.f32.mrf.mxu0
        %v2197 = vadd.f32 %v664, %v2196
        %2198 = vmatprep.mubr.bf16.mxu0 %v424
        %2199 = vmatmul.mubr.bf16.gmra.mxu0 %v423
        %v2200 = vpop.f32.mrf.mxu0
        %v2201 = vadd.f32 %v660, %v2200
        %v2202 = vpop.f32.mrf.mxu0
        %v2203 = vadd.f32 %v664, %v2202
        %v2204 = vpop.f32.mrf.mxu0
        %v2205 = vadd.f32 %v660, %v2204
        %v2206 = vpop.f32.mrf.mxu0
        %v2207 = vadd.f32 %v664, %v2206
        %2208 = vmatprep.mubr.bf16.mxu0 %v431
        %2209 = vmatmul.mubr.bf16.gmra.mxu0 %v430
        %v2210 = vpop.f32.mrf.mxu0
        %v2211 = vadd.f32 %v660, %v2210
        %v2212 = vpop.f32.mrf.mxu0
        %v2213 = vadd.f32 %v664, %v2212
        %v2214 = vpop.f32.mrf.mxu0
        %v2215 = vadd.f32 %v660, %v2214
        %v2216 = vpop.f32.mrf.mxu0
        %v2217 = vadd.f32 %v664, %v2216
        %2218 = vmatprep.mubr.bf16.mxu0 %v438
        %2219 = vmatmul.mubr.bf16.gmra.mxu0 %v437
        %v2220 = vpop.f32.mrf.mxu0
        %v2221 = vadd.f32 %v660, %v2220
        %v2222 = vpop.f32.mrf.mxu0
        %v2223 = vadd.f32 %v664, %v2222
        %v2224 = vpop.f32.mrf.mxu0
        %v2225 = vadd.f32 %v660, %v2224
        %v2226 = vpop.f32.mrf.mxu0
        %v2227 = vadd.f32 %v664, %v2226
        %2228 = vmatprep.mubr.bf16.mxu0 %v445
        %2229 = vmatmul.mubr.bf16.gmra.mxu0 %v444
        %v2230 = vpop.f32.mrf.mxu0
        %v2231 = vadd.f32 %v660, %v2230
        %v2232 = vpop.f32.mrf.mxu0
        %v2233 = vadd.f32 %v664, %v2232
        %v2234 = vpop.f32.mrf.mxu0
        %v2235 = vadd.f32 %v660, %v2234
        %v2236 = vpop.f32.mrf.mxu0
        %v2237 = vadd.f32 %v664, %v2236
        %2238 = vdwg.mxu0
        %2239 = vmatprep.subr.bf16.mxu0 %v1352
        %2240 = vmatpush1.bf16.msra.mxu0 %v1351
        %2241 = vmatprep.subr.bf16.mxu0 %v1348
        %2242 = vmatpush1.bf16.msra.mxu0 %v1347
        %2243 = vmatprep.subr.bf16.mxu0 %v1344
        %2244 = vmatpush1.bf16.msra.mxu0 %v1343
        %2245 = vmatprep.subr.bf16.mxu0 %v1340
        %2246 = vmatpush1.bf16.msra.mxu0 %v1339
        %2247 = vmatprep.subr.bf16.mxu0 %v1336
        %2248 = vmatpush1.bf16.msra.mxu0 %v1335
        %2249 = vmatprep.subr.bf16.mxu0 %v1332
        %2250 = vmatpush1.bf16.msra.mxu0 %v1331
        %2251 = vmatprep.subr.bf16.mxu0 %v1328
        %2252 = vmatpush1.bf16.msra.mxu0 %v1327
        %2253 = vmatprep.subr.bf16.mxu0 %v1324
        %2254 = vmatpush1.bf16.msra.mxu0 %v1323
        %2255 = vmatprep.subr.bf16.mxu0 %v1384
        %2256 = vmatpush2.bf16.msra.mxu0 %v1383
        %2257 = vmatprep.subr.bf16.mxu0 %v1380
        %2258 = vmatpush2.bf16.msra.mxu0 %v1379
        %2259 = vmatprep.subr.bf16.mxu0 %v1376
        %2260 = vmatpush2.bf16.msra.mxu0 %v1375
        %2261 = vmatprep.subr.bf16.mxu0 %v1372
        %2262 = vmatpush2.bf16.msra.mxu0 %v1371
        %2263 = vmatprep.subr.bf16.mxu0 %v1368
        %2264 = vmatpush2.bf16.msra.mxu0 %v1367
        %2265 = vmatprep.subr.bf16.mxu0 %v1364
        %2266 = vmatpush2.bf16.msra.mxu0 %v1363
        %2267 = vmatprep.subr.bf16.mxu0 %v1360
        %2268 = vmatpush2.bf16.msra.mxu0 %v1359
        %2269 = vmatprep.subr.bf16.mxu0 %v1356
        %2270 = vmatpush2.bf16.msra.mxu0 %v1355
        %2271 = vmatprep.mubr.bf16.mxu0 %v398
        %2272 = vmatmul.mubr.bf16.gmra.mxu0 %v397
        %v2273 = vpop.f32.mrf.mxu0
        %v2274 = vadd.f32 %v2161, %v2273
        %v2275 = vpop.f32.mrf.mxu0
        %v2276 = vadd.f32 %v2163, %v2275
        %v2277 = vpop.f32.mrf.mxu0
        %v2278 = vadd.f32 %v2165, %v2277
        %v2279 = vpop.f32.mrf.mxu0
        %v2280 = vadd.f32 %v2167, %v2279
        %2281 = vmatprep.mubr.bf16.mxu0 %v405
        %2282 = vmatmul.mubr.bf16.gmra.mxu0 %v404
        %v2283 = vpop.f32.mrf.mxu0
        %v2284 = vadd.f32 %v2171, %v2283
        %v2285 = vpop.f32.mrf.mxu0
        %v2286 = vadd.f32 %v2173, %v2285
        %v2287 = vpop.f32.mrf.mxu0
        %v2288 = vadd.f32 %v2175, %v2287
        %v2289 = vpop.f32.mrf.mxu0
        %v2290 = vadd.f32 %v2177, %v2289
        %2291 = vmatprep.mubr.bf16.mxu0 %v412
        %2292 = vmatmul.mubr.bf16.gmra.mxu0 %v411
        %v2293 = vpop.f32.mrf.mxu0
        %v2294 = vadd.f32 %v2181, %v2293
        %v2295 = vpop.f32.mrf.mxu0
        %v2296 = vadd.f32 %v2183, %v2295
        %v2297 = vpop.f32.mrf.mxu0
        %v2298 = vadd.f32 %v2185, %v2297
        %v2299 = vpop.f32.mrf.mxu0
        %v2300 = vadd.f32 %v2187, %v2299
        %2301 = vmatprep.mubr.bf16.mxu0 %v419
        %2302 = vmatmul.mubr.bf16.gmra.mxu0 %v418
        %v2303 = vpop.f32.mrf.mxu0
        %v2304 = vadd.f32 %v2191, %v2303
        %v2305 = vpop.f32.mrf.mxu0
        %v2306 = vadd.f32 %v2193, %v2305
        %v2307 = vpop.f32.mrf.mxu0
        %v2308 = vadd.f32 %v2195, %v2307
        %v2309 = vpop.f32.mrf.mxu0
        %v2310 = vadd.f32 %v2197, %v2309
        %2311 = vmatprep.mubr.bf16.mxu0 %v426
        %2312 = vmatmul.mubr.bf16.gmra.mxu0 %v425
        %v2313 = vpop.f32.mrf.mxu0
        %v2314 = vadd.f32 %v2201, %v2313
        %v2315 = vpop.f32.mrf.mxu0
        %v2316 = vadd.f32 %v2203, %v2315
        %v2317 = vpop.f32.mrf.mxu0
        %v2318 = vadd.f32 %v2205, %v2317
        %v2319 = vpop.f32.mrf.mxu0
        %v2320 = vadd.f32 %v2207, %v2319
        %2321 = vmatprep.mubr.bf16.mxu0 %v433
        %2322 = vmatmul.mubr.bf16.gmra.mxu0 %v432
        %v2323 = vpop.f32.mrf.mxu0
        %v2324 = vadd.f32 %v2211, %v2323
        %v2325 = vpop.f32.mrf.mxu0
        %v2326 = vadd.f32 %v2213, %v2325
        %v2327 = vpop.f32.mrf.mxu0
        %v2328 = vadd.f32 %v2215, %v2327
        %v2329 = vpop.f32.mrf.mxu0
        %v2330 = vadd.f32 %v2217, %v2329
        %2331 = vmatprep.mubr.bf16.mxu0 %v440
        %2332 = vmatmul.mubr.bf16.gmra.mxu0 %v439
        %v2333 = vpop.f32.mrf.mxu0
        %v2334 = vadd.f32 %v2221, %v2333
        %v2335 = vpop.f32.mrf.mxu0
        %v2336 = vadd.f32 %v2223, %v2335
        %v2337 = vpop.f32.mrf.mxu0
        %v2338 = vadd.f32 %v2225, %v2337
        %v2339 = vpop.f32.mrf.mxu0
        %v2340 = vadd.f32 %v2227, %v2339
        %2341 = vmatprep.mubr.bf16.mxu0 %v447
        %2342 = vmatmul.mubr.bf16.gmra.mxu0 %v446
        %v2343 = vpop.f32.mrf.mxu0
        %v2344 = vadd.f32 %v2231, %v2343
        %v2345 = vpop.f32.mrf.mxu0
        %v2346 = vadd.f32 %v2233, %v2345
        %v2347 = vpop.f32.mrf.mxu0
        %v2348 = vadd.f32 %v2235, %v2347
        %v2349 = vpop.f32.mrf.mxu0
        %v2350 = vadd.f32 %v2237, %v2349
        %2351 = vdwg.mxu0
        %2352 = vmatprep.subr.bf16.mxu0 %v1416
        %2353 = vmatpush1.bf16.msra.mxu0 %v1415
        %2354 = vmatprep.subr.bf16.mxu0 %v1412
        %2355 = vmatpush1.bf16.msra.mxu0 %v1411
        %2356 = vmatprep.subr.bf16.mxu0 %v1408
        %2357 = vmatpush1.bf16.msra.mxu0 %v1407
        %2358 = vmatprep.subr.bf16.mxu0 %v1404
        %2359 = vmatpush1.bf16.msra.mxu0 %v1403
        %2360 = vmatprep.subr.bf16.mxu0 %v1400
        %2361 = vmatpush1.bf16.msra.mxu0 %v1399
        %2362 = vmatprep.subr.bf16.mxu0 %v1396
        %2363 = vmatpush1.bf16.msra.mxu0 %v1395
        %2364 = vmatprep.subr.bf16.mxu0 %v1392
        %2365 = vmatpush1.bf16.msra.mxu0 %v1391
        %2366 = vmatprep.subr.bf16.mxu0 %v1388
        %2367 = vmatpush1.bf16.msra.mxu0 %v1387
        %2368 = vmatprep.subr.bf16.mxu0 %v1448
        %2369 = vmatpush2.bf16.msra.mxu0 %v1447
        %2370 = vmatprep.subr.bf16.mxu0 %v1444
        %2371 = vmatpush2.bf16.msra.mxu0 %v1443
        %2372 = vmatprep.subr.bf16.mxu0 %v1440
        %2373 = vmatpush2.bf16.msra.mxu0 %v1439
        %2374 = vmatprep.subr.bf16.mxu0 %v1436
        %2375 = vmatpush2.bf16.msra.mxu0 %v1435
        %2376 = vmatprep.subr.bf16.mxu0 %v1432
        %2377 = vmatpush2.bf16.msra.mxu0 %v1431
        %2378 = vmatprep.subr.bf16.mxu0 %v1428
        %2379 = vmatpush2.bf16.msra.mxu0 %v1427
        %2380 = vmatprep.subr.bf16.mxu0 %v1424
        %2381 = vmatpush2.bf16.msra.mxu0 %v1423
        %2382 = vmatprep.subr.bf16.mxu0 %v1420
        %2383 = vmatpush2.bf16.msra.mxu0 %v1419
        %2384 = vmatprep.mubr.bf16.mxu0 %v400
        %2385 = vmatmul.mubr.bf16.gmra.mxu0 %v399
        %v2386 = vpop.f32.mrf.mxu0
        %v2387 = vadd.f32 %v2274, %v2386
        %v2388 = vpop.f32.mrf.mxu0
        %v2389 = vadd.f32 %v2276, %v2388
        %v2390 = vpop.f32.mrf.mxu0
        %v2391 = vadd.f32 %v2278, %v2390
        %v2392 = vpop.f32.mrf.mxu0
        %v2393 = vadd.f32 %v2280, %v2392
        %2394 = vmatprep.mubr.bf16.mxu0 %v407
        %2395 = vmatmul.mubr.bf16.gmra.mxu0 %v406
        %v2396 = vpop.f32.mrf.mxu0
        %v2397 = vadd.f32 %v2284, %v2396
        %v2398 = vpop.f32.mrf.mxu0
        %v2399 = vadd.f32 %v2286, %v2398
        %v2400 = vpop.f32.mrf.mxu0
        %v2401 = vadd.f32 %v2288, %v2400
        %v2402 = vpop.f32.mrf.mxu0
        %v2403 = vadd.f32 %v2290, %v2402
        %2404 = vmatprep.mubr.bf16.mxu0 %v414
        %2405 = vmatmul.mubr.bf16.gmra.mxu0 %v413
        %v2406 = vpop.f32.mrf.mxu0
        %v2407 = vadd.f32 %v2294, %v2406
        %v2408 = vpop.f32.mrf.mxu0
        %v2409 = vadd.f32 %v2296, %v2408
        %v2410 = vpop.f32.mrf.mxu0
        %v2411 = vadd.f32 %v2298, %v2410
        %v2412 = vpop.f32.mrf.mxu0
        %v2413 = vadd.f32 %v2300, %v2412
        %2414 = vmatprep.mubr.bf16.mxu0 %v421
        %2415 = vmatmul.mubr.bf16.gmra.mxu0 %v420
        %v2416 = vpop.f32.mrf.mxu0
        %v2417 = vadd.f32 %v2304, %v2416
        %v2418 = vpop.f32.mrf.mxu0
        %v2419 = vadd.f32 %v2306, %v2418
        %v2420 = vpop.f32.mrf.mxu0
        %v2421 = vadd.f32 %v2308, %v2420
        %v2422 = vpop.f32.mrf.mxu0
        %v2423 = vadd.f32 %v2310, %v2422
        %2424 = vmatprep.mubr.bf16.mxu0 %v428
        %2425 = vmatmul.mubr.bf16.gmra.mxu0 %v427
        %v2426 = vpop.f32.mrf.mxu0
        %v2427 = vadd.f32 %v2314, %v2426
        %v2428 = vpop.f32.mrf.mxu0
        %v2429 = vadd.f32 %v2316, %v2428
        %v2430 = vpop.f32.mrf.mxu0
        %v2431 = vadd.f32 %v2318, %v2430
        %v2432 = vpop.f32.mrf.mxu0
        %v2433 = vadd.f32 %v2320, %v2432
        %2434 = vmatprep.mubr.bf16.mxu0 %v435
        %2435 = vmatmul.mubr.bf16.gmra.mxu0 %v434
        %v2436 = vpop.f32.mrf.mxu0
        %v2437 = vadd.f32 %v2324, %v2436
        %v2438 = vpop.f32.mrf.mxu0
        %v2439 = vadd.f32 %v2326, %v2438
        %v2440 = vpop.f32.mrf.mxu0
        %v2441 = vadd.f32 %v2328, %v2440
        %v2442 = vpop.f32.mrf.mxu0
        %v2443 = vadd.f32 %v2330, %v2442
        %2444 = vmatprep.mubr.bf16.mxu0 %v442
        %2445 = vmatmul.mubr.bf16.gmra.mxu0 %v441
        %v2446 = vpop.f32.mrf.mxu0
        %v2447 = vadd.f32 %v2334, %v2446
        %v2448 = vpop.f32.mrf.mxu0
        %v2449 = vadd.f32 %v2336, %v2448
        %v2450 = vpop.f32.mrf.mxu0
        %v2451 = vadd.f32 %v2338, %v2450
        %v2452 = vpop.f32.mrf.mxu0
        %v2453 = vadd.f32 %v2340, %v2452
        %2454 = vmatprep.mubr.bf16.mxu0 %v449
        %2455 = vmatmul.mubr.bf16.gmra.mxu0 %v448
        %v2456 = vpop.f32.mrf.mxu0
        %v2457 = vadd.f32 %v2344, %v2456
        %v2458 = vpop.f32.mrf.mxu0
        %v2459 = vadd.f32 %v2346, %v2458
        %v2460 = vpop.f32.mrf.mxu0
        %v2461 = vadd.f32 %v2348, %v2460
        %v2462 = vpop.f32.mrf.mxu0
        %v2463 = vadd.f32 %v2350, %v2462
        %2464 = vdwg.mxu0
        %2465 = vmatprep.subr.bf16.mxu0 0
        %2466 = vmatpush1.bf16.msra.mxu0 0
        %2467 = vmatprep.subr.bf16.mxu0 0
        %2468 = vmatpush1.bf16.msra.mxu0 0
        %2469 = vmatprep.subr.bf16.mxu0 0
        %2470 = vmatpush1.bf16.msra.mxu0 0
        %2471 = vmatprep.subr.bf16.mxu0 0
        %2472 = vmatpush1.bf16.msra.mxu0 0
        %2473 = vmatprep.subr.bf16.mxu0 0
        %2474 = vmatpush1.bf16.msra.mxu0 0
        %2475 = vmatprep.subr.bf16.mxu0 0
        %2476 = vmatpush1.bf16.msra.mxu0 0
        %2477 = vmatprep.subr.bf16.mxu0 0
        %2478 = vmatpush1.bf16.msra.mxu0 0
        %2479 = vmatprep.subr.bf16.mxu0 %v1452
        %2480 = vmatpush1.bf16.msra.mxu0 %v1451
        %2481 = vmatprep.subr.bf16.mxu0 0
        %2482 = vmatpush2.bf16.msra.mxu0 0
        %2483 = vmatprep.subr.bf16.mxu0 0
        %2484 = vmatpush2.bf16.msra.mxu0 0
        %2485 = vmatprep.subr.bf16.mxu0 0
        %2486 = vmatpush2.bf16.msra.mxu0 0
        %2487 = vmatprep.subr.bf16.mxu0 0
        %2488 = vmatpush2.bf16.msra.mxu0 0
        %2489 = vmatprep.subr.bf16.mxu0 0
        %2490 = vmatpush2.bf16.msra.mxu0 0
        %2491 = vmatprep.subr.bf16.mxu0 0
        %2492 = vmatpush2.bf16.msra.mxu0 0
        %2493 = vmatprep.subr.bf16.mxu0 0
        %2494 = vmatpush2.bf16.msra.mxu0 0
        %2495 = vmatprep.subr.bf16.mxu0 0
        %2496 = vmatpush2.bf16.msra.mxu0 0
        %2497 = vmatprep.mubr.bf16.mxu0 0
        %2498 = vmatmul.mubr.bf16.gmra.mxu0 %v1651
        %v2499 = vpop.f32.mrf.mxu0
        %v2500 = vadd.f32 %v2387, %v2499
        %v2501 = vpop.f32.mrf.mxu0
        %v2502 = vadd.f32 %v2389, %v2501
        %v2503 = vpop.f32.mrf.mxu0
        %v2504 = vadd.f32 %v2391, %v2503
        %v2505 = vpop.f32.mrf.mxu0
        %v2506 = vadd.f32 %v2393, %v2505
        %2507 = vmatprep.mubr.bf16.mxu0 0
        %2508 = vmatmul.mubr.bf16.gmra.mxu0 %v1654
        %v2509 = vpop.f32.mrf.mxu0
        %v2510 = vadd.f32 %v2397, %v2509
        %v2511 = vpop.f32.mrf.mxu0
        %v2512 = vadd.f32 %v2399, %v2511
        %v2513 = vpop.f32.mrf.mxu0
        %v2514 = vadd.f32 %v2401, %v2513
        %v2515 = vpop.f32.mrf.mxu0
        %v2516 = vadd.f32 %v2403, %v2515
        %2517 = vmatprep.mubr.bf16.mxu0 0
        %2518 = vmatmul.mubr.bf16.gmra.mxu0 %v1657
        %v2519 = vpop.f32.mrf.mxu0
        %v2520 = vadd.f32 %v2407, %v2519
        %v2521 = vpop.f32.mrf.mxu0
        %v2522 = vadd.f32 %v2409, %v2521
        %v2523 = vpop.f32.mrf.mxu0
        %v2524 = vadd.f32 %v2411, %v2523
        %v2525 = vpop.f32.mrf.mxu0
        %v2526 = vadd.f32 %v2413, %v2525
        %2527 = vmatprep.mubr.bf16.mxu0 0
        %2528 = vmatmul.mubr.bf16.gmra.mxu0 %v1660
        %v2529 = vpop.f32.mrf.mxu0
        %v2530 = vadd.f32 %v2417, %v2529
        %v2531 = vpop.f32.mrf.mxu0
        %v2532 = vadd.f32 %v2419, %v2531
        %v2533 = vpop.f32.mrf.mxu0
        %v2534 = vadd.f32 %v2421, %v2533
        %v2535 = vpop.f32.mrf.mxu0
        %v2536 = vadd.f32 %v2423, %v2535
        %2537 = vmatprep.mubr.bf16.mxu0 0
        %2538 = vmatmul.mubr.bf16.gmra.mxu0 %v1663
        %v2539 = vpop.f32.mrf.mxu0
        %v2540 = vadd.f32 %v2427, %v2539
        %v2541 = vpop.f32.mrf.mxu0
        %v2542 = vadd.f32 %v2429, %v2541
        %v2543 = vpop.f32.mrf.mxu0
        %v2544 = vadd.f32 %v2431, %v2543
        %v2545 = vpop.f32.mrf.mxu0
        %v2546 = vadd.f32 %v2433, %v2545
        %2547 = vmatprep.mubr.bf16.mxu0 0
        %2548 = vmatmul.mubr.bf16.gmra.mxu0 %v1666
        %v2549 = vpop.f32.mrf.mxu0
        %v2550 = vadd.f32 %v2437, %v2549
        %v2551 = vpop.f32.mrf.mxu0
        %v2552 = vadd.f32 %v2439, %v2551
        %v2553 = vpop.f32.mrf.mxu0
        %v2554 = vadd.f32 %v2441, %v2553
        %v2555 = vpop.f32.mrf.mxu0
        %v2556 = vadd.f32 %v2443, %v2555
        %2557 = vmatprep.mubr.bf16.mxu0 0
        %2558 = vmatmul.mubr.bf16.gmra.mxu0 %v1669
        %v2559 = vpop.f32.mrf.mxu0
        %v2560 = vadd.f32 %v2447, %v2559
        %v2561 = vpop.f32.mrf.mxu0
        %v2562 = vadd.f32 %v2449, %v2561
        %v2563 = vpop.f32.mrf.mxu0
        %v2564 = vadd.f32 %v2451, %v2563
        %v2565 = vpop.f32.mrf.mxu0
        %v2566 = vadd.f32 %v2453, %v2565
        %2567 = vmatprep.mubr.bf16.mxu0 0
        %2568 = vmatmul.mubr.bf16.gmra.mxu0 %v1672
        %v2569 = vpop.f32.mrf.mxu0
        %v2570 = vadd.f32 %v2457, %v2569
        %v2571 = vpop.f32.mrf.mxu0
        %v2572 = vadd.f32 %v2459, %v2571
        %v2573 = vpop.f32.mrf.mxu0
        %v2574 = vadd.f32 %v2461, %v2573
        %v2575 = vpop.f32.mrf.mxu0
        %v2576 = vadd.f32 %v2463, %v2575
        %2577 = vdwg.mxu0
        %v2578 = vmul.f32 %v2048, 0.2
        %v2579 = vmul.f32 %v2050, 0.2
        %v2580 = vmul.f32 %v2500, 0.2
        %v2581 = vmul.f32 %v2502, 0.2
        %v2582 = vmul.f32 %v2052, 0.2
        %v2583 = vmul.f32 %v2054, 0.2
        %v2584 = vmul.f32 %v2504, 0.2
        %v2585 = vmul.f32 %v2506, 0.2
        %v2586 = vmul.f32 %v2058, 0.2
        %v2587 = vmul.f32 %v2060, 0.2
        %v2588 = vmul.f32 %v2510, 0.2
        %v2589 = vmul.f32 %v2512, 0.2
        %v2590 = vmul.f32 %v2062, 0.2
        %v2591 = vmul.f32 %v2064, 0.2
        %v2592 = vmul.f32 %v2514, 0.2
        %v2593 = vmul.f32 %v2516, 0.2
        %v2594 = vmul.f32 %v2068, 0.2
        %v2595 = vmul.f32 %v2070, 0.2
        %v2596 = vmul.f32 %v2520, 0.2
        %v2597 = vmul.f32 %v2522, 0.2
        %v2598 = vmul.f32 %v2072, 0.2
        %v2599 = vmul.f32 %v2074, 0.2
        %v2600 = vmul.f32 %v2524, 0.2
        %v2601 = vmul.f32 %v2526, 0.2
        %v2602 = vmul.f32 %v2078, 0.2
        %v2603 = vmul.f32 %v2080, 0.2
        %v2604 = vmul.f32 %v2530, 0.2
        %v2605 = vmul.f32 %v2532, 0.2
        %v2606 = vmul.f32 %v2082, 0.2
        %v2607 = vmul.f32 %v2084, 0.2
        %v2608 = vmul.f32 %v2534, 0.2
        %v2609 = vmul.f32 %v2536, 0.2
        %v2610 = vmul.f32 %v2088, 0.2
        %v2611 = vmul.f32 %v2090, 0.2
        %v2612 = vmul.f32 %v2540, 0.2
        %v2613 = vmul.f32 %v2542, 0.2
        %v2614 = vmul.f32 %v2092, 0.2
        %v2615 = vmul.f32 %v2094, 0.2
        %v2616 = vmul.f32 %v2544, 0.2
        %v2617 = vmul.f32 %v2546, 0.2
        %v2618 = vmul.f32 %v2098, 0.2
        %v2619 = vmul.f32 %v2100, 0.2
        %v2620 = vmul.f32 %v2550, 0.2
        %v2621 = vmul.f32 %v2552, 0.2
        %v2622 = vmul.f32 %v2102, 0.2
        %v2623 = vmul.f32 %v2104, 0.2
        %v2624 = vmul.f32 %v2554, 0.2
        %v2625 = vmul.f32 %v2556, 0.2
        %v2626 = vmul.f32 %v2108, 0.2
        %v2627 = vmul.f32 %v2110, 0.2
        %v2628 = vmul.f32 %v2560, 0.2
        %v2629 = vmul.f32 %v2562, 0.2
        %v2630 = vmul.f32 %v2112, 0.2
        %v2631 = vmul.f32 %v2114, 0.2
        %v2632 = vmul.f32 %v2564, 0.2
        %v2633 = vmul.f32 %v2566, 0.2
        %v2634 = vmul.f32 %v2118, 0.2
        %v2635 = vmul.f32 %v2120, 0.2
        %v2636 = vmul.f32 %v2570, 0.2
        %v2637 = vmul.f32 %v2572, 0.2
        %v2638 = vmul.f32 %v2122, 0.2
        %v2639 = vmul.f32 %v2124, 0.2
        %v2640 = vmul.f32 %v2574, 0.2
        %v2641 = vmul.f32 %v2576, 0.2
        %v2642 = vmax.f32 %v2048, %v2578
        %v2643 = vmax.f32 %v2050, %v2579
        %v2644 = vmax.f32 %v2500, %v2580
        %v2645 = vmax.f32 %v2502, %v2581
        %v2646 = vmax.f32 %v2052, %v2582
        %v2647 = vmax.f32 %v2054, %v2583
        %v2648 = vmax.f32 %v2504, %v2584
        %v2649 = vmax.f32 %v2506, %v2585
        %v2650 = vmax.f32 %v2058, %v2586
        %v2651 = vmax.f32 %v2060, %v2587
        %v2652 = vmax.f32 %v2510, %v2588
        %v2653 = vmax.f32 %v2512, %v2589
        %v2654 = vmax.f32 %v2062, %v2590
        %v2655 = vmax.f32 %v2064, %v2591
        %v2656 = vmax.f32 %v2514, %v2592
        %v2657 = vmax.f32 %v2516, %v2593
        %v2658 = vmax.f32 %v2068, %v2594
        %v2659 = vmax.f32 %v2070, %v2595
        %v2660 = vmax.f32 %v2520, %v2596
        %v2661 = vmax.f32 %v2522, %v2597
        %v2662 = vmax.f32 %v2072, %v2598
        %v2663 = vmax.f32 %v2074, %v2599
        %v2664 = vmax.f32 %v2524, %v2600
        %v2665 = vmax.f32 %v2526, %v2601
        %v2666 = vmax.f32 %v2078, %v2602
        %v2667 = vmax.f32 %v2080, %v2603
        %v2668 = vmax.f32 %v2530, %v2604
        %v2669 = vmax.f32 %v2532, %v2605
        %v2670 = vmax.f32 %v2082, %v2606
        %v2671 = vmax.f32 %v2084, %v2607
        %v2672 = vmax.f32 %v2534, %v2608
        %v2673 = vmax.f32 %v2536, %v2609
        %v2674 = vmax.f32 %v2088, %v2610
        %v2675 = vmax.f32 %v2090, %v2611
        %v2676 = vmax.f32 %v2540, %v2612
        %v2677 = vmax.f32 %v2542, %v2613
        %v2678 = vmax.f32 %v2092, %v2614
        %v2679 = vmax.f32 %v2094, %v2615
        %v2680 = vmax.f32 %v2544, %v2616
        %v2681 = vmax.f32 %v2546, %v2617
        %v2682 = vmax.f32 %v2098, %v2618
        %v2683 = vmax.f32 %v2100, %v2619
        %v2684 = vmax.f32 %v2550, %v2620
        %v2685 = vmax.f32 %v2552, %v2621
        %v2686 = vmax.f32 %v2102, %v2622
        %v2687 = vmax.f32 %v2104, %v2623
        %v2688 = vmax.f32 %v2554, %v2624
        %v2689 = vmax.f32 %v2556, %v2625
        %v2690 = vmax.f32 %v2108, %v2626
        %v2691 = vmax.f32 %v2110, %v2627
        %v2692 = vmax.f32 %v2560, %v2628
        %v2693 = vmax.f32 %v2562, %v2629
        %v2694 = vmax.f32 %v2112, %v2630
        %v2695 = vmax.f32 %v2114, %v2631
        %v2696 = vmax.f32 %v2564, %v2632
        %v2697 = vmax.f32 %v2566, %v2633
        %v2698 = vmax.f32 %v2118, %v2634
        %v2699 = vmax.f32 %v2120, %v2635
        %v2700 = vmax.f32 %v2570, %v2636
        %v2701 = vmax.f32 %v2572, %v2637
        %v2702 = vmax.f32 %v2122, %v2638
        %v2703 = vmax.f32 %v2124, %v2639
        %v2704 = vmax.f32 %v2574, %v2640
        %v2705 = vmax.f32 %v2576, %v2641
        %v2706 = vpack.c.bf16 %v2646, %v2642
        %v2707 = vpack.c.bf16 %v2647, %v2643
        %v2708 = vpack.c.bf16 %v2648, %v2644
        %v2709 = vpack.c.bf16 %v2649, %v2645
        %v2710 = vpack.c.bf16 %v2654, %v2650
        %v2711 = vpack.c.bf16 %v2655, %v2651
        %v2712 = vpack.c.bf16 %v2656, %v2652
        %v2713 = vpack.c.bf16 %v2657, %v2653
        %v2714 = vpack.c.bf16 %v2662, %v2658
        %v2715 = vpack.c.bf16 %v2663, %v2659
        %v2716 = vpack.c.bf16 %v2664, %v2660
        %v2717 = vpack.c.bf16 %v2665, %v2661
        %v2718 = vpack.c.bf16 %v2670, %v2666
        %v2719 = vpack.c.bf16 %v2671, %v2667
        %v2720 = vpack.c.bf16 %v2672, %v2668
        %v2721 = vpack.c.bf16 %v2673, %v2669
        %v2722 = vpack.c.bf16 %v2678, %v2674
        %v2723 = vpack.c.bf16 %v2679, %v2675
        %v2724 = vpack.c.bf16 %v2680, %v2676
        %v2725 = vpack.c.bf16 %v2681, %v2677
        %v2726 = vpack.c.bf16 %v2686, %v2682
        %v2727 = vpack.c.bf16 %v2687, %v2683
        %v2728 = vpack.c.bf16 %v2688, %v2684
        %v2729 = vpack.c.bf16 %v2689, %v2685
        %v2730 = vpack.c.bf16 %v2694, %v2690
        %v2731 = vpack.c.bf16 %v2695, %v2691
        %v2732 = vpack.c.bf16 %v2696, %v2692
        %v2733 = vpack.c.bf16 %v2697, %v2693
        %v2734 = vpack.c.bf16 %v2702, %v2698
        %v2735 = vpack.c.bf16 %v2703, %v2699
        %v2736 = vpack.c.bf16 %v2704, %v2700
        %v2737 = vpack.c.bf16 %v2705, %v2701
        %v2738 = vld [vmem:[%s3] sm:$0xff]
        %v2739 = vld [vmem:[%s3 + $0x8] sm:$0xff]
        %v2740 = vld [vmem:[%s3 + $0x10] sm:$0xff]
        %v2741 = vld [vmem:[%s3 + $0x18] sm:$0xff]
        %v2742 = vld [vmem:[%s3 + $0x20] sm:$0xff]
        %v2743 = vld [vmem:[%s3 + $0x28] sm:$0xff]
        %v2744 = vld [vmem:[%s3 + $0x30] sm:$0xff]
        %v2745 = vld [vmem:[%s3 + $0x38] sm:$0xff]
        %v2746 = vld [vmem:[%s3 + $0x40] sm:$0xff]
        %v2747 = vld [vmem:[%s3 + $0x48] sm:$0xff]
        %v2748 = vld [vmem:[%s3 + $0x50] sm:$0xff]
        %v2749 = vld [vmem:[%s3 + $0x58] sm:$0xff]
        %v2750 = vld [vmem:[%s3 + $0x60] sm:$0xff]
        %v2751 = vld [vmem:[%s3 + $0x68] sm:$0xff]
        %v2752 = vld [vmem:[%s3 + $0x70] sm:$0xff]
        %v2753 = vld [vmem:[%s3 + $0x78] sm:$0xff]
        %v2754 = vld [vmem:[%s3 + $0x80] sm:$0xff]
        %v2755 = vld [vmem:[%s3 + $0x88] sm:$0xff]
        %v2756 = vld [vmem:[%s3 + $0x90] sm:$0xff]
        %v2757 = vld [vmem:[%s3 + $0x98] sm:$0xff]
        %v2758 = vld [vmem:[%s3 + $0xa0] sm:$0xff]
        %v2759 = vld [vmem:[%s3 + $0xa8] sm:$0xff]
        %v2760 = vld [vmem:[%s3 + $0xb0] sm:$0xff]
        %v2761 = vld [vmem:[%s3 + $0xb8] sm:$0xff]
        %v2762 = vld [vmem:[%s3 + $0xc0] sm:$0xff]
        %v2763 = vld [vmem:[%s3 + $0xc8] sm:$0xff]
        %v2764 = vld [vmem:[%s3 + $0xd0] sm:$0xff]
        %v2765 = vld [vmem:[%s3 + $0xd8] sm:$0xff]
        %v2766 = vld [vmem:[%s3 + $0xe0] sm:$0xff]
        %v2767 = vld [vmem:[%s3 + $0xe8] sm:$0xff]
        %v2768 = vld [vmem:[%s3 + $0xf0] sm:$0xff]
        %v2769 = vld [vmem:[%s3 + $0xf8] sm:$0xff]
        %v2770 = vld [vmem:[%s3 + $0x100] sm:$0xff]
        %v2771 = vld [vmem:[%s3 + $0x108] sm:$0xff]
        %v2772 = vld [vmem:[%s3 + $0x110] sm:$0xff]
        %v2773 = vld [vmem:[%s3 + $0x118] sm:$0xff]
        %v2774 = vld [vmem:[%s3 + $0x120] sm:$0xff]
        %v2775 = vld [vmem:[%s3 + $0x128] sm:$0xff]
        %v2776 = vld [vmem:[%s3 + $0x130] sm:$0xff]
        %v2777 = vld [vmem:[%s3 + $0x138] sm:$0xff]
        %v2778 = vld [vmem:[%s3 + $0x140] sm:$0xff]
        %v2779 = vld [vmem:[%s3 + $0x148] sm:$0xff]
        %v2780 = vld [vmem:[%s3 + $0x150] sm:$0xff]
        %v2781 = vld [vmem:[%s3 + $0x158] sm:$0xff]
        %v2782 = vld [vmem:[%s3 + $0x160] sm:$0xff]
        %v2783 = vld [vmem:[%s3 + $0x168] sm:$0xff]
        %v2784 = vld [vmem:[%s3 + $0x170] sm:$0xff]
        %v2785 = vld [vmem:[%s3 + $0x178] sm:$0xff]
        %v2786 = vld [vmem:[%s3 + $0x180] sm:$0xff]
        %v2787 = vld [vmem:[%s3 + $0x188] sm:$0xff]
        %v2788 = vld [vmem:[%s3 + $0x190] sm:$0xff]
        %v2789 = vld [vmem:[%s3 + $0x198] sm:$0xff]
        %v2790 = vld [vmem:[%s3 + $0x1a0] sm:$0xff]
        %v2791 = vld [vmem:[%s3 + $0x1a8] sm:$0xff]
        %v2792 = vld [vmem:[%s3 + $0x1b0] sm:$0xff]
        %v2793 = vld [vmem:[%s3 + $0x1b8] sm:$0xff]
        %v2794 = vld [vmem:[%s3 + $0x1c0] sm:$0xff]
        %v2795 = vld [vmem:[%s3 + $0x1c8] sm:$0xff]
        %v2796 = vld [vmem:[%s3 + $0x1d0] sm:$0xff]
        %v2797 = vld [vmem:[%s3 + $0x1d8] sm:$0xff]
        %v2798 = vld [vmem:[%s3 + $0x1e0] sm:$0xff]
        %v2799 = vld [vmem:[%s3 + $0x1e8] sm:$0xff]
        %v2800 = vld [vmem:[%s3 + $0x1f0] sm:$0xff]
        %v2801 = vld [vmem:[%s3 + $0x1f8] sm:$0xff]
        %v2802 = vld [vmem:[%s4] sm:$0x3]
        %v2804 = vlaneseq
        %v2805 = vshrl.u32 %v2804, 7
        %v2806 = vsub.s32 0, %v2805
        %v2807 = vrot.slane %v2802, %v2806
        %v2808 = vlaneseq
        %v2809 = vshrl.u32 %v2808, 7
        %v2810 = vsub.s32 1, %v2809
        %v2811 = vrot.slane %v2802, %v2810
        %v2878 = vunpack.c.l.b16 %v2738
        %v2879 = vunpack.c.h.b16 %v2738
        %v2880 = vunpack.c.l.b16 %v2739
        %v2881 = vunpack.c.h.b16 %v2739
        %v2882 = vunpack.c.l.b16 %v2740
        %v2883 = vunpack.c.h.b16 %v2740
        %v2884 = vunpack.c.l.b16 %v2741
        %v2885 = vunpack.c.h.b16 %v2741
        %v2886 = vunpack.c.l.b16 %v2742
        %v2887 = vunpack.c.h.b16 %v2742
        %v2888 = vunpack.c.l.b16 %v2743
        %v2889 = vunpack.c.h.b16 %v2743
        %v2890 = vunpack.c.l.b16 %v2744
        %v2891 = vunpack.c.h.b16 %v2744
        %v2892 = vunpack.c.l.b16 %v2745
        %v2893 = vunpack.c.h.b16 %v2745
        %v2894 = vunpack.c.l.b16 %v2746
        %v2895 = vunpack.c.h.b16 %v2746
        %v2896 = vunpack.c.l.b16 %v2747
        %v2897 = vunpack.c.h.b16 %v2747
        %v2898 = vunpack.c.l.b16 %v2748
        %v2899 = vunpack.c.h.b16 %v2748
        %v2900 = vunpack.c.l.b16 %v2749
        %v2901 = vunpack.c.h.b16 %v2749
        %v2902 = vunpack.c.l.b16 %v2750
        %v2903 = vunpack.c.h.b16 %v2750
        %v2904 = vunpack.c.l.b16 %v2751
        %v2905 = vunpack.c.h.b16 %v2751
        %v2906 = vunpack.c.l.b16 %v2752
        %v2907 = vunpack.c.h.b16 %v2752
        %v2908 = vunpack.c.l.b16 %v2753
        %v2909 = vunpack.c.h.b16 %v2753
        %v2910 = vunpack.c.l.b16 %v2754
        %v2911 = vunpack.c.h.b16 %v2754
        %v2912 = vunpack.c.l.b16 %v2755
        %v2913 = vunpack.c.h.b16 %v2755
        %v2914 = vunpack.c.l.b16 %v2756
        %v2915 = vunpack.c.h.b16 %v2756
        %v2916 = vunpack.c.l.b16 %v2757
        %v2917 = vunpack.c.h.b16 %v2757
        %v2918 = vunpack.c.l.b16 %v2758
        %v2919 = vunpack.c.h.b16 %v2758
        %v2920 = vunpack.c.l.b16 %v2759
        %v2921 = vunpack.c.h.b16 %v2759
        %v2922 = vunpack.c.l.b16 %v2760
        %v2923 = vunpack.c.h.b16 %v2760
        %v2924 = vunpack.c.l.b16 %v2761
        %v2925 = vunpack.c.h.b16 %v2761
        %v2926 = vunpack.c.l.b16 %v2762
        %v2927 = vunpack.c.h.b16 %v2762
        %v2928 = vunpack.c.l.b16 %v2763
        %v2929 = vunpack.c.h.b16 %v2763
        %v2930 = vunpack.c.l.b16 %v2764
        %v2931 = vunpack.c.h.b16 %v2764
        %v2932 = vunpack.c.l.b16 %v2765
        %v2933 = vunpack.c.h.b16 %v2765
        %v2934 = vunpack.c.l.b16 %v2766
        %v2935 = vunpack.c.h.b16 %v2766
        %v2936 = vunpack.c.l.b16 %v2767
        %v2937 = vunpack.c.h.b16 %v2767
        %v2938 = vunpack.c.l.b16 %v2768
        %v2939 = vunpack.c.h.b16 %v2768
        %v2940 = vunpack.c.l.b16 %v2769
        %v2941 = vunpack.c.h.b16 %v2769
        %v2942 = vunpack.c.l.b16 %v2770
        %v2943 = vunpack.c.h.b16 %v2770
        %v2944 = vunpack.c.l.b16 %v2771
        %v2945 = vunpack.c.h.b16 %v2771
        %v2946 = vunpack.c.l.b16 %v2772
        %v2947 = vunpack.c.h.b16 %v2772
        %v2948 = vunpack.c.l.b16 %v2773
        %v2949 = vunpack.c.h.b16 %v2773
        %v2950 = vunpack.c.l.b16 %v2774
        %v2951 = vunpack.c.h.b16 %v2774
        %v2952 = vunpack.c.l.b16 %v2775
        %v2953 = vunpack.c.h.b16 %v2775
        %v2954 = vunpack.c.l.b16 %v2776
        %v2955 = vunpack.c.h.b16 %v2776
        %v2956 = vunpack.c.l.b16 %v2777
        %v2957 = vunpack.c.h.b16 %v2777
        %v2958 = vunpack.c.l.b16 %v2778
        %v2959 = vunpack.c.h.b16 %v2778
        %v2960 = vunpack.c.l.b16 %v2779
        %v2961 = vunpack.c.h.b16 %v2779
        %v2962 = vunpack.c.l.b16 %v2780
        %v2963 = vunpack.c.h.b16 %v2780
        %v2964 = vunpack.c.l.b16 %v2781
        %v2965 = vunpack.c.h.b16 %v2781
        %v2966 = vunpack.c.l.b16 %v2782
        %v2967 = vunpack.c.h.b16 %v2782
        %v2968 = vunpack.c.l.b16 %v2783
        %v2969 = vunpack.c.h.b16 %v2783
        %v2970 = vunpack.c.l.b16 %v2784
        %v2971 = vunpack.c.h.b16 %v2784
        %v2972 = vunpack.c.l.b16 %v2785
        %v2973 = vunpack.c.h.b16 %v2785
        %v2974 = vunpack.c.l.b16 %v2786
        %v2975 = vunpack.c.h.b16 %v2786
        %v2976 = vunpack.c.l.b16 %v2787
        %v2977 = vunpack.c.h.b16 %v2787
        %v2978 = vunpack.c.l.b16 %v2788
        %v2979 = vunpack.c.h.b16 %v2788
        %v2980 = vunpack.c.l.b16 %v2789
        %v2981 = vunpack.c.h.b16 %v2789
        %v2982 = vunpack.c.l.b16 %v2790
        %v2983 = vunpack.c.h.b16 %v2790
        %v2984 = vunpack.c.l.b16 %v2791
        %v2985 = vunpack.c.h.b16 %v2791
        %v2986 = vunpack.c.l.b16 %v2792
        %v2987 = vunpack.c.h.b16 %v2792
        %v2988 = vunpack.c.l.b16 %v2793
        %v2989 = vunpack.c.h.b16 %v2793
        %v2990 = vunpack.c.l.b16 %v2794
        %v2991 = vunpack.c.h.b16 %v2794
        %v2992 = vunpack.c.l.b16 %v2795
        %v2993 = vunpack.c.h.b16 %v2795
        %v2994 = vunpack.c.l.b16 %v2796
        %v2995 = vunpack.c.h.b16 %v2796
        %v2996 = vunpack.c.l.b16 %v2797
        %v2997 = vunpack.c.h.b16 %v2797
        %v2998 = vunpack.c.l.b16 %v2798
        %v2999 = vunpack.c.h.b16 %v2798
        %v3000 = vunpack.c.l.b16 %v2799
        %v3001 = vunpack.c.h.b16 %v2799
        %v3002 = vunpack.c.l.b16 %v2800
        %v3003 = vunpack.c.h.b16 %v2800
        %v3004 = vunpack.c.l.b16 %v2801
        %v3005 = vunpack.c.h.b16 %v2801
        %v3006 = vpack.c.b16 %v2880, %v2878
        %v3007 = vpack.c.b16 %v2881, %v2879
        %v3008 = vpack.c.b16 %v2884, %v2882
        %v3009 = vpack.c.b16 %v2885, %v2883
        %v3010 = vpack.c.b16 %v2888, %v2886
        %v3011 = vpack.c.b16 %v2889, %v2887
        %v3012 = vpack.c.b16 %v2892, %v2890
        %v3013 = vpack.c.b16 %v2893, %v2891
        %v3014 = vpack.c.b16 %v2896, %v2894
        %v3015 = vpack.c.b16 %v2897, %v2895
        %v3016 = vpack.c.b16 %v2900, %v2898
        %v3017 = vpack.c.b16 %v2901, %v2899
        %v3018 = vpack.c.b16 %v2904, %v2902
        %v3019 = vpack.c.b16 %v2905, %v2903
        %v3020 = vpack.c.b16 %v2908, %v2906
        %v3021 = vpack.c.b16 %v2909, %v2907
        %v3022 = vpack.c.b16 %v2912, %v2910
        %v3023 = vpack.c.b16 %v2913, %v2911
        %v3024 = vpack.c.b16 %v2916, %v2914
        %v3025 = vpack.c.b16 %v2917, %v2915
        %v3026 = vpack.c.b16 %v2920, %v2918
        %v3027 = vpack.c.b16 %v2921, %v2919
        %v3028 = vpack.c.b16 %v2924, %v2922
        %v3029 = vpack.c.b16 %v2925, %v2923
        %v3030 = vpack.c.b16 %v2928, %v2926
        %v3031 = vpack.c.b16 %v2929, %v2927
        %v3032 = vpack.c.b16 %v2932, %v2930
        %v3033 = vpack.c.b16 %v2933, %v2931
        %v3034 = vpack.c.b16 %v2936, %v2934
        %v3035 = vpack.c.b16 %v2937, %v2935
        %v3036 = vpack.c.b16 %v2940, %v2938
        %v3037 = vpack.c.b16 %v2941, %v2939
        %v3038 = vpack.c.b16 %v2944, %v2942
        %v3039 = vpack.c.b16 %v2945, %v2943
        %v3040 = vpack.c.b16 %v2948, %v2946
        %v3041 = vpack.c.b16 %v2949, %v2947
        %v3042 = vpack.c.b16 %v2952, %v2950
        %v3043 = vpack.c.b16 %v2953, %v2951
        %v3044 = vpack.c.b16 %v2956, %v2954
        %v3045 = vpack.c.b16 %v2957, %v2955
        %v3046 = vpack.c.b16 %v2960, %v2958
        %v3047 = vpack.c.b16 %v2961, %v2959
        %v3048 = vpack.c.b16 %v2964, %v2962
        %v3049 = vpack.c.b16 %v2965, %v2963
        %v3050 = vpack.c.b16 %v2968, %v2966
        %v3051 = vpack.c.b16 %v2969, %v2967
        %v3052 = vpack.c.b16 %v2972, %v2970
        %v3053 = vpack.c.b16 %v2973, %v2971
        %v3054 = vpack.c.b16 %v2976, %v2974
        %v3055 = vpack.c.b16 %v2977, %v2975
        %v3056 = vpack.c.b16 %v2980, %v2978
        %v3057 = vpack.c.b16 %v2981, %v2979
        %v3058 = vpack.c.b16 %v2984, %v2982
        %v3059 = vpack.c.b16 %v2985, %v2983
        %v3060 = vpack.c.b16 %v2988, %v2986
        %v3061 = vpack.c.b16 %v2989, %v2987
        %v3062 = vpack.c.b16 %v2992, %v2990
        %v3063 = vpack.c.b16 %v2993, %v2991
        %v3064 = vpack.c.b16 %v2996, %v2994
        %v3065 = vpack.c.b16 %v2997, %v2995
        %v3066 = vpack.c.b16 %v3000, %v2998
        %v3067 = vpack.c.b16 %v3001, %v2999
        %v3068 = vpack.c.b16 %v3004, %v3002
        %v3069 = vpack.c.b16 %v3005, %v3003
        %3134 = vmatprep.subr.bf16.mxu0 %v3021
        %3135 = vmatpush1.bf16.msra.mxu0 %v3020
        %3136 = vmatprep.subr.bf16.mxu0 %v3019
        %3137 = vmatpush1.bf16.msra.mxu0 %v3018
        %3138 = vmatprep.subr.bf16.mxu0 %v3017
        %3139 = vmatpush1.bf16.msra.mxu0 %v3016
        %3140 = vmatprep.subr.bf16.mxu0 %v3015
        %3141 = vmatpush1.bf16.msra.mxu0 %v3014
        %3142 = vmatprep.subr.bf16.mxu0 %v3013
        %3143 = vmatpush1.bf16.msra.mxu0 %v3012
        %3144 = vmatprep.subr.bf16.mxu0 %v3011
        %3145 = vmatpush1.bf16.msra.mxu0 %v3010
        %3146 = vmatprep.subr.bf16.mxu0 %v3009
        %3147 = vmatpush1.bf16.msra.mxu0 %v3008
        %3148 = vmatprep.subr.bf16.mxu0 %v3007
        %3149 = vmatpush1.bf16.msra.mxu0 %v3006
        %3150 = vmatprep.subr.bf16.mxu0 %v3037
        %3151 = vmatpush2.bf16.msra.mxu0 %v3036
        %3152 = vmatprep.subr.bf16.mxu0 %v3035
        %3153 = vmatpush2.bf16.msra.mxu0 %v3034
        %3154 = vmatprep.subr.bf16.mxu0 %v3033
        %3155 = vmatpush2.bf16.msra.mxu0 %v3032
        %3156 = vmatprep.subr.bf16.mxu0 %v3031
        %3157 = vmatpush2.bf16.msra.mxu0 %v3030
        %3158 = vmatprep.subr.bf16.mxu0 %v3029
        %3159 = vmatpush2.bf16.msra.mxu0 %v3028
        %3160 = vmatprep.subr.bf16.mxu0 %v3027
        %3161 = vmatpush2.bf16.msra.mxu0 %v3026
        %3162 = vmatprep.subr.bf16.mxu0 %v3025
        %3163 = vmatpush2.bf16.msra.mxu0 %v3024
        %3164 = vmatprep.subr.bf16.mxu0 %v3023
        %3165 = vmatpush2.bf16.msra.mxu0 %v3022
        %3166 = vmatprep.mubr.bf16.mxu0 %v2707
        %3167 = vmatmul.mubr.bf16.gmra.mxu0 %v2706
        %v3168 = vpop.f32.mrf.mxu0
        %v3169 = vadd.f32 %v2807, %v3168
        %v3170 = vpop.f32.mrf.mxu0
        %v3171 = vadd.f32 %v2811, %v3170
        %v3172 = vpop.f32.mrf.mxu0
        %v3173 = vadd.f32 %v2807, %v3172
        %v3174 = vpop.f32.mrf.mxu0
        %v3175 = vadd.f32 %v2811, %v3174
        %3176 = vmatprep.mubr.bf16.mxu0 %v2711
        %3177 = vmatmul.mubr.bf16.gmra.mxu0 %v2710
        %v3178 = vpop.f32.mrf.mxu0
        %v3179 = vadd.f32 %v2807, %v3178
        %v3180 = vpop.f32.mrf.mxu0
        %v3181 = vadd.f32 %v2811, %v3180
        %v3182 = vpop.f32.mrf.mxu0
        %v3183 = vadd.f32 %v2807, %v3182
        %v3184 = vpop.f32.mrf.mxu0
        %v3185 = vadd.f32 %v2811, %v3184
        %3186 = vmatprep.mubr.bf16.mxu0 %v2715
        %3187 = vmatmul.mubr.bf16.gmra.mxu0 %v2714
        %v3188 = vpop.f32.mrf.mxu0
        %v3189 = vadd.f32 %v2807, %v3188
        %v3190 = vpop.f32.mrf.mxu0
        %v3191 = vadd.f32 %v2811, %v3190
        %v3192 = vpop.f32.mrf.mxu0
        %v3193 = vadd.f32 %v2807, %v3192
        %v3194 = vpop.f32.mrf.mxu0
        %v3195 = vadd.f32 %v2811, %v3194
        %3196 = vmatprep.mubr.bf16.mxu0 %v2719
        %3197 = vmatmul.mubr.bf16.gmra.mxu0 %v2718
        %v3198 = vpop.f32.mrf.mxu0
        %v3199 = vadd.f32 %v2807, %v3198
        %v3200 = vpop.f32.mrf.mxu0
        %v3201 = vadd.f32 %v2811, %v3200
        %v3202 = vpop.f32.mrf.mxu0
        %v3203 = vadd.f32 %v2807, %v3202
        %v3204 = vpop.f32.mrf.mxu0
        %v3205 = vadd.f32 %v2811, %v3204
        %3206 = vmatprep.mubr.bf16.mxu0 %v2723
        %3207 = vmatmul.mubr.bf16.gmra.mxu0 %v2722
        %v3208 = vpop.f32.mrf.mxu0
        %v3209 = vadd.f32 %v2807, %v3208
        %v3210 = vpop.f32.mrf.mxu0
        %v3211 = vadd.f32 %v2811, %v3210
        %v3212 = vpop.f32.mrf.mxu0
        %v3213 = vadd.f32 %v2807, %v3212
        %v3214 = vpop.f32.mrf.mxu0
        %v3215 = vadd.f32 %v2811, %v3214
        %3216 = vmatprep.mubr.bf16.mxu0 %v2727
        %3217 = vmatmul.mubr.bf16.gmra.mxu0 %v2726
        %v3218 = vpop.f32.mrf.mxu0
        %v3219 = vadd.f32 %v2807, %v3218
        %v3220 = vpop.f32.mrf.mxu0
        %v3221 = vadd.f32 %v2811, %v3220
        %v3222 = vpop.f32.mrf.mxu0
        %v3223 = vadd.f32 %v2807, %v3222
        %v3224 = vpop.f32.mrf.mxu0
        %v3225 = vadd.f32 %v2811, %v3224
        %3226 = vmatprep.mubr.bf16.mxu0 %v2731
        %3227 = vmatmul.mubr.bf16.gmra.mxu0 %v2730
        %v3228 = vpop.f32.mrf.mxu0
        %v3229 = vadd.f32 %v2807, %v3228
        %v3230 = vpop.f32.mrf.mxu0
        %v3231 = vadd.f32 %v2811, %v3230
        %v3232 = vpop.f32.mrf.mxu0
        %v3233 = vadd.f32 %v2807, %v3232
        %v3234 = vpop.f32.mrf.mxu0
        %v3235 = vadd.f32 %v2811, %v3234
        %3236 = vmatprep.mubr.bf16.mxu0 %v2735
        %3237 = vmatmul.mubr.bf16.gmra.mxu0 %v2734
        %v3238 = vpop.f32.mrf.mxu0
        %v3239 = vadd.f32 %v2807, %v3238
        %v3240 = vpop.f32.mrf.mxu0
        %v3241 = vadd.f32 %v2811, %v3240
        %v3242 = vpop.f32.mrf.mxu0
        %v3243 = vadd.f32 %v2807, %v3242
        %v3244 = vpop.f32.mrf.mxu0
        %v3245 = vadd.f32 %v2811, %v3244
        %3246 = vdwg.mxu0
        %3247 = vmatprep.subr.bf16.mxu0 %v3053
        %3248 = vmatpush1.bf16.msra.mxu0 %v3052
        %3249 = vmatprep.subr.bf16.mxu0 %v3051
        %3250 = vmatpush1.bf16.msra.mxu0 %v3050
        %3251 = vmatprep.subr.bf16.mxu0 %v3049
        %3252 = vmatpush1.bf16.msra.mxu0 %v3048
        %3253 = vmatprep.subr.bf16.mxu0 %v3047
        %3254 = vmatpush1.bf16.msra.mxu0 %v3046
        %3255 = vmatprep.subr.bf16.mxu0 %v3045
        %3256 = vmatpush1.bf16.msra.mxu0 %v3044
        %3257 = vmatprep.subr.bf16.mxu0 %v3043
        %3258 = vmatpush1.bf16.msra.mxu0 %v3042
        %3259 = vmatprep.subr.bf16.mxu0 %v3041
        %3260 = vmatpush1.bf16.msra.mxu0 %v3040
        %3261 = vmatprep.subr.bf16.mxu0 %v3039
        %3262 = vmatpush1.bf16.msra.mxu0 %v3038
        %3263 = vmatprep.subr.bf16.mxu0 %v3069
        %3264 = vmatpush2.bf16.msra.mxu0 %v3068
        %3265 = vmatprep.subr.bf16.mxu0 %v3067
        %3266 = vmatpush2.bf16.msra.mxu0 %v3066
        %3267 = vmatprep.subr.bf16.mxu0 %v3065
        %3268 = vmatpush2.bf16.msra.mxu0 %v3064
        %3269 = vmatprep.subr.bf16.mxu0 %v3063
        %3270 = vmatpush2.bf16.msra.mxu0 %v3062
        %3271 = vmatprep.subr.bf16.mxu0 %v3061
        %3272 = vmatpush2.bf16.msra.mxu0 %v3060
        %3273 = vmatprep.subr.bf16.mxu0 %v3059
        %3274 = vmatpush2.bf16.msra.mxu0 %v3058
        %3275 = vmatprep.subr.bf16.mxu0 %v3057
        %3276 = vmatpush2.bf16.msra.mxu0 %v3056
        %3277 = vmatprep.subr.bf16.mxu0 %v3055
        %3278 = vmatpush2.bf16.msra.mxu0 %v3054
        %3279 = vmatprep.mubr.bf16.mxu0 %v2709
        %3280 = vmatmul.mubr.bf16.gmra.mxu0 %v2708
        %v3281 = vpop.f32.mrf.mxu0
        %v3282 = vadd.f32 %v3169, %v3281
        %v3283 = vpop.f32.mrf.mxu0
        %v3284 = vadd.f32 %v3171, %v3283
        %v3285 = vpop.f32.mrf.mxu0
        %v3286 = vadd.f32 %v3173, %v3285
        %v3287 = vpop.f32.mrf.mxu0
        %v3288 = vadd.f32 %v3175, %v3287
        %3289 = vmatprep.mubr.bf16.mxu0 %v2713
        %3290 = vmatmul.mubr.bf16.gmra.mxu0 %v2712
        %v3291 = vpop.f32.mrf.mxu0
        %v3292 = vadd.f32 %v3179, %v3291
        %v3293 = vpop.f32.mrf.mxu0
        %v3294 = vadd.f32 %v3181, %v3293
        %v3295 = vpop.f32.mrf.mxu0
        %v3296 = vadd.f32 %v3183, %v3295
        %v3297 = vpop.f32.mrf.mxu0
        %v3298 = vadd.f32 %v3185, %v3297
        %3299 = vmatprep.mubr.bf16.mxu0 %v2717
        %3300 = vmatmul.mubr.bf16.gmra.mxu0 %v2716
        %v3301 = vpop.f32.mrf.mxu0
        %v3302 = vadd.f32 %v3189, %v3301
        %v3303 = vpop.f32.mrf.mxu0
        %v3304 = vadd.f32 %v3191, %v3303
        %v3305 = vpop.f32.mrf.mxu0
        %v3306 = vadd.f32 %v3193, %v3305
        %v3307 = vpop.f32.mrf.mxu0
        %v3308 = vadd.f32 %v3195, %v3307
        %3309 = vmatprep.mubr.bf16.mxu0 %v2721
        %3310 = vmatmul.mubr.bf16.gmra.mxu0 %v2720
        %v3311 = vpop.f32.mrf.mxu0
        %v3312 = vadd.f32 %v3199, %v3311
        %v3313 = vpop.f32.mrf.mxu0
        %v3314 = vadd.f32 %v3201, %v3313
        %v3315 = vpop.f32.mrf.mxu0
        %v3316 = vadd.f32 %v3203, %v3315
        %v3317 = vpop.f32.mrf.mxu0
        %v3318 = vadd.f32 %v3205, %v3317
        %3319 = vmatprep.mubr.bf16.mxu0 %v2725
        %3320 = vmatmul.mubr.bf16.gmra.mxu0 %v2724
        %v3321 = vpop.f32.mrf.mxu0
        %v3322 = vadd.f32 %v3209, %v3321
        %v3323 = vpop.f32.mrf.mxu0
        %v3324 = vadd.f32 %v3211, %v3323
        %v3325 = vpop.f32.mrf.mxu0
        %v3326 = vadd.f32 %v3213, %v3325
        %v3327 = vpop.f32.mrf.mxu0
        %v3328 = vadd.f32 %v3215, %v3327
        %3329 = vmatprep.mubr.bf16.mxu0 %v2729
        %3330 = vmatmul.mubr.bf16.gmra.mxu0 %v2728
        %v3331 = vpop.f32.mrf.mxu0
        %v3332 = vadd.f32 %v3219, %v3331
        %v3333 = vpop.f32.mrf.mxu0
        %v3334 = vadd.f32 %v3221, %v3333
        %v3335 = vpop.f32.mrf.mxu0
        %v3336 = vadd.f32 %v3223, %v3335
        %v3337 = vpop.f32.mrf.mxu0
        %v3338 = vadd.f32 %v3225, %v3337
        %3339 = vmatprep.mubr.bf16.mxu0 %v2733
        %3340 = vmatmul.mubr.bf16.gmra.mxu0 %v2732
        %v3341 = vpop.f32.mrf.mxu0
        %v3342 = vadd.f32 %v3229, %v3341
        %v3343 = vpop.f32.mrf.mxu0
        %v3344 = vadd.f32 %v3231, %v3343
        %v3345 = vpop.f32.mrf.mxu0
        %v3346 = vadd.f32 %v3233, %v3345
        %v3347 = vpop.f32.mrf.mxu0
        %v3348 = vadd.f32 %v3235, %v3347
        %3349 = vmatprep.mubr.bf16.mxu0 %v2737
        %3350 = vmatmul.mubr.bf16.gmra.mxu0 %v2736
        %v3351 = vpop.f32.mrf.mxu0
        %v3352 = vadd.f32 %v3239, %v3351
        %v3353 = vpop.f32.mrf.mxu0
        %v3354 = vadd.f32 %v3241, %v3353
        %v3355 = vpop.f32.mrf.mxu0
        %v3356 = vadd.f32 %v3243, %v3355
        %v3357 = vpop.f32.mrf.mxu0
        %v3358 = vadd.f32 %v3245, %v3357
        %3359 = vdwg.mxu0
        %v3360 = vmul.f32 %v3282, 0.2
        %v3361 = vmul.f32 %v3284, 0.2
        %v3362 = vmul.f32 %v3286, 0.2
        %v3363 = vmul.f32 %v3288, 0.2
        %v3364 = vmul.f32 %v3292, 0.2
        %v3365 = vmul.f32 %v3294, 0.2
        %v3366 = vmul.f32 %v3296, 0.2
        %v3367 = vmul.f32 %v3298, 0.2
        %v3368 = vmul.f32 %v3302, 0.2
        %v3369 = vmul.f32 %v3304, 0.2
        %v3370 = vmul.f32 %v3306, 0.2
        %v3371 = vmul.f32 %v3308, 0.2
        %v3372 = vmul.f32 %v3312, 0.2
        %v3373 = vmul.f32 %v3314, 0.2
        %v3374 = vmul.f32 %v3316, 0.2
        %v3375 = vmul.f32 %v3318, 0.2
        %v3376 = vmul.f32 %v3322, 0.2
        %v3377 = vmul.f32 %v3324, 0.2
        %v3378 = vmul.f32 %v3326, 0.2
        %v3379 = vmul.f32 %v3328, 0.2
        %v3380 = vmul.f32 %v3332, 0.2
        %v3381 = vmul.f32 %v3334, 0.2
        %v3382 = vmul.f32 %v3336, 0.2
        %v3383 = vmul.f32 %v3338, 0.2
        %v3384 = vmul.f32 %v3342, 0.2
        %v3385 = vmul.f32 %v3344, 0.2
        %v3386 = vmul.f32 %v3346, 0.2
        %v3387 = vmul.f32 %v3348, 0.2
        %v3388 = vmul.f32 %v3352, 0.2
        %v3389 = vmul.f32 %v3354, 0.2
        %v3390 = vmul.f32 %v3356, 0.2
        %v3391 = vmul.f32 %v3358, 0.2
        %v3392 = vmax.f32 %v3282, %v3360
        %v3393 = vmax.f32 %v3284, %v3361
        %v3394 = vmax.f32 %v3286, %v3362
        %v3395 = vmax.f32 %v3288, %v3363
        %v3396 = vmax.f32 %v3292, %v3364
        %v3397 = vmax.f32 %v3294, %v3365
        %v3398 = vmax.f32 %v3296, %v3366
        %v3399 = vmax.f32 %v3298, %v3367
        %v3400 = vmax.f32 %v3302, %v3368
        %v3401 = vmax.f32 %v3304, %v3369
        %v3402 = vmax.f32 %v3306, %v3370
        %v3403 = vmax.f32 %v3308, %v3371
        %v3404 = vmax.f32 %v3312, %v3372
        %v3405 = vmax.f32 %v3314, %v3373
        %v3406 = vmax.f32 %v3316, %v3374
        %v3407 = vmax.f32 %v3318, %v3375
        %v3408 = vmax.f32 %v3322, %v3376
        %v3409 = vmax.f32 %v3324, %v3377
        %v3410 = vmax.f32 %v3326, %v3378
        %v3411 = vmax.f32 %v3328, %v3379
        %v3412 = vmax.f32 %v3332, %v3380
        %v3413 = vmax.f32 %v3334, %v3381
        %v3414 = vmax.f32 %v3336, %v3382
        %v3415 = vmax.f32 %v3338, %v3383
        %v3416 = vmax.f32 %v3342, %v3384
        %v3417 = vmax.f32 %v3344, %v3385
        %v3418 = vmax.f32 %v3346, %v3386
        %v3419 = vmax.f32 %v3348, %v3387
        %v3420 = vmax.f32 %v3352, %v3388
        %v3421 = vmax.f32 %v3354, %v3389
        %v3422 = vmax.f32 %v3356, %v3390
        %v3423 = vmax.f32 %v3358, %v3391
        %v3424 = vpack.c.bf16 %v3394, %v3392
        %v3425 = vpack.c.bf16 %v3395, %v3393
        %v3426 = vpack.c.bf16 %v3398, %v3396
        %v3427 = vpack.c.bf16 %v3399, %v3397
        %v3428 = vpack.c.bf16 %v3402, %v3400
        %v3429 = vpack.c.bf16 %v3403, %v3401
        %v3430 = vpack.c.bf16 %v3406, %v3404
        %v3431 = vpack.c.bf16 %v3407, %v3405
        %v3432 = vpack.c.bf16 %v3410, %v3408
        %v3433 = vpack.c.bf16 %v3411, %v3409
        %v3434 = vpack.c.bf16 %v3414, %v3412
        %v3435 = vpack.c.bf16 %v3415, %v3413
        %v3436 = vpack.c.bf16 %v3418, %v3416
        %v3437 = vpack.c.bf16 %v3419, %v3417
        %v3438 = vpack.c.bf16 %v3422, %v3420
        %v3439 = vpack.c.bf16 %v3423, %v3421
        %v3440 = vld [vmem:[%s5] sm:$0x3]
        %s3441 = sld [smem:[#allocation2]]
        %v3442 = vstv %s3441
        %v3445 = vunpack.c.l.s4 1966171168
        %v3446 = vunpack.c.0.s8 %v3445
        %v3447 = vlaneseq
        %v3448 = vshrl.u32 %v3447, 7
        %v3449 = vsub.s32 %v3446, %v3448
        %v3450 = vrot.slane %v3440, %v3449
        %v3451 = vcombine.high %v3450, %v3450
        %v3453 = vunpack.c.l.s4 1966171168
        %v3454 = vunpack.c.0.s8 %v3453
        %v3455 = vlaneseq
        %v3456 = vshrl.u32 %v3455, 7
        %v3457 = vsub.s32 %v3454, %v3456
        %v3458 = vrot.slane %v3450, %v3457
        %v3460 = vunpack.c.l.s4 1966171168
        %v3461 = vunpack.c.0.s8 %v3460
        %v3462 = vlaneseq
        %v3463 = vshrl.u32 %v3462, 7
        %v3464 = vsub.s32 %v3461, %v3463
        %v3465 = vrot.slane %v3451, %v3464
        %3468 = vmatprep.subr.bf16.mxu0 %v3439
        %3469 = vmatpush1.bf16.xpose.msra.mxu0 %v3438
        %3470 = vmatprep.subr.bf16.mxu0 %v3437
        %3471 = vmatpush1.bf16.xpose.msra.mxu0 %v3436
        %3472 = vmatprep.subr.bf16.mxu0 %v3435
        %3473 = vmatpush1.bf16.xpose.msra.mxu0 %v3434
        %3474 = vmatprep.subr.bf16.mxu0 %v3433
        %3475 = vmatpush1.bf16.xpose.msra.mxu0 %v3432
        %3476 = vmatprep.subr.bf16.mxu0 %v3431
        %3477 = vmatpush1.bf16.xpose.msra.mxu0 %v3430
        %3478 = vmatprep.subr.bf16.mxu0 %v3429
        %3479 = vmatpush1.bf16.xpose.msra.mxu0 %v3428
        %3480 = vmatprep.subr.bf16.mxu0 %v3427
        %3481 = vmatpush1.bf16.xpose.msra.mxu0 %v3426
        %3482 = vmatprep.subr.bf16.mxu0 %v3425
        %3483 = vmatpush1.bf16.xpose.msra.mxu0 %v3424
        %3484 = vmatprep.subr.bf16.mxu0 0
        %3485 = vmatpush2.bf16.xpose.msra.mxu0 0
        %3486 = vmatprep.subr.bf16.mxu0 0
        %3487 = vmatpush2.bf16.xpose.msra.mxu0 0
        %3488 = vmatprep.subr.bf16.mxu0 0
        %3489 = vmatpush2.bf16.xpose.msra.mxu0 0
        %3490 = vmatprep.subr.bf16.mxu0 0
        %3491 = vmatpush2.bf16.xpose.msra.mxu0 0
        %3492 = vmatprep.subr.bf16.mxu0 0
        %3493 = vmatpush2.bf16.xpose.msra.mxu0 0
        %3494 = vmatprep.subr.bf16.mxu0 0
        %3495 = vmatpush2.bf16.xpose.msra.mxu0 0
        %3496 = vmatprep.subr.bf16.mxu0 0
        %3497 = vmatpush2.bf16.xpose.msra.mxu0 0
        %3498 = vmatprep.subr.bf16.mxu0 0
        %3499 = vmatpush2.bf16.xpose.msra.mxu0 0
        %3500 = vmatprep.mubr.bf16.mxu0 %v3465
        %3501 = vmatmul.mubr.bf16.gmra.mxu0 %v3458
        %v3502 = vpop.f32.mrf.mxu0
        %v3503 = vadd.f32 %v3442, %v3502
        %v3504 = vpop.f32.mrf.mxu0
        %v3505 = vpop.f32.mrf.mxu0
        %v3506 = vpop.f32.mrf.mxu0
        %3507 = vdwg.mxu0
        %v3508 = vand.u32 2147483647, %v3503
        %v3509 = vsub.f32 0.0, %v3508
        %v3510 = vmul.f32 %v3509, 1.442695
        %v3511 = vpow.pop %v3510
        %v3512 = vadd.f32 %v3511, 1.0
        %v3513 = vrcp.pop %v3512
        %vm3514 = vcmp.ge.f32.partialorder %v3503, 0.0
        %v3515 = vmul.f32 %v3511, %v3513
        %v3516 = vsel %vm3514, %v3513, %v3515
        %3517 = vst [vmem:[%s274] sm:$0x1] %v3516
        %s3518 = sand.u32 %s182, 1
        %s3519 = scalar_lea.sflag [#allocation4], %s3518
        %s3520 = sand.u32 %s182, 1
        %s3521 = scalar_lea.vmem [#allocation3], %s3520
        // Predicated region
        $region49: #{tpu_custom_call.1} parent=47 // pred_check
          %p3522 = pneg %p192
        $region50: #{tpu_custom_call.1} parent=47 // pred_check_branch
          %3524 = sbr.rel (%p3522) target = $region52
        $region51: #{tpu_custom_call.1} parent=47 // pred_region
          %s3526 = ssub.s32 16, 16
          %3527 = vsyncadd %s3519, %s3526
          %s3528 = smul.addr %s22, 16
          %s3529 = scalar_lea.hbm %s7, %s3528
          %s3531 = sshll.u32 %s3521, 4
          %s3532 = int_to_ptr.vmem [resolvable:$true] %s3531
          %3534 = dma.vmem_to_hbm [thread:$0]  %s3532, 16, %s3529, %s3519
        $region52: #{tpu_custom_call.1} parent=47 // pred_fallthru
          _
      $region48: #{tpu_custom_call.1} parent=5 // pred_fallthru
        _
      %p3535 = scmp.le.s32.totalorder 2, %s17
      // Predicated region
      $region53: #{tpu_custom_call.1} parent=5 // pred_check
        %p3536 = pneg %p3535
      $region54: #{tpu_custom_call.1} parent=5 // pred_check_branch
        %3538 = sbr.rel (%p3536) target = $region56
      $region55: #{tpu_custom_call.1} parent=5 // pred_region
        %s3539 = ssub.s32 %s17, 2
        // Predicated region
        $region57: #{tpu_custom_call.1} parent=55 // pred_check
          %p3540 = pneg %p198
        $region58: #{tpu_custom_call.1} parent=55 // pred_check_branch
          %3542 = sbr.rel (%p3540) target = $region60
        $region59: #{tpu_custom_call.1} parent=55 // pred_region
          %s3543 = sand.u32 %s183, 1
          %s3544 = scalar_lea.sflag [#allocation4], %s3543
          %s3545 = sand.u32 %s183, 1
          %s3546 = scalar_lea.vmem [#allocation3], %s3545
          %3547 = dma.done %s3544, 16
        $region60: #{tpu_custom_call.1} parent=55 // pred_fallthru
          _
      $region56: #{tpu_custom_call.1} parent=5 // pred_fallthru
        _
    $region6: #{tpu_custom_call.1} parent=1 // loop_footer
      %s21 = sadd.s32 1, %s17
    $region7: #{tpu_custom_call.1} parent=1 // loop_footer_branch
      %16 = sbr.rel target = $region3
    $region8: #{tpu_custom_call.1} parent=1 // loop_exit
      _
    %3548 = vsyncpa [#allocation4], 1
    %s3549 = scalar_lea.sflag [#allocation4], 1
    %3550 = vsyncpa %s3549, 1

</llo_original>
